<compile_context>
chip_gen: v7x
topology: tpu7x:2x2x1
jax: 0.10.0
libtpu: 0.0.40
codegen_flags: <defaults>
</compile_context>

<pallas_src>
import functools

import jax
import jax.numpy as jnp
from jax import lax
from jax.experimental import pallas as pl
from jax.experimental.pallas import tpu as pltpu


# ----------------------------------------------------------------------------- #
# Fused kernel:
#   emb_nn(src), emb_nn(tgt)  ->  EPCOR.getCopairALL soft correspondence
#   ->  SVD_Weighted weighted centroids + 3x3 covariance (packed stats output).
# ----------------------------------------------------------------------------- #
def _vcrnet_fused_kernel(pts_ref, wpk_ref, corr_ref, stats_ref, *, B, N):
    x = pts_ref[...]                     # (3, B*2*N): [b0_src | b0_tgt | b1_src | b1_tgt | ...]
    wpk = wpk_ref[...]                   # (E, E+5) packed: [w2 | w1 | b1 | b2]
    E = wpk.shape[0]

    w2 = wpk[:, 0:E]                     # (E, E)
    w1 = wpk[:, E:E + 3]                 # (E, 3)
    b1 = wpk[:, E + 3:E + 4]             # (E, 1)
    b2 = wpk[:, E + 4:E + 5]             # (E, 1)

    # ---- shared per-point MLP embedding, merged over ALL B*2*N points ----
    # TODO(synk): LPDNet / LPDNetOrign is not provided in the reference source; this
    # deterministic shared per-point MLP (Conv1d(3->E) -> ReLU -> Conv1d(E->E)) is the
    # emb_nn stand-in.
    # K=3 contraction as three VPU broadcast-FMAs (a 3-deep MXU matmul is almost all
    # fill/drain); the E->E conv is one wide MXU matmul over all points.
    h = (w1[:, 0:1] * x[0:1, :]
         + w1[:, 1:2] * x[1:2, :]
         + w1[:, 2:3] * x[2:3, :]) + b1                          # (E, B*2*N)
    h = jnp.maximum(h, 0.0)
    emb = jnp.dot(w2, h, preferred_element_type=jnp.float32) + b2  # (E, B*2*N) f32

    # Training-branch weight is uniform 1/N; normalized weight w/(sum(w)+1e-5) is the
    # compile-time constant (1/N)/(1 + 1e-5).
    wn = (1.0 / N) / (1.0 + 1e-5)

    # Per-batch EPCOR + SVD statistics (B is tiny -> trace-time unrolled loop; all
    # slices below are at 128-aligned lane offsets).
    for b in range(B):
        off = 2 * b * N
        s = x[:, off:off + N]            # (3, N)  src_b
        t = x[:, off + N:off + 2 * N]    # (3, N)  tgt_b
        se = emb[:, off:off + N]         # (E, N)
        te = emb[:, off + N:off + 2 * N]  # (E, N)

        # pairwise_distance = -||se_i||^2 + 2 se_i.te_j - ||te_j||^2 ; the per-row
        # -||se_i||^2 constant cancels in the dim=2 softmax, so it is dropped, and the
        # factor 2 is folded into se before the dot (no NxN scalar multiply).
        se2 = se + se                                               # (E, N)
        # transposed-LHS contraction (native MXU path): inner = se2^T @ te -> (N, N)
        inner = lax.dot_general(se2, te, (((0,), (0,)), ((), ())),
                                preferred_element_type=jnp.float32)
        yy = jnp.sum(te * te, axis=0, keepdims=True)                # (1, N)
        pd = inner - yy                                             # (N, N)

        m = jnp.max(pd, axis=-1, keepdims=True)                     # (N, 1)
        e = jnp.exp(pd - m)                                         # (N, N) f32
        rowsum = jnp.sum(e, axis=-1, keepdims=True)                 # (N, 1)
        recip = pl.reciprocal(rowsum, approx=True)                  # (N, 1), EUP

        # Deferred softmax normalization: corr^T = (e @ t^T) * recip, i.e.
        # src_corr[c, i] = (sum_j tgt[c, j] * e[i, j]) / rowsum[i].
        tT = t.T                                                    # (N, 3) tiny XLU transpose
        corrT = lax.dot_general(e, tT, (((1,), (0,)), ((), ())),
                                preferred_element_type=jnp.float32)  # (N, 3), MXU-native
        corrT = corrT * recip                                       # per-row scale

        # ---- SVD_Weighted preamble: weighted centroids + 3x3 covariance ----
        ca = jnp.sum(s, axis=1, keepdims=True) * wn                 # (3, 1)
        cbT = jnp.sum(corrT, axis=0, keepdims=True) * wn            # (1, 3)
        cov = lax.dot_general(s - ca, (corrT - cbT) * wn,
                              (((1,), (0,)), ((), ())),
                              preferred_element_type=jnp.float32)   # (3, 3), MXU-native

        corr_ref[b] = corrT.T                                       # (3, N) lane-dense store
        # Packed stats: col 0 = centroid_a, col 1 = centroid_b, cols 2:5 = covariance.
        stats_ref[b] = jnp.concatenate(
            [ca, cbT.T, cov, jnp.zeros((3, 3), jnp.float32)], axis=1)  # (3, 8)


def vcrnet_fused(src_cn, tgt_cn, params):
    """src_cn, tgt_cn: (B, 3, N) f32. Returns (src_corr, cov, centroid_a, centroid_b)."""
    w1, b1, w2, b2 = params
    B, _, N = src_cn.shape
    E = w2.shape[0]

    # Pack inputs outside the kernel (XLA): one point slab, one weight slab.
    pts = jnp.stack([src_cn, tgt_cn], axis=1)                       # (B, 2, 3, N)
    pts = jnp.transpose(pts, (2, 0, 1, 3)).reshape(3, B * 2 * N)    # (3, B*2*N)
    wpk = jnp.concatenate([w2, w1, b1, b2], axis=1)                 # (E, E+5)

    kernel = functools.partial(_vcrnet_fused_kernel, B=B, N=N)
    corr, stats = pl.pallas_call(
        kernel,
        out_shape=(
            jax.ShapeDtypeStruct((B, 3, N), jnp.float32),           # src_corr
            jax.ShapeDtypeStruct((B, 3, 8), jnp.float32),           # packed ca | cb | cov
        ),
        grid=(1,),
        in_specs=[
            pl.BlockSpec((3, B * 2 * N), lambda i: (0, 0)),
            pl.BlockSpec((E, E + 5), lambda i: (0, 0)),
        ],
        out_specs=(
            pl.BlockSpec((B, 3, N), lambda i: (0, 0, 0)),
            pl.BlockSpec((B, 3, 8), lambda i: (0, 0, 0)),
        ),
        compiler_params=pltpu.CompilerParams(
            dimension_semantics=("arbitrary",)),
    )(pts, wpk)

    ca = stats[:, :, 0:1]                                           # (B, 3, 1)
    cb = stats[:, :, 1:2]                                           # (B, 3, 1)
    cov = stats[:, :, 2:5]                                          # (B, 3, 3)
    return corr, cov, ca, cb


# ----------------------------------------------------------------------------- #
# Full VCRNet forward (glue in plain JAX).
# ----------------------------------------------------------------------------- #
def vcrnet_forward(src, tgt, params):
    """src, tgt: (B, N, 3) float32 point clouds."""
    B, N, _ = src.shape
    src_cn = jnp.swapaxes(src, 1, 2)                                # (B, 3, N)
    tgt_cn = jnp.swapaxes(tgt, 1, 2)                                # (B, 3, N)

    # TODO(synk): Transformer `pointer` module is not defined in the reference source;
    # its residual contribution is taken as zero (embeddings pass through unchanged).

    # Fused: embed(src), embed(tgt), EPCOR training branch, SVD_Weighted statistics.
    src_corr, cov, ca, cb = vcrnet_fused(src_cn, tgt_cn, params)

    # torch.no_grad() SVD path: 3x3 SVD + reflection fix in plain JAX.
    # TODO(synk): torch.svd has no Pallas equivalent; 3x3 SVD done with jnp.linalg.svd.
    u, _s, vh = jnp.linalg.svd(cov)
    v = jnp.swapaxes(vh, -1, -2)
    ut = jnp.swapaxes(u, -1, -2)
    rot_pos = v @ ut
    v_neg = v.at[:, :, 2].multiply(-1.0)
    rot_neg = v_neg @ ut
    det_pos = jnp.linalg.det(rot_pos)
    rotation_ab = jnp.where(det_pos[:, None, None] > 0, rot_pos, rot_neg)   # (B, 3, 3)
    translation_ab = (-jnp.matmul(rotation_ab, ca) + cb)[..., 0]            # (B, 3)

    # PoseSolver(origin=True) masking; outlier_src_mask is all-False on the
    # getCopairALL training branch, so srcK / src_corrK pass through unchanged
    # (the where is constant-folded by XLA).
    mask3 = jnp.zeros((B, 3, N), dtype=bool)
    srcK = jnp.where(mask3, 0.0, src_cn)                            # (B, 3, N)
    src_corrK = jnp.where(mask3, 0.0, src_corr)                     # (B, 3, N)

    rotation_ba = jnp.swapaxes(rotation_ab, 1, 2)                   # (B, 3, 3)
    translation_ba = -jnp.matmul(rotation_ba, translation_ab[..., None])[..., 0]  # (B, 3)

    return srcK, src_corrK, rotation_ab, translation_ab, rotation_ba, translation_ba


if __name__ == "__main__":
    B, N, E = 2, 128, 32
    key = jax.random.PRNGKey(0)
    k1, k2, k3, k4, k5, k6 = jax.random.split(key, 6)

    src = jax.random.normal(k1, (B, N, 3), jnp.float32)
    tgt = jax.random.normal(k2, (B, N, 3), jnp.float32)

    # deterministic synthetic parameters for the embedding MLP
    w1 = 0.2 * jax.random.normal(k3, (E, 3), jnp.float32)
    b1 = 0.05 * jax.random.normal(k4, (E, 1), jnp.float32)
    w2 = (0.2 / jnp.sqrt(E)) * jax.random.normal(k5, (E, E), jnp.float32)
    b2 = 0.05 * jax.random.normal(k6, (E, 1), jnp.float32)

    outs = jax.jit(vcrnet_forward)(src, tgt, (w1, b1, w2, b2))
    jax.block_until_ready(outs)

    srcK, src_corrK, rot_ab, t_ab, rot_ba, t_ba = outs
    assert srcK.shape == (B, 3, N) and src_corrK.shape == (B, 3, N)
    assert rot_ab.shape == (B, 3, 3) and t_ab.shape == (B, 3)
    assert rot_ba.shape == (B, 3, 3) and t_ba.shape == (B, 3)
    assert bool(jnp.all(jnp.isfinite(src_corrK))) and bool(jnp.all(jnp.isfinite(rot_ab)))
    print("KERNEL_OK")
</pallas_src>

<mosaic_0001>
module attributes {stable_mosaic.version = 11 : i64} {
  func.func @_vcrnet_fused_kernel(%arg0: i32, %arg1: memref<3x512xf32, #tpu.memory_space<vmem>>, %arg2: memref<32x37xf32, #tpu.memory_space<vmem>>, %arg3: memref<2x3x128xf32, #tpu.memory_space<vmem>>, %arg4: memref<2x3x8xf32, #tpu.memory_space<vmem>>) attributes {dimension_semantics = [#tpu.dimension_semantics<arbitrary>], iteration_bounds = array<i64: 1>, scalar_prefetch = 0 : i64, scratch_operands = 0 : i64, tpu.core_type = #tpu.core_type<tc>, window_params = [{pipeline_mode = #tpu.pipeline_mode<synchronous>, transform_indices = @transform_0, window_bounds = array<i64: 3, 512>}, {pipeline_mode = #tpu.pipeline_mode<synchronous>, transform_indices = @transform_1, window_bounds = array<i64: 32, 37>}, {pipeline_mode = #tpu.pipeline_mode<synchronous>, transform_indices = @transform_2, window_bounds = array<i64: 2, 3, 128>}, {pipeline_mode = #tpu.pipeline_mode<synchronous>, transform_indices = @transform_3, window_bounds = array<i64: 2, 3, 8>}]} {
    %c0 = arith.constant 0 : index
    %c0_0 = arith.constant 0 : index
    %0 = vector.load %arg1[%c0, %c0_0] : memref<3x512xf32, #tpu.memory_space<vmem>>, vector<3x512xf32>
    %c0_1 = arith.constant 0 : index
    %c0_2 = arith.constant 0 : index
    %1 = vector.load %arg2[%c0_1, %c0_2] : memref<32x37xf32, #tpu.memory_space<vmem>>, vector<32x37xf32>
    %2 = vector.extract_strided_slice %1 {offsets = [0, 0], sizes = [32, 32], strides = [1, 1]} : vector<32x37xf32> to vector<32x32xf32>
    %3 = vector.extract_strided_slice %1 {offsets = [0, 32], sizes = [32, 3], strides = [1, 1]} : vector<32x37xf32> to vector<32x3xf32>
    %4 = vector.extract_strided_slice %1 {offsets = [0, 35], sizes = [32, 1], strides = [1, 1]} : vector<32x37xf32> to vector<32x1xf32>
    %5 = vector.extract_strided_slice %1 {offsets = [0, 36], sizes = [32, 1], strides = [1, 1]} : vector<32x37xf32> to vector<32x1xf32>
    %6 = vector.extract_strided_slice %3 {offsets = [0, 0], sizes = [32, 1], strides = [1, 1]} : vector<32x3xf32> to vector<32x1xf32>
    %7 = vector.extract_strided_slice %0 {offsets = [0, 0], sizes = [1, 512], strides = [1, 1]} : vector<3x512xf32> to vector<1x512xf32>
    %8 = vector.broadcast %6 : vector<32x1xf32> to vector<32x512xf32>
    %9 = vector.broadcast %7 : vector<1x512xf32> to vector<32x512xf32>
    %10 = arith.mulf %8, %9 : vector<32x512xf32>
    %11 = vector.extract_strided_slice %3 {offsets = [0, 1], sizes = [32, 1], strides = [1, 1]} : vector<32x3xf32> to vector<32x1xf32>
    %12 = vector.extract_strided_slice %0 {offsets = [1, 0], sizes = [1, 512], strides = [1, 1]} : vector<3x512xf32> to vector<1x512xf32>
    %13 = vector.broadcast %11 : vector<32x1xf32> to vector<32x512xf32>
    %14 = vector.broadcast %12 : vector<1x512xf32> to vector<32x512xf32>
    %15 = arith.mulf %13, %14 : vector<32x512xf32>
    %16 = arith.addf %10, %15 : vector<32x512xf32>
    %17 = vector.extract_strided_slice %3 {offsets = [0, 2], sizes = [32, 1], strides = [1, 1]} : vector<32x3xf32> to vector<32x1xf32>
    %18 = vector.extract_strided_slice %0 {offsets = [2, 0], sizes = [1, 512], strides = [1, 1]} : vector<3x512xf32> to vector<1x512xf32>
    %19 = vector.broadcast %17 : vector<32x1xf32> to vector<32x512xf32>
    %20 = vector.broadcast %18 : vector<1x512xf32> to vector<32x512xf32>
    %21 = arith.mulf %19, %20 : vector<32x512xf32>
    %22 = arith.addf %16, %21 : vector<32x512xf32>
    %23 = vector.broadcast %4 : vector<32x1xf32> to vector<32x512xf32>
    %24 = arith.addf %22, %23 : vector<32x512xf32>
    %cst = arith.constant 0.000000e+00 : f32
    %25 = vector.broadcast %cst : f32 to vector<32x512xf32>
    %26 = arith.maximumf %24, %25 : vector<32x512xf32>
    %cst_3 = arith.constant dense<0.000000e+00> : vector<32x512xf32>
    %27 = tpu.matmul %2, %26, %cst_3 {dimension_numbers = #tpu.dot_dimension_numbers<[1], [0], [0], [1], [0, 0, 1, 1], [], []>} : vector<32x32xf32>, vector<32x512xf32>, vector<32x512xf32> -> vector<32x512xf32>
    %28 = vector.broadcast %5 : vector<32x1xf32> to vector<32x512xf32>
    %29 = arith.addf %27, %28 : vector<32x512xf32>
    %30 = vector.extract_strided_slice %0 {offsets = [0, 0], sizes = [3, 128], strides = [1, 1]} : vector<3x512xf32> to vector<3x128xf32>
    %31 = vector.extract_strided_slice %0 {offsets = [0, 128], sizes = [3, 128], strides = [1, 1]} : vector<3x512xf32> to vector<3x128xf32>
    %32 = vector.extract_strided_slice %29 {offsets = [0, 0], sizes = [32, 128], strides = [1, 1]} : vector<32x512xf32> to vector<32x128xf32>
    %33 = vector.extract_strided_slice %29 {offsets = [0, 128], sizes = [32, 128], strides = [1, 1]} : vector<32x512xf32> to vector<32x128xf32>
    %34 = arith.addf %32, %32 : vector<32x128xf32>
    %cst_4 = arith.constant dense<0.000000e+00> : vector<128x128xf32>
    %35 = tpu.matmul %34, %33, %cst_4 {dimension_numbers = #tpu.dot_dimension_numbers<[0], [0], [1], [1], [0, 1, 1, 1], [], []>} : vector<32x128xf32>, vector<32x128xf32>, vector<128x128xf32> -> vector<128x128xf32>
    %36 = arith.mulf %33, %33 : vector<32x128xf32>
    %cst_5 = arith.constant dense<0.000000e+00> : vector<128xf32>
    %37 = vector.multi_reduction <add>, %36, %cst_5 [0] : vector<32x128xf32> to vector<128xf32>
    %38 = vector.shape_cast %37 : vector<128xf32> to vector<1x128xf32>
    %39 = vector.broadcast %38 : vector<1x128xf32> to vector<128x128xf32>
    %40 = arith.subf %35, %39 : vector<128x128xf32>
    %cst_6 = arith.constant dense<0xFF800000> : vector<128xf32>
    %41 = vector.multi_reduction <maximumf>, %40, %cst_6 [1] : vector<128x128xf32> to vector<128xf32>
    %42 = vector.shape_cast %41 : vector<128xf32> to vector<128x1xf32>
    %43 = vector.broadcast %42 : vector<128x1xf32> to vector<128x128xf32>
    %44 = arith.subf %40, %43 : vector<128x128xf32>
    %45 = math.exp %44 : vector<128x128xf32>
    %cst_7 = arith.constant dense<0.000000e+00> : vector<128xf32>
    %46 = vector.multi_reduction <add>, %45, %cst_7 [1] : vector<128x128xf32> to vector<128xf32>
    %47 = vector.shape_cast %46 : vector<128xf32> to vector<128x1xf32>
    %48 = tpu.reciprocal %47 {approx = true} : vector<128x1xf32> -> vector<128x1xf32>
    %49 = tpu.transpose %31, [1, 0] : vector<3x128xf32> -> vector<128x3xf32>
    %cst_8 = arith.constant dense<0.000000e+00> : vector<128x3xf32>
    %50 = tpu.matmul %45, %49, %cst_8 {dimension_numbers = #tpu.dot_dimension_numbers<[1], [0], [0], [1], [0, 0, 1, 1], [], []>} : vector<128x128xf32>, vector<128x3xf32>, vector<128x3xf32> -> vector<128x3xf32>
    %51 = vector.broadcast %48 : vector<128x1xf32> to vector<128x3xf32>
    %52 = arith.mulf %50, %51 : vector<128x3xf32>
    %cst_9 = arith.constant dense<0.000000e+00> : vector<3xf32>
    %53 = vector.multi_reduction <add>, %30, %cst_9 [1] : vector<3x128xf32> to vector<3xf32>
    %54 = vector.shape_cast %53 : vector<3xf32> to vector<3x1xf32>
    %cst_10 = arith.constant 0.00781242176 : f32
    %55 = vector.broadcast %cst_10 : f32 to vector<3x1xf32>
    %56 = arith.mulf %54, %55 : vector<3x1xf32>
    %cst_11 = arith.constant dense<0.000000e+00> : vector<3xf32>
    %57 = vector.multi_reduction <add>, %52, %cst_11 [0] : vector<128x3xf32> to vector<3xf32>
    %58 = vector.shape_cast %57 : vector<3xf32> to vector<1x3xf32>
    %cst_12 = arith.constant 0.00781242176 : f32
    %59 = vector.broadcast %cst_12 : f32 to vector<1x3xf32>
    %60 = arith.mulf %58, %59 : vector<1x3xf32>
    %61 = vector.broadcast %56 : vector<3x1xf32> to vector<3x128xf32>
    %62 = arith.subf %30, %61 : vector<3x128xf32>
    %63 = vector.broadcast %60 : vector<1x3xf32> to vector<128x3xf32>
    %64 = arith.subf %52, %63 : vector<128x3xf32>
    %cst_13 = arith.constant 0.00781242176 : f32
    %65 = vector.broadcast %cst_13 : f32 to vector<128x3xf32>
    %66 = arith.mulf %64, %65 : vector<128x3xf32>
    %cst_14 = arith.constant dense<0.000000e+00> : vector<3x3xf32>
    %67 = tpu.matmul %62, %66, %cst_14 {dimension_numbers = #tpu.dot_dimension_numbers<[1], [0], [0], [1], [0, 0, 1, 1], [], []>} : vector<3x128xf32>, vector<128x3xf32>, vector<3x3xf32> -> vector<3x3xf32>
    %68 = tpu.transpose %52, [1, 0] : vector<128x3xf32> -> vector<3x128xf32>
    %c0_15 = arith.constant 0 : index
    %c0_16 = arith.constant 0 : index
    %c0_17 = arith.constant 0 : index
    %69 = vector.load %arg3[%c0_15, %c0_16, %c0_17] : memref<2x3x128xf32, #tpu.memory_space<vmem>>, vector<1x3x128xf32>
    %70 = vector.shape_cast %69 : vector<1x3x128xf32> to vector<3x128xf32>
    %71 = vector.shape_cast %68 : vector<3x128xf32> to vector<1x3x128xf32>
    tpu.vector_store %arg3[%c0_15, %c0_16, %c0_17], %71 {strides = array<i32>} : memref<2x3x128xf32, #tpu.memory_space<vmem>>, vector<1x3x128xf32>,
    %72 = tpu.transpose %60, [1, 0] : vector<1x3xf32> -> vector<3x1xf32>
    %cst_18 = arith.constant 0.000000e+00 : f32
    %73 = vector.broadcast %cst_18 : f32 to vector<3x3xf32>
    %74 = tpu.concatenate %56, %72, %67, %73 in 1 : vector<3x1xf32>, vector<3x1xf32>, vector<3x3xf32>, vector<3x3xf32> -> vector<3x8xf32>
    %c0_19 = arith.constant 0 : index
    %c0_20 = arith.constant 0 : index
    %c0_21 = arith.constant 0 : index
    %75 = vector.load %arg4[%c0_19, %c0_20, %c0_21] : memref<2x3x8xf32, #tpu.memory_space<vmem>>, vector<1x3x8xf32>
    %76 = vector.shape_cast %75 : vector<1x3x8xf32> to vector<3x8xf32>
    %77 = vector.shape_cast %74 : vector<3x8xf32> to vector<1x3x8xf32>
    tpu.vector_store %arg4[%c0_19, %c0_20, %c0_21], %77 {strides = array<i32>} : memref<2x3x8xf32, #tpu.memory_space<vmem>>, vector<1x3x8xf32>,
    %78 = vector.extract_strided_slice %0 {offsets = [0, 256], sizes = [3, 128], strides = [1, 1]} : vector<3x512xf32> to vector<3x128xf32>
    %79 = vector.extract_strided_slice %0 {offsets = [0, 384], sizes = [3, 128], strides = [1, 1]} : vector<3x512xf32> to vector<3x128xf32>
    %80 = vector.extract_strided_slice %29 {offsets = [0, 256], sizes = [32, 128], strides = [1, 1]} : vector<32x512xf32> to vector<32x128xf32>
    %81 = vector.extract_strided_slice %29 {offsets = [0, 384], sizes = [32, 128], strides = [1, 1]} : vector<32x512xf32> to vector<32x128xf32>
    %82 = arith.addf %80, %80 : vector<32x128xf32>
    %cst_22 = arith.constant dense<0.000000e+00> : vector<128x128xf32>
    %83 = tpu.matmul %82, %81, %cst_22 {dimension_numbers = #tpu.dot_dimension_numbers<[0], [0], [1], [1], [0, 1, 1, 1], [], []>} : vector<32x128xf32>, vector<32x128xf32>, vector<128x128xf32> -> vector<128x128xf32>
    %84 = arith.mulf %81, %81 : vector<32x128xf32>
    %cst_23 = arith.constant dense<0.000000e+00> : vector<128xf32>
    %85 = vector.multi_reduction <add>, %84, %cst_23 [0] : vector<32x128xf32> to vector<128xf32>
    %86 = vector.shape_cast %85 : vector<128xf32> to vector<1x128xf32>
    %87 = vector.broadcast %86 : vector<1x128xf32> to vector<128x128xf32>
    %88 = arith.subf %83, %87 : vector<128x128xf32>
    %cst_24 = arith.constant dense<0xFF800000> : vector<128xf32>
    %89 = vector.multi_reduction <maximumf>, %88, %cst_24 [1] : vector<128x128xf32> to vector<128xf32>
    %90 = vector.shape_cast %89 : vector<128xf32> to vector<128x1xf32>
    %91 = vector.broadcast %90 : vector<128x1xf32> to vector<128x128xf32>
    %92 = arith.subf %88, %91 : vector<128x128xf32>
    %93 = math.exp %92 : vector<128x128xf32>
    %cst_25 = arith.constant dense<0.000000e+00> : vector<128xf32>
    %94 = vector.multi_reduction <add>, %93, %cst_25 [1] : vector<128x128xf32> to vector<128xf32>
    %95 = vector.shape_cast %94 : vector<128xf32> to vector<128x1xf32>
    %96 = tpu.reciprocal %95 {approx = true} : vector<128x1xf32> -> vector<128x1xf32>
    %97 = tpu.transpose %79, [1, 0] : vector<3x128xf32> -> vector<128x3xf32>
    %cst_26 = arith.constant dense<0.000000e+00> : vector<128x3xf32>
    %98 = tpu.matmul %93, %97, %cst_26 {dimension_numbers = #tpu.dot_dimension_numbers<[1], [0], [0], [1], [0, 0, 1, 1], [], []>} : vector<128x128xf32>, vector<128x3xf32>, vector<128x3xf32> -> vector<128x3xf32>
    %99 = vector.broadcast %96 : vector<128x1xf32> to vector<128x3xf32>
    %100 = arith.mulf %98, %99 : vector<128x3xf32>
    %cst_27 = arith.constant dense<0.000000e+00> : vector<3xf32>
    %101 = vector.multi_reduction <add>, %78, %cst_27 [1] : vector<3x128xf32> to vector<3xf32>
    %102 = vector.shape_cast %101 : vector<3xf32> to vector<3x1xf32>
    %cst_28 = arith.constant 0.00781242176 : f32
    %103 = vector.broadcast %cst_28 : f32 to vector<3x1xf32>
    %104 = arith.mulf %102, %103 : vector<3x1xf32>
    %cst_29 = arith.constant dense<0.000000e+00> : vector<3xf32>
    %105 = vector.multi_reduction <add>, %100, %cst_29 [0] : vector<128x3xf32> to vector<3xf32>
    %106 = vector.shape_cast %105 : vector<3xf32> to vector<1x3xf32>
    %cst_30 = arith.constant 0.00781242176 : f32
    %107 = vector.broadcast %cst_30 : f32 to vector<1x3xf32>
    %108 = arith.mulf %106, %107 : vector<1x3xf32>
    %109 = vector.broadcast %104 : vector<3x1xf32> to vector<3x128xf32>
    %110 = arith.subf %78, %109 : vector<3x128xf32>
    %111 = vector.broadcast %108 : vector<1x3xf32> to vector<128x3xf32>
    %112 = arith.subf %100, %111 : vector<128x3xf32>
    %cst_31 = arith.constant 0.00781242176 : f32
    %113 = vector.broadcast %cst_31 : f32 to vector<128x3xf32>
    %114 = arith.mulf %112, %113 : vector<128x3xf32>
    %cst_32 = arith.constant dense<0.000000e+00> : vector<3x3xf32>
    %115 = tpu.matmul %110, %114, %cst_32 {dimension_numbers = #tpu.dot_dimension_numbers<[1], [0], [0], [1], [0, 0, 1, 1], [], []>} : vector<3x128xf32>, vector<128x3xf32>, vector<3x3xf32> -> vector<3x3xf32>
    %116 = tpu.transpose %100, [1, 0] : vector<128x3xf32> -> vector<3x128xf32>
    %c1 = arith.constant 1 : index
    %c0_33 = arith.constant 0 : index
    %c0_34 = arith.constant 0 : index
    %117 = vector.load %arg3[%c1, %c0_33, %c0_34] : memref<2x3x128xf32, #tpu.memory_space<vmem>>, vector<1x3x128xf32>
    %118 = vector.shape_cast %117 : vector<1x3x128xf32> to vector<3x128xf32>
    %119 = vector.shape_cast %116 : vector<3x128xf32> to vector<1x3x128xf32>
    tpu.vector_store %arg3[%c1, %c0_33, %c0_34], %119 {strides = array<i32>} : memref<2x3x128xf32, #tpu.memory_space<vmem>>, vector<1x3x128xf32>,
    %120 = tpu.transpose %108, [1, 0] : vector<1x3xf32> -> vector<3x1xf32>
    %cst_35 = arith.constant 0.000000e+00 : f32
    %121 = vector.broadcast %cst_35 : f32 to vector<3x3xf32>
    %122 = tpu.concatenate %104, %120, %115, %121 in 1 : vector<3x1xf32>, vector<3x1xf32>, vector<3x3xf32>, vector<3x3xf32> -> vector<3x8xf32>
    %c1_36 = arith.constant 1 : index
    %c0_37 = arith.constant 0 : index
    %c0_38 = arith.constant 0 : index
    %123 = vector.load %arg4[%c1_36, %c0_37, %c0_38] : memref<2x3x8xf32, #tpu.memory_space<vmem>>, vector<1x3x8xf32>
    %124 = vector.shape_cast %123 : vector<1x3x8xf32> to vector<3x8xf32>
    %125 = vector.shape_cast %122 : vector<3x8xf32> to vector<1x3x8xf32>
    tpu.vector_store %arg4[%c1_36, %c0_37, %c0_38], %125 {strides = array<i32>} : memref<2x3x8xf32, #tpu.memory_space<vmem>>, vector<1x3x8xf32>,
    return
  }
  func.func @transform_0(%arg0: i32) -> (i32, i32) {
    %c0_i32 = arith.constant 0 : i32
    %c0_i32_0 = arith.constant 0 : i32
    %c0_i32_1 = arith.constant 0 : i32
    return %c0_i32, %c0_i32_0 : i32, i32
  }
  func.func @transform_1(%arg0: i32) -> (i32, i32) {
    %c0_i32 = arith.constant 0 : i32
    %c0_i32_0 = arith.constant 0 : i32
    %c0_i32_1 = arith.constant 0 : i32
    return %c0_i32, %c0_i32_0 : i32, i32
  }
  func.func @transform_2(%arg0: i32) -> (i32, i32, i32) {
    %c0_i32 = arith.constant 0 : i32
    %c0_i32_0 = arith.constant 0 : i32
    %c0_i32_1 = arith.constant 0 : i32
    %c0_i32_2 = arith.constant 0 : i32
    return %c0_i32, %c0_i32_0, %c0_i32_1 : i32, i32, i32
  }
  func.func @transform_3(%arg0: i32) -> (i32, i32, i32) {
    %c0_i32 = arith.constant 0 : i32
    %c0_i32_0 = arith.constant 0 : i32
    %c0_i32_1 = arith.constant 0 : i32
    %c0_i32_2 = arith.constant 0 : i32
    return %c0_i32, %c0_i32_0, %c0_i32_1 : i32, i32, i32
  }
}

</mosaic_0001>

<llo_original>
// kernel: custom-call.57
$region0: #{custom-call.57}
  %s0 = inlined_call_operand.vmem [shape: f32[2,6,3], index: 0, kind: input, shape index: {}]
  %s1 = inlined_call_operand.vmem [shape: f32[2,6,3], index: 1, kind: output, shape index: {0}]
  %s2 = inlined_call_operand.vmem [shape: f32[2,3], index: 2, kind: output, shape index: {1}]
  %3 = xla_tuple %s1, %s2
  $region1: #{custom-call.57} parent=0
    #allocation0 [shape = 'u8[8192]{0}', space=vmem, size = 0x2000, scoped, tag = 'operand span for operand 0']
    #allocation1 [shape = 'u8[8192]{0}', space=vmem, size = 0x2000, scoped, tag = 'operand span for operand 1']
    #allocation2 [shape = 'u8[4096]{0}', space=vmem, size = 0x1000, scoped, tag = 'operand span for operand 2']
    #allocation3 [shape = 'u8[2048]{0}', space=vmem, size = 0x800, scoped, tag = 'packed  for operand 2']
    loop: start=0, step=1, limit=4
    $region2: #{custom-call.57} parent=1 // loop_pre_header
      _
    $region3: #{custom-call.57} parent=1 // loop_header
      %s5 = sphi 0, %s9
      %p6 = scmp.ge.s32.totalorder %s5, 4
      %s12 = sphi 0, %s31
      %s13 = sphi 0, %s27
      %s14 = sphi 0, %s23
      %s15 = sphi 0, %s12
      %s16 = sphi 0, %s13
      %s17 = sphi 0, %s14
      %s18 = sphi 0, %s15
      %s19 = sphi 0, %s16
      %s20 = sphi 0, %s17
      %s46 = sphi 0, %s48
      %s49 = sphi 0, %s46
      %s50 = sphi 0, %s49
      %s66 = sphi 0, %s50
    $region4: #{custom-call.57} parent=1 // loop_header_branch
      %8 = sbr.rel (%p6) target = $region8
    $region5: #{custom-call.57} parent=1 // loop_body
      %s10 = ssub.s32 %s5, 1
      %s11 = ssub.s32 %s5, 2
      %s21 = sadd.s32 1, %s14
      %p22 = scmp.ge.s32.totalorder %s21, 1
      %s23 = scalar_select %p22, 0, %s21
      %s24 = sadd.s32 1, %s13
      %s25 = scalar_select %p22, %s24, %s13
      %p26 = scmp.ge.s32.totalorder %s25, 1
      %s27 = scalar_select %p26, 0, %s25
      %s28 = sadd.s32 1, %s12
      %s29 = scalar_select %p26, %s28, %s12
      %p30 = scmp.ge.s32.totalorder %s29, 2
      %s31 = scalar_select %p30, 0, %s29
      %p32 = scmp.lt.s32.totalorder %s12, 0
      %s33 = ssub.s32 0, %s12
      %s34 = scalar_select %p32, %s33, %s12
      %s35 = sshrl.u32 %s34, 3
      %s36 = ssub.s32 0, %s35
      %s37 = scalar_select %p32, %s36, %s35
      %p38 = scmp.lt.s32.totalorder %s31, 0
      %s39 = ssub.s32 0, %s31
      %s40 = scalar_select %p38, %s39, %s31
      %s41 = sshrl.u32 %s40, 3
      %s42 = ssub.s32 0, %s41
      %s43 = scalar_select %p38, %s42, %s41
      %s44 = ssub.s32 %s37, %s43
      %p45 = scmp.eq.s32.totalorder %s44, 0
      %s47 = sadd.s32 %s46, 1
      %s48 = scalar_select %p45, %s46, %s47
      %p51 = pneg %p45
      %p52 = scmp.eq.s32.totalorder %s5, 1
      %p53 = por %p51, %p52
      %p54 = scmp.ne.s32.totalorder %s46, %s49
      %p55 = scmp.eq.s32.totalorder %s5, 0
      %p56 = por %p54, %p55
      %p57 = scmp.ne.s32.totalorder %s46, %s49
      %p58 = scmp.eq.s32.totalorder %s10, 1
      %p59 = por %p57, %p58
      %p60 = scmp.ne.s32.totalorder %s49, %s50
      %p61 = scmp.eq.s32.totalorder %s10, 0
      %p62 = por %p60, %p61
      %p63 = scmp.ne.s32.totalorder %s49, %s50
      %p64 = scmp.eq.s32.totalorder %s11, 1
      %p65 = por %p63, %p64
      %p67 = scmp.ne.s32.totalorder %s50, %s66
      %p68 = scmp.eq.s32.totalorder %s11, 0
      %p69 = por %p67, %p68
      %p70 = scmp.le.s32.totalorder 1, %s5
      %p71 = scmp.lt.s32.totalorder %s5, 3
      %p72 = pnand %p70, %p71
      %p73 = pneg %p72
      // Predicated region
      $region9: #{custom-call.57} parent=5 // pred_check
        _
      $region10: #{custom-call.57} parent=5 // pred_check_branch
        %75 = sbr.rel (%p72) target = $region12
      $region11: #{custom-call.57} parent=5 // pred_region
        %s76 = ssub.s32 %s5, 1
      $region12: #{custom-call.57} parent=5 // pred_fallthru
        _
      %p77 = scmp.lt.s32.totalorder %s5, 2
      // Predicated region
      $region13: #{custom-call.57} parent=5 // pred_check
        %p78 = pneg %p77
      $region14: #{custom-call.57} parent=5 // pred_check_branch
        %80 = sbr.rel (%p78) target = $region16
      $region15: #{custom-call.57} parent=5 // pred_region
        %s81 = sand.u32 %s5, 1
        %s82 = sand.u32 %s5, 1
        %s83 = smul.addr %s82, 8
        %s84 = scalar_lea.vmem [#allocation0], %s83
        %s85 = sadd.s32 %s14, %s13
        %s86 = sadd.s32 %s85, %s12
        %s87 = smul.addr %s86, 8
        %s88 = scalar_lea.vmem %s0, %s87
        // Predicated region
        $region17: #{custom-call.57} parent=15 // pred_check
          _
        $region18: #{custom-call.57} parent=15 // pred_check_branch
          %90 = sbr.rel (0) target = $region20
        $region19: #{custom-call.57} parent=15 // pred_region
          // Predicated region
          $region21: #{custom-call.57} parent=19 // pred_check
            _
          $region22: #{custom-call.57} parent=19 // pred_check_branch
            %92 = sbr.rel (0) target = $region24
          $region23: #{custom-call.57} parent=19 // pred_region
            // Predicated region
            $region36: #{custom-call.57} parent=23 // pred_check
              _
            $region37: #{custom-call.57} parent=23 // pred_check_branch
              %107 = sbr.rel (0) target = $region39
            $region38: #{custom-call.57} parent=23 // pred_region
              loop: start=0, step=1, limit=1
              $region40: #{custom-call.57} parent=38 // loop_pre_header
                _
              $region41: #{custom-call.57} parent=38 // loop_header
                %s109 = sphi 0, %s113
                %p110 = scmp.ge.s32.totalorder %s109, 1
                %s114 = sphi %s88, %s88
                %s115 = sphi %s84, %s84
              $region42: #{custom-call.57} parent=38 // loop_header_branch
                %112 = sbr.rel (%p110) target = $region46
              $region43: #{custom-call.57} parent=38 // loop_body
                %v116 = vld [vmem:[%s114] sm:$0xff]
                %117 = vst [vmem:[%s115] sm:$0xff] %v116
              $region44: #{custom-call.57} parent=38 // loop_footer
                %s113 = sadd.s32 1, %s109
              $region45: #{custom-call.57} parent=38 // loop_footer_branch
                %108 = sbr.rel target = $region41
              $region46: #{custom-call.57} parent=38 // loop_exit
                _
            $region39: #{custom-call.57} parent=23 // pred_fallthru
              _
            // Predicated region
            $region47: #{custom-call.57} parent=23 // pred_check
              _
            $region48: #{custom-call.57} parent=23 // pred_check_branch
              %119 = sbr.rel target = $region50
            $region49: #{custom-call.57} parent=23 // pred_region
              _
            $region50: #{custom-call.57} parent=23 // pred_fallthru
              _
          $region24: #{custom-call.57} parent=19 // pred_fallthru
            _
          // Predicated region
          $region25: #{custom-call.57} parent=19 // pred_check
            _
          $region26: #{custom-call.57} parent=19 // pred_check_branch
            %94 = sbr.rel target = $region28
          $region27: #{custom-call.57} parent=19 // pred_region
            loop: start=0, step=1, limit=1
            $region29: #{custom-call.57} parent=27 // loop_pre_header
              _
            $region30: #{custom-call.57} parent=27 // loop_header
              %s97 = sphi 0, %s101
              %p98 = scmp.ge.s32.totalorder %s97, 1
              %s102 = sphi %s88, %s88
              %s103 = sphi %s84, %s84
            $region31: #{custom-call.57} parent=27 // loop_header_branch
              %100 = sbr.rel (%p98) target = $region35
            $region32: #{custom-call.57} parent=27 // loop_body
              %v104 = vld [vmem:[%s102] sm:$0xff]
              %105 = vst [vmem:[%s103] sm:$0xff] %v104
            $region33: #{custom-call.57} parent=27 // loop_footer
              %s101 = sadd.s32 1, %s97
            $region34: #{custom-call.57} parent=27 // loop_footer_branch
              %96 = sbr.rel target = $region30
            $region35: #{custom-call.57} parent=27 // loop_exit
              _
          $region28: #{custom-call.57} parent=19 // pred_fallthru
            _
        $region20: #{custom-call.57} parent=15 // pred_fallthru
          _
        %120 = vnop
      $region16: #{custom-call.57} parent=5 // pred_fallthru
        _
      %p121 = scmp.le.s32.totalorder 1, %s5
      %p122 = scmp.lt.s32.totalorder %s5, 3
      %p123 = pnand %p121, %p122
      %p124 = pneg %p123
      // Predicated region
      $region51: #{custom-call.57} parent=5 // pred_check
        _
      $region52: #{custom-call.57} parent=5 // pred_check_branch
        %126 = sbr.rel (%p123) target = $region54
      $region53: #{custom-call.57} parent=5 // pred_region
        #allocation4 [shape = 'f32[6,128]{1,0}', space=vmem, size = 0x1000, scoped, tag = 'scratch for Householder reflectors']
        %s127 = ssub.s32 %s5, 1
        %s128 = sand.u32 %s10, 1
        %s129 = sand.u32 %s10, 1
        %s130 = smul.addr %s129, 8
        %s131 = scalar_lea.vmem [#allocation0], %s130
        %s132 = sand.u32 %s10, 1
        %s133 = sand.u32 %s10, 1
        %s134 = smul.addr %s133, 8
        %s135 = scalar_lea.vmem [#allocation0], %s134
        %s136 = sand.u32 %s10, 1
        %s137 = sand.u32 %s10, 1
        %s138 = smul.addr %s137, 8
        %s139 = scalar_lea.vmem [#allocation1], %s138
        %p140 = pneg %p62
        %p141 = pneg %p59
        %s142 = sand.u32 %s49, 1
        %s143 = sand.u32 %s49, 1
        %s144 = smul.addr %s143, 2
        %s145 = scalar_lea.vmem [#allocation3], %s144
        %p146 = scmp.lt.s32.totalorder %s15, 0
        %s147 = ssub.s32 0, %s15
        %s148 = scalar_select %p146, %s147, %s15
        %s149 = sshrl.u32 %s148, 3
        %s150 = ssub.s32 0, %s149
        %s151 = scalar_select %p146, %s150, %s149
        %s152 = sand.u32 %s15, 7
        %s153 = scalar_lea.vmem [#allocation2], %s152
        %v154 = vld [vmem:[%s131] sm:$0xff]
        %155 = vst [vmem:[%s139] sm:$0xff] %v154
        %156 = vst [vmem:[%s153] sm:$0x1] 0.0
        loop: start=0, step=1, limit=3
        $region55: #{custom-call.57} parent=53 // loop_pre_header
          _
        $region56: #{custom-call.57} parent=53 // loop_header
          %s158 = sphi 0, %s162
          %p159 = scmp.ge.s32.totalorder %s158, 3
        $region57: #{custom-call.57} parent=53 // loop_header_branch
          %161 = sbr.rel (%p159) target = $region61
        $region58: #{custom-call.57} parent=53 // loop_body
          %v163 = vld [vmem:[%s139] sm:$0xff]
          %v164 = vlaneseq
          %v165 = vshrl.u32 %v164, 7
          %v167 = vstv %s158
          %vm168 = vcmp.gt.s32.totalorder %v165, %v167
          %vm169 = vcmp.lt.s32.totalorder %v165, 6
          %vm170 = vmand %vm168, %vm169
          %v171 = vsel %vm170, %v163, 0.0
          %v172 = vmul.f32 %v171, %v171
          %v173 = vrot.slane %v172, 4
          %v174 = vadd.f32 %v172, %v173
          %v175 = vrot.slane %v174, 2
          %v176 = vadd.f32 %v174, %v175
          %v177 = vrot.slane %v176, 1
          %v178 = vadd.f32 %v176, %v177
          %v179 = vrsqrt.pop %v178
          %v180 = vmul.f32 %v178, %v179
          %vm181 = vcmp.eq.f32.partialorder %v178, inf
          %v182 = vsel %vm181, %v178, %v180
          %vm183 = vcmp.eq.f32.partialorder %v178, 0.0
          %v184 = vand.u32 %v178, 2147483648
          %v185 = vsel %vm183, %v184, %v182
          %vm186 = vcmp.eq.f32.partialorder %v178, 0.0
          %s187 = sshrl.u32 %s158, 3
          %s188 = sand.u32 %s158, 7
          %s189 = smul.addr %s187, 8
          %s190 = sadd.s32 %s188, %s189
          %s191 = scalar_lea.vmem %s139, %s190 [#allocation1]
          %v192 = vld [vmem:[%s191] ss:$0 sm:$0xff]
          %v193 = vand.u32 2147483647, %v192
          %v194 = vmax.f32 %v193, 0.0
          %v195 = vand.u32 2147483647, %v185
          %v196 = vmax.f32 %v194, %v195
          %v197 = vrcp.pop %v196
          %v198 = vmul.f32 %v193, %v197
          %v199 = vmul.f32 %v198, %v198
          %v200 = vrcp.pop %v196
          %v201 = vmul.f32 0.0, %v200
          %v202 = vmul.f32 %v201, %v201
          %v203 = vadd.f32 %v199, %v202
          %v204 = vrcp.pop %v196
          %v205 = vmul.f32 %v195, %v204
          %v206 = vmul.f32 %v205, %v205
          %v207 = vadd.f32 %v203, %v206
          %vm208 = vcmp.eq.f32.partialorder %v196, 0.0
          %v209 = vrsqrt.pop %v207
          %v210 = vmul.f32 %v207, %v209
          %vm211 = vcmp.eq.f32.partialorder %v207, inf
          %v212 = vsel %vm211, %v207, %v210
          %vm213 = vcmp.eq.f32.partialorder %v207, 0.0
          %v214 = vand.u32 %v207, 2147483648
          %v215 = vsel %vm213, %v214, %v212
          %v216 = vmul.f32 %v196, %v215
          %v217 = vsel %vm208, 0.0, %v216
          %vm218 = vcmp.lt.f32.partialorder %v192, 0.0
          %v219 = vxor.u32 %v217, 2147483648
          %v220 = vsel %vm218, %v217, %v219
          %v221 = vsub.f32 %v220, %v192
          %v222 = vrcp.pop %v220
          %v223 = vmul.f32 %v221, %v222
          %v224 = vsel %vm186, %v192, %v220
          %v225 = vsel %vm186, 0.0, %v223
          %v226 = vsub.f32 %v192, %v224
          %s227 = smov %s139
          %v228 = vlaneseq
          %v229 = vshrl.u32 %v228, 7
          %v230 = vmov %v229
          %v231 = vld [vmem:[%s227] sm:$0xff]
          %v233 = vstv %s158
          %vm234 = vcmp.gt.s32.totalorder %v230, %v233
          %vm235 = vcmp.lt.s32.totalorder %v230, 6
          %vm236 = vmand %vm234, %vm235
          %v237 = vsel %vm236, %v231, 0.0
          %v238 = vrcp.pop %v226
          %v239 = vmul.f32 %v237, %v238
          %v240 = vsel %vm186, 0.0, %v239
          %v241 = vstv %s158
          %v242 = vlaneseq
          %v243 = vand.u32 %v242, 127
          %vm244 = vcmp.eq.s32.totalorder %v243, %v241
          %v245 = vsel %vm244, %v240, 0.0
          %246 = vadd.xlane.f32.xlu0 %v245
          %v247 = vpop.xlane.xlu0 %246
          %248 = vst [vmem:[#allocation4] sm:$0xff] %v247
          %s249 = scalar_lea.vmem [#allocation4], %s158
          %250 = vst [vmem:[%s249] sm:$0x1] 1.0
          %v251 = vstv %s158
          %v252 = vlaneseq
          %v253 = vand.u32 %v252, 127
          %vm254 = vcmp.eq.s32.totalorder %v253, %v251
          %v255 = vsel %vm254, %v225, 0.0
          %256 = vadd.xlane.f32.xlu0 %v255
          %v257 = vpop.xlane.xlu0 %256
          %v258 = vstv %s158
          %v259 = vlaneseq
          %v260 = vand.u32 %v259, 127
          %vm261 = vcmp.eq.s32.totalorder %v260, %v258
          %v262 = vld [vmem:[%s153] ss:$0 sm:$0xff]
          %v263 = vsel %vm261, %v257, %v262
          %264 = vst [vmem:[%s153] sm:$0x1] %v263
          %s265 = smov %s139
          %s266 = smov [#allocation4]
          %v267 = vlaneseq
          %v268 = vshrl.u32 %v267, 7
          %v269 = vmov %v268
          %v271 = vld [vmem:[%s266] sm:$0xff]
          %v272 = vld [vmem:[%s265] sm:$0xff]
          %v273 = vmul.f32 %v271, %v272
          %vm274 = vcmp.lt.s32.totalorder %v269, 6
          %v275 = vsel %vm274, %v273, 0.0
          %v276 = vrot.slane %v275, 4
          %v277 = vadd.f32 %v275, %v276
          %v278 = vrot.slane %v277, 2
          %v279 = vadd.f32 %v277, %v278
          %v280 = vrot.slane %v279, 1
          %v281 = vadd.f32 %v279, %v280
          %s282 = smov %s265
          %s283 = smov %s266
          %v284 = vlaneseq
          %v285 = vshrl.u32 %v284, 7
          %v286 = vmov %v285
          %v287 = vmul.f32 %v281, %v257
          %v289 = vlaneseq
          %v290 = vand.u32 %v289, 127
          %v291 = vld [vmem:[%s283] sm:$0xff]
          %v292 = vmul.f32 %v291, %v287
          %v293 = vld [vmem:[%s282] sm:$0xff]
          %v294 = vstv %s158
          %vm295 = vcmp.gt.s32.totalorder %v290, %v294
          %v296 = vsub.f32 %v293, %v292
          %v297 = vsel %vm295, %v296, %v293
          %v298 = vstv %s158
          %v299 = vlaneseq
          %v300 = vand.u32 %v299, 127
          %vm301 = vcmp.eq.s32.totalorder %v300, %v298
          %v302 = vstv %s158
          %vm303 = vcmp.ge.s32.totalorder %v286, %v302
          %vm304 = vmand %vm301, %vm303
          %v305 = vsel %vm304, %v291, %v297
          %306 = vst [vmem:[%s282] sm:$0xff] %v305
          %s307 = scalar_lea.vmem %s282, %s158
          %v308 = vld [vmem:[%s307] ss:$0 sm:$0xff]
          %v309 = vstv %s158
          %v310 = vlaneseq
          %v311 = vand.u32 %v310, 127
          %vm312 = vcmp.eq.s32.totalorder %v311, %v309
          %v313 = vsel %vm312, %v224, %v308
          %314 = vst [vmem:[%s307] sm:$0x1] %v313
        $region59: #{custom-call.57} parent=53 // loop_footer
          %s162 = sadd.s32 1, %s158
        $region60: #{custom-call.57} parent=53 // loop_footer_branch
          %157 = sbr.rel target = $region56
        $region61: #{custom-call.57} parent=53 // loop_exit
          _
        %s316 = sshllo.u32 0, 2
        %v318 = vld [vmem:[#allocation2] sm:%s316]
        %s319 = sshllo.u32 0, 2
        %320 = vst [vmem:[%s145] sm:%s319] %v318
        %s321 = sand.u32 %s10, 1
        %s322 = sand.u32 %s10, 1
        %s323 = smul.addr %s322, 8
        %s324 = scalar_lea.vmem [#allocation1], %s323
        %s325 = sand.u32 %s49, 1
        %s326 = sand.u32 %s49, 1
        %s327 = smul.addr %s326, 2
        %s328 = scalar_lea.vmem [#allocation3], %s327
        %s329 = sadd.s32 %s17, %s16
        %s330 = sadd.s32 %s329, %s15
        %s331 = smul.addr %s330, 8
        %s332 = scalar_lea.vmem %s1, %s331
        // Predicated region
        $region62: #{custom-call.57} parent=53 // pred_check
          _
        $region63: #{custom-call.57} parent=53 // pred_check_branch
          %334 = sbr.rel (0) target = $region65
        $region64: #{custom-call.57} parent=53 // pred_region
          // Predicated region
          $region66: #{custom-call.57} parent=64 // pred_check
            _
          $region67: #{custom-call.57} parent=64 // pred_check_branch
            %336 = sbr.rel (0) target = $region69
          $region68: #{custom-call.57} parent=64 // pred_region
            // Predicated region
            $region81: #{custom-call.57} parent=68 // pred_check
              _
            $region82: #{custom-call.57} parent=68 // pred_check_branch
              %351 = sbr.rel (0) target = $region84
            $region83: #{custom-call.57} parent=68 // pred_region
              loop: start=0, step=1, limit=1
              $region85: #{custom-call.57} parent=83 // loop_pre_header
                _
              $region86: #{custom-call.57} parent=83 // loop_header
                %s353 = sphi 0, %s357
                %p354 = scmp.ge.s32.totalorder %s353, 1
                %s358 = sphi %s324, %s324
                %s359 = sphi %s332, %s332
              $region87: #{custom-call.57} parent=83 // loop_header_branch
                %356 = sbr.rel (%p354) target = $region91
              $region88: #{custom-call.57} parent=83 // loop_body
                %v360 = vld [vmem:[%s358] sm:$0xff]
                %361 = vst [vmem:[%s359] sm:$0xff] %v360
              $region89: #{custom-call.57} parent=83 // loop_footer
                %s357 = sadd.s32 1, %s353
              $region90: #{custom-call.57} parent=83 // loop_footer_branch
                %352 = sbr.rel target = $region86
              $region91: #{custom-call.57} parent=83 // loop_exit
                _
            $region84: #{custom-call.57} parent=68 // pred_fallthru
              _
            // Predicated region
            $region92: #{custom-call.57} parent=68 // pred_check
              _
            $region93: #{custom-call.57} parent=68 // pred_check_branch
              %363 = sbr.rel target = $region95
            $region94: #{custom-call.57} parent=68 // pred_region
              _
            $region95: #{custom-call.57} parent=68 // pred_fallthru
              _
          $region69: #{custom-call.57} parent=64 // pred_fallthru
            _
          // Predicated region
          $region70: #{custom-call.57} parent=64 // pred_check
            _
          $region71: #{custom-call.57} parent=64 // pred_check_branch
            %338 = sbr.rel target = $region73
          $region72: #{custom-call.57} parent=64 // pred_region
            loop: start=0, step=1, limit=1
            $region74: #{custom-call.57} parent=72 // loop_pre_header
              _
            $region75: #{custom-call.57} parent=72 // loop_header
              %s341 = sphi 0, %s345
              %p342 = scmp.ge.s32.totalorder %s341, 1
              %s346 = sphi %s324, %s324
              %s347 = sphi %s332, %s332
            $region76: #{custom-call.57} parent=72 // loop_header_branch
              %344 = sbr.rel (%p342) target = $region80
            $region77: #{custom-call.57} parent=72 // loop_body
              %v348 = vld [vmem:[%s346] sm:$0xff]
              %349 = vst [vmem:[%s347] sm:$0xff] %v348
            $region78: #{custom-call.57} parent=72 // loop_footer
              %s345 = sadd.s32 1, %s341
            $region79: #{custom-call.57} parent=72 // loop_footer_branch
              %340 = sbr.rel target = $region75
            $region80: #{custom-call.57} parent=72 // loop_exit
              _
          $region73: #{custom-call.57} parent=64 // pred_fallthru
            _
        $region65: #{custom-call.57} parent=53 // pred_fallthru
          _
        %364 = vnop
        // Predicated region
        $region96: #{custom-call.57} parent=53 // pred_check
          %p365 = pneg %p59
        $region97: #{custom-call.57} parent=53 // pred_check_branch
          %367 = sbr.rel (%p365) target = $region99
        $region98: #{custom-call.57} parent=53 // pred_region
          %p368 = scmp.lt.s32.totalorder %s15, 0
          %s369 = ssub.s32 0, %s15
          %s370 = scalar_select %p368, %s369, %s15
          %s371 = sshrl.u32 %s370, 3
          %s372 = ssub.s32 0, %s371
          %s373 = scalar_select %p368, %s372, %s371
          %s374 = smul.addr %s373, 2
          %s375 = scalar_lea.vmem %s2, %s374
          // Predicated region
          $region100: #{custom-call.57} parent=98 // pred_check
            _
          $region101: #{custom-call.57} parent=98 // pred_check_branch
            %377 = sbr.rel (0) target = $region103
          $region102: #{custom-call.57} parent=98 // pred_region
            // Predicated region
            $region104: #{custom-call.57} parent=102 // pred_check
              _
            $region105: #{custom-call.57} parent=102 // pred_check_branch
              %379 = sbr.rel target = $region107
            $region106: #{custom-call.57} parent=102 // pred_region
              // Predicated region
              $region119: #{custom-call.57} parent=106 // pred_check
                _
              $region120: #{custom-call.57} parent=106 // pred_check_branch
                %394 = sbr.rel (0) target = $region122
              $region121: #{custom-call.57} parent=106 // pred_region
                loop: start=0, step=1, limit=1
                $region123: #{custom-call.57} parent=121 // loop_pre_header
                  _
                $region124: #{custom-call.57} parent=121 // loop_header
                  %s397 = sphi 0, %s401
                  %p398 = scmp.ge.s32.totalorder %s397, 1
                  %s402 = sphi %s328, %s328
                  %s403 = sphi %s375, %s375
                $region125: #{custom-call.57} parent=121 // loop_header_branch
                  %400 = sbr.rel (%p398) target = $region129
                $region126: #{custom-call.57} parent=121 // loop_body
                  %v404 = vld [vmem:[%s402] sm:$0x3]
                  %405 = vst [vmem:[%s403] sm:$0x3] %v404
                $region127: #{custom-call.57} parent=121 // loop_footer
                  %s401 = sadd.s32 1, %s397
                $region128: #{custom-call.57} parent=121 // loop_footer_branch
                  %396 = sbr.rel target = $region124
                $region129: #{custom-call.57} parent=121 // loop_exit
                  _
              $region122: #{custom-call.57} parent=106 // pred_fallthru
                _
            $region107: #{custom-call.57} parent=102 // pred_fallthru
              _
            // Predicated region
            $region108: #{custom-call.57} parent=102 // pred_check
              _
            $region109: #{custom-call.57} parent=102 // pred_check_branch
              %381 = sbr.rel (0) target = $region111
            $region110: #{custom-call.57} parent=102 // pred_region
              loop: start=0, step=1, limit=1
              $region112: #{custom-call.57} parent=110 // loop_pre_header
                _
              $region113: #{custom-call.57} parent=110 // loop_header
                %s384 = sphi 0, %s388
                %p385 = scmp.ge.s32.totalorder %s384, 1
                %s389 = sphi %s328, %s328
                %s390 = sphi %s375, %s375
              $region114: #{custom-call.57} parent=110 // loop_header_branch
                %387 = sbr.rel (%p385) target = $region118
              $region115: #{custom-call.57} parent=110 // loop_body
                %v391 = vld [vmem:[%s389] sm:$0x3]
                %392 = vst [vmem:[%s390] sm:$0x3] %v391
              $region116: #{custom-call.57} parent=110 // loop_footer
                %s388 = sadd.s32 1, %s384
              $region117: #{custom-call.57} parent=110 // loop_footer_branch
                %383 = sbr.rel target = $region113
              $region118: #{custom-call.57} parent=110 // loop_exit
                _
            $region111: #{custom-call.57} parent=102 // pred_fallthru
              _
          $region103: #{custom-call.57} parent=98 // pred_fallthru
            _
          %406 = vnop
        $region99: #{custom-call.57} parent=53 // pred_fallthru
          _
      $region54: #{custom-call.57} parent=5 // pred_fallthru
        _
      %p407 = scmp.le.s32.totalorder 2, %s5
      // Predicated region
      $region130: #{custom-call.57} parent=5 // pred_check
        %p408 = pneg %p407
      $region131: #{custom-call.57} parent=5 // pred_check_branch
        %410 = sbr.rel (%p408) target = $region133
      $region132: #{custom-call.57} parent=5 // pred_region
        %s411 = ssub.s32 %s5, 2
        %s412 = sand.u32 %s11, 1
        %s413 = sand.u32 %s11, 1
        %s414 = smul.addr %s413, 8
        %s415 = scalar_lea.vmem [#allocation1], %s414
        // Predicated region
        $region134: #{custom-call.57} parent=132 // pred_check
          %p416 = pneg %p65
        $region135: #{custom-call.57} parent=132 // pred_check_branch
          %418 = sbr.rel (%p416) target = $region137
        $region136: #{custom-call.57} parent=132 // pred_region
          %s419 = sand.u32 %s50, 1
          %s420 = sand.u32 %s50, 1
          %s421 = smul.addr %s420, 2
          %s422 = scalar_lea.vmem [#allocation3], %s421
        $region137: #{custom-call.57} parent=132 // pred_fallthru
          _
      $region133: #{custom-call.57} parent=5 // pred_fallthru
        _
    $region6: #{custom-call.57} parent=1 // loop_footer
      %s9 = sadd.s32 1, %s5
    $region7: #{custom-call.57} parent=1 // loop_footer_branch
      %4 = sbr.rel target = $region3
    $region8: #{custom-call.57} parent=1 // loop_exit
      _

// kernel: custom-call.58
$region0: #{custom-call.58}
  %s0 = inlined_call_operand.vmem [shape: f32[2,3,3], index: 0, kind: input, shape index: {}]
  %s1 = inlined_call_operand.vmem [shape: f32[2,3,3], index: 1, kind: output, shape index: {}]
  $region1: #{custom-call.58} parent=0
    #allocation0 [shape = 'u8[4096]{0}', space=vmem, size = 0x1000, scoped, tag = 'operand span for operand 0']
    #allocation1 [shape = 'u8[4096]{0}', space=vmem, size = 0x1000, scoped, tag = 'packed  for operand 0']
    #allocation2 [shape = 'u8[4096]{0}', space=vmem, size = 0x1000, scoped, tag = 'operand span for operand 1']
    #allocation3 [shape = 'u8[4096]{0}', space=vmem, size = 0x1000, scoped, tag = 'packed  for operand 1']
    loop: start=0, step=1, limit=4
    $region2: #{custom-call.58} parent=1 // loop_pre_header
      _
    $region3: #{custom-call.58} parent=1 // loop_header
      %s3 = sphi 0, %s7
      %p4 = scmp.ge.s32.totalorder %s3, 4
    $region4: #{custom-call.58} parent=1 // loop_header_branch
      %6 = sbr.rel (%p4) target = $region8
    $region5: #{custom-call.58} parent=1 // loop_body
      %s8 = ssub.s32 %s3, 1
      %s9 = ssub.s32 %s3, 2
      %s10 = sadd.s32 %s3, 1
      %p11 = scmp.le.s32.totalorder 1, %s3
      %p12 = scmp.lt.s32.totalorder %s3, 3
      %p13 = pnand %p11, %p12
      %p14 = pneg %p13
      // Predicated region
      $region9: #{custom-call.58} parent=5 // pred_check
        _
      $region10: #{custom-call.58} parent=5 // pred_check_branch
        %16 = sbr.rel (%p13) target = $region12
      $region11: #{custom-call.58} parent=5 // pred_region
        %s17 = ssub.s32 %s3, 1
      $region12: #{custom-call.58} parent=5 // pred_fallthru
        _
      %p18 = scmp.lt.s32.totalorder %s3, 2
      // Predicated region
      $region13: #{custom-call.58} parent=5 // pred_check
        %p19 = pneg %p18
      $region14: #{custom-call.58} parent=5 // pred_check_branch
        %21 = sbr.rel (%p19) target = $region16
      $region15: #{custom-call.58} parent=5 // pred_region
        %s22 = sand.u32 %s3, 1
        %s23 = sand.u32 %s3, 1
        %s24 = smul.addr %s23, 4
        %s25 = scalar_lea.vmem [#allocation1], %s24
        %s26 = smul.addr %s3, 4
        %s27 = scalar_lea.vmem %s0, %s26
        // Predicated region
        $region17: #{custom-call.58} parent=15 // pred_check
          _
        $region18: #{custom-call.58} parent=15 // pred_check_branch
          %29 = sbr.rel (0) target = $region20
        $region19: #{custom-call.58} parent=15 // pred_region
          // Predicated region
          $region21: #{custom-call.58} parent=19 // pred_check
            _
          $region22: #{custom-call.58} parent=19 // pred_check_branch
            %31 = sbr.rel target = $region24
          $region23: #{custom-call.58} parent=19 // pred_region
            // Predicated region
            $region36: #{custom-call.58} parent=23 // pred_check
              _
            $region37: #{custom-call.58} parent=23 // pred_check_branch
              %46 = sbr.rel (0) target = $region39
            $region38: #{custom-call.58} parent=23 // pred_region
              loop: start=0, step=1, limit=1
              $region40: #{custom-call.58} parent=38 // loop_pre_header
                _
              $region41: #{custom-call.58} parent=38 // loop_header
                %s49 = sphi 0, %s53
                %p50 = scmp.ge.s32.totalorder %s49, 1
                %s54 = sphi %s27, %s27
                %s55 = sphi %s25, %s25
              $region42: #{custom-call.58} parent=38 // loop_header_branch
                %52 = sbr.rel (%p50) target = $region46
              $region43: #{custom-call.58} parent=38 // loop_body
                %v56 = vld [vmem:[%s54] sm:$0xf]
                %57 = vst [vmem:[%s55] sm:$0xf] %v56
              $region44: #{custom-call.58} parent=38 // loop_footer
                %s53 = sadd.s32 1, %s49
              $region45: #{custom-call.58} parent=38 // loop_footer_branch
                %48 = sbr.rel target = $region41
              $region46: #{custom-call.58} parent=38 // loop_exit
                _
            $region39: #{custom-call.58} parent=23 // pred_fallthru
              _
          $region24: #{custom-call.58} parent=19 // pred_fallthru
            _
          // Predicated region
          $region25: #{custom-call.58} parent=19 // pred_check
            _
          $region26: #{custom-call.58} parent=19 // pred_check_branch
            %33 = sbr.rel (0) target = $region28
          $region27: #{custom-call.58} parent=19 // pred_region
            loop: start=0, step=1, limit=1
            $region29: #{custom-call.58} parent=27 // loop_pre_header
              _
            $region30: #{custom-call.58} parent=27 // loop_header
              %s36 = sphi 0, %s40
              %p37 = scmp.ge.s32.totalorder %s36, 1
              %s41 = sphi %s27, %s27
              %s42 = sphi %s25, %s25
            $region31: #{custom-call.58} parent=27 // loop_header_branch
              %39 = sbr.rel (%p37) target = $region35
            $region32: #{custom-call.58} parent=27 // loop_body
              %v43 = vld [vmem:[%s41] sm:$0xf]
              %44 = vst [vmem:[%s42] sm:$0xf] %v43
            $region33: #{custom-call.58} parent=27 // loop_footer
              %s40 = sadd.s32 1, %s36
            $region34: #{custom-call.58} parent=27 // loop_footer_branch
              %35 = sbr.rel target = $region30
            $region35: #{custom-call.58} parent=27 // loop_exit
              _
          $region28: #{custom-call.58} parent=19 // pred_fallthru
            _
        $region20: #{custom-call.58} parent=15 // pred_fallthru
          _
        %58 = vnop
      $region16: #{custom-call.58} parent=5 // pred_fallthru
        _
      %p59 = scmp.le.s32.totalorder 1, %s3
      %p60 = scmp.lt.s32.totalorder %s3, 3
      %p61 = pnand %p59, %p60
      %p62 = pneg %p61
      // Predicated region
      $region47: #{custom-call.58} parent=5 // pred_check
        _
      $region48: #{custom-call.58} parent=5 // pred_check_branch
        %64 = sbr.rel (%p61) target = $region50
      $region49: #{custom-call.58} parent=5 // pred_region
        %s65 = ssub.s32 %s3, 1
        %s66 = sand.u32 %s8, 1
        %s67 = sand.u32 %s8, 1
        %s68 = smul.addr %s67, 4
        %s69 = scalar_lea.vmem [#allocation1], %s68
        %s70 = sand.u32 %s8, 1
        %s71 = sand.u32 %s8, 1
        %s72 = smul.addr %s71, 4
        %s73 = scalar_lea.vmem [#allocation1], %s72
        %s74 = sand.u32 %s8, 1
        %s75 = sand.u32 %s8, 1
        %s76 = smul.addr %s75, 4
        %s77 = scalar_lea.vmem [#allocation3], %s76
        %s79 = sshllo.u32 0, 4
        %v80 = vld [vmem:[%s73] sm:%s79]
        %81 = vst [vmem:[#allocation0] sm:%s79] %v80
        %v82 = vlaneseq
        %v83 = vand.u32 %v82, 127
        %v84 = vlaneseq
        %v85 = vshrl.u32 %v84, 7
        %vm87 = vcmp.eq.s32.totalorder %v83, %v85
        %v88 = vld [vmem:[#allocation0] sm:$0xff]
        %v89 = vlaneseq
        %v90 = vand.u32 %v89, 127
        %vm91 = vcmp.eq.s32.totalorder %v90, 0
        %v92 = vsel %vm91, %v88, 1.0
        %v93 = vsel %vm87, %v92, 0.0
        %s94 = scalar_lea.vmem [#allocation0], 1
        %v95 = vld [vmem:[%s94] ss:$0 sm:$0xff]
        %vm96 = vcmask 23552
        %v97 = vsel %vm96, %v95, 0.0
        %v98 = vlaneseq
        %v99 = vand.u32 %v98, 127
        %vm100 = vcmp.eq.s32.totalorder %v99, 1
        %v101 = vmul.f32 %v97, %v93
        %102 = vadd.xlane.f32.xlu0 %v101
        %v103 = vpop.xlane.xlu0 %102
        %v104 = vsel %vm100, %v103, %v93
        %s105 = scalar_lea.vmem [#allocation0], 2
        %v106 = vld [vmem:[%s105] ss:$0 sm:$0xff]
        %vm107 = vcmask 23552
        %v108 = vsel %vm107, %v106, 0.0
        %v109 = vlaneseq
        %v110 = vand.u32 %v109, 127
        %vm111 = vcmp.eq.s32.totalorder %v110, 2
        %v112 = vmul.f32 %v108, %v104
        %113 = vadd.xlane.f32.xlu0 %v112
        %v114 = vpop.xlane.xlu0 %113
        %v115 = vsel %vm111, %v114, %v104
        %116 = vst [vmem:[#allocation2] sm:$0xff] %v115
        %s118 = sshllo.u32 0, 4
        %v120 = vld [vmem:[#allocation2] sm:%s118]
        %s121 = sshllo.u32 0, 4
        %122 = vst [vmem:[%s77] sm:%s121] %v120
        %s123 = sand.u32 %s8, 1
        %s124 = sand.u32 %s8, 1
        %s125 = smul.addr %s124, 4
        %s126 = scalar_lea.vmem [#allocation3], %s125
        %s127 = smul.addr %s8, 4
        %s128 = scalar_lea.vmem %s1, %s127
        // Predicated region
        $region51: #{custom-call.58} parent=49 // pred_check
          _
        $region52: #{custom-call.58} parent=49 // pred_check_branch
          %130 = sbr.rel (0) target = $region54
        $region53: #{custom-call.58} parent=49 // pred_region
          // Predicated region
          $region55: #{custom-call.58} parent=53 // pred_check
            _
          $region56: #{custom-call.58} parent=53 // pred_check_branch
            %132 = sbr.rel target = $region58
          $region57: #{custom-call.58} parent=53 // pred_region
            // Predicated region
            $region70: #{custom-call.58} parent=57 // pred_check
              _
            $region71: #{custom-call.58} parent=57 // pred_check_branch
              %147 = sbr.rel (0) target = $region73
            $region72: #{custom-call.58} parent=57 // pred_region
              loop: start=0, step=1, limit=1
              $region74: #{custom-call.58} parent=72 // loop_pre_header
                _
              $region75: #{custom-call.58} parent=72 // loop_header
                %s150 = sphi 0, %s154
                %p151 = scmp.ge.s32.totalorder %s150, 1
                %s155 = sphi %s126, %s126
                %s156 = sphi %s128, %s128
              $region76: #{custom-call.58} parent=72 // loop_header_branch
                %153 = sbr.rel (%p151) target = $region80
              $region77: #{custom-call.58} parent=72 // loop_body
                %v157 = vld [vmem:[%s155] sm:$0xf]
                %158 = vst [vmem:[%s156] sm:$0xf] %v157
              $region78: #{custom-call.58} parent=72 // loop_footer
                %s154 = sadd.s32 1, %s150
              $region79: #{custom-call.58} parent=72 // loop_footer_branch
                %149 = sbr.rel target = $region75
              $region80: #{custom-call.58} parent=72 // loop_exit
                _
            $region73: #{custom-call.58} parent=57 // pred_fallthru
              _
          $region58: #{custom-call.58} parent=53 // pred_fallthru
            _
          // Predicated region
          $region59: #{custom-call.58} parent=53 // pred_check
            _
          $region60: #{custom-call.58} parent=53 // pred_check_branch
            %134 = sbr.rel (0) target = $region62
          $region61: #{custom-call.58} parent=53 // pred_region
            loop: start=0, step=1, limit=1
            $region63: #{custom-call.58} parent=61 // loop_pre_header
              _
            $region64: #{custom-call.58} parent=61 // loop_header
              %s137 = sphi 0, %s141
              %p138 = scmp.ge.s32.totalorder %s137, 1
              %s142 = sphi %s126, %s126
              %s143 = sphi %s128, %s128
            $region65: #{custom-call.58} parent=61 // loop_header_branch
              %140 = sbr.rel (%p138) target = $region69
            $region66: #{custom-call.58} parent=61 // loop_body
              %v144 = vld [vmem:[%s142] sm:$0xf]
              %145 = vst [vmem:[%s143] sm:$0xf] %v144
            $region67: #{custom-call.58} parent=61 // loop_footer
              %s141 = sadd.s32 1, %s137
            $region68: #{custom-call.58} parent=61 // loop_footer_branch
              %136 = sbr.rel target = $region64
            $region69: #{custom-call.58} parent=61 // loop_exit
              _
          $region62: #{custom-call.58} parent=53 // pred_fallthru
            _
        $region54: #{custom-call.58} parent=49 // pred_fallthru
          _
        %159 = vnop
      $region50: #{custom-call.58} parent=5 // pred_fallthru
        _
      %p160 = scmp.le.s32.totalorder 2, %s3
      // Predicated region
      $region81: #{custom-call.58} parent=5 // pred_check
        %p161 = pneg %p160
      $region82: #{custom-call.58} parent=5 // pred_check_branch
        %163 = sbr.rel (%p161) target = $region84
      $region83: #{custom-call.58} parent=5 // pred_region
        %s164 = ssub.s32 %s3, 2
        %s165 = sand.u32 %s9, 1
        %s166 = sand.u32 %s9, 1
        %s167 = smul.addr %s166, 4
        %s168 = scalar_lea.vmem [#allocation3], %s167
      $region84: #{custom-call.58} parent=5 // pred_fallthru
        _
    $region6: #{custom-call.58} parent=1 // loop_footer
      %s7 = sadd.s32 1, %s3
    $region7: #{custom-call.58} parent=1 // loop_footer_branch
      %2 = sbr.rel target = $region3
    $region8: #{custom-call.58} parent=1 // loop_exit
      _

// kernel: custom-call.50
$region0: #{custom-call.50}
  %s0 = inlined_call_operand.hbm [shape: pred[2], index: 0, kind: output, shape index: {}]

// kernel: custom-call.55
$region0: #{custom-call.55}
  %s0 = inlined_call_operand.vmem [shape: f32[2,3,3], index: 0, kind: input, shape index: {}]
  %s1 = inlined_call_operand.vmem [shape: f32[2,3,3], index: 1, kind: output, shape index: {}]
  $region1: #{custom-call.55} parent=0
    #allocation0 [shape = 'u8[4096]{0}', space=vmem, size = 0x1000, scoped, tag = 'operand span for operand 0']
    #allocation1 [shape = 'u8[4096]{0}', space=vmem, size = 0x1000, scoped, tag = 'packed  for operand 0']
    #allocation2 [shape = 'u8[4096]{0}', space=vmem, size = 0x1000, scoped, tag = 'operand span for operand 1']
    #allocation3 [shape = 'u8[4096]{0}', space=vmem, size = 0x1000, scoped, tag = 'packed  for operand 1']
    loop: start=0, step=1, limit=4
    $region2: #{custom-call.55} parent=1 // loop_pre_header
      _
    $region3: #{custom-call.55} parent=1 // loop_header
      %s3 = sphi 0, %s7
      %p4 = scmp.ge.s32.totalorder %s3, 4
      %s10 = sphi 0, %s29
      %s11 = sphi 0, %s25
      %s12 = sphi 0, %s21
      %s13 = sphi 0, %s10
      %s14 = sphi 0, %s11
      %s15 = sphi 0, %s12
      %s16 = sphi 0, %s13
      %s17 = sphi 0, %s14
      %s18 = sphi 0, %s15
    $region4: #{custom-call.55} parent=1 // loop_header_branch
      %6 = sbr.rel (%p4) target = $region8
    $region5: #{custom-call.55} parent=1 // loop_body
      %s8 = ssub.s32 %s3, 1
      %s9 = ssub.s32 %s3, 2
      %s19 = sadd.s32 1, %s12
      %p20 = scmp.ge.s32.totalorder %s19, 1
      %s21 = scalar_select %p20, 0, %s19
      %s22 = sadd.s32 1, %s11
      %s23 = scalar_select %p20, %s22, %s11
      %p24 = scmp.ge.s32.totalorder %s23, 1
      %s25 = scalar_select %p24, 0, %s23
      %s26 = sadd.s32 1, %s10
      %s27 = scalar_select %p24, %s26, %s10
      %p28 = scmp.ge.s32.totalorder %s27, 2
      %s29 = scalar_select %p28, 0, %s27
      %p30 = scmp.le.s32.totalorder 1, %s3
      %p31 = scmp.lt.s32.totalorder %s3, 3
      %p32 = pnand %p30, %p31
      %p33 = pneg %p32
      // Predicated region
      $region9: #{custom-call.55} parent=5 // pred_check
        _
      $region10: #{custom-call.55} parent=5 // pred_check_branch
        %35 = sbr.rel (%p32) target = $region12
      $region11: #{custom-call.55} parent=5 // pred_region
        %s36 = ssub.s32 %s3, 1
      $region12: #{custom-call.55} parent=5 // pred_fallthru
        _
      %p37 = scmp.lt.s32.totalorder %s3, 2
      // Predicated region
      $region13: #{custom-call.55} parent=5 // pred_check
        %p38 = pneg %p37
      $region14: #{custom-call.55} parent=5 // pred_check_branch
        %40 = sbr.rel (%p38) target = $region16
      $region15: #{custom-call.55} parent=5 // pred_region
        %s41 = sand.u32 %s3, 1
        %s42 = sand.u32 %s3, 1
        %s43 = smul.addr %s42, 4
        %s44 = scalar_lea.vmem [#allocation1], %s43
        %s45 = sadd.s32 %s12, %s11
        %s46 = sadd.s32 %s45, %s10
        %s47 = smul.addr %s46, 4
        %s48 = scalar_lea.vmem %s0, %s47
        // Predicated region
        $region17: #{custom-call.55} parent=15 // pred_check
          _
        $region18: #{custom-call.55} parent=15 // pred_check_branch
          %50 = sbr.rel (0) target = $region20
        $region19: #{custom-call.55} parent=15 // pred_region
          // Predicated region
          $region21: #{custom-call.55} parent=19 // pred_check
            _
          $region22: #{custom-call.55} parent=19 // pred_check_branch
            %52 = sbr.rel target = $region24
          $region23: #{custom-call.55} parent=19 // pred_region
            // Predicated region
            $region36: #{custom-call.55} parent=23 // pred_check
              _
            $region37: #{custom-call.55} parent=23 // pred_check_branch
              %67 = sbr.rel (0) target = $region39
            $region38: #{custom-call.55} parent=23 // pred_region
              loop: start=0, step=1, limit=1
              $region40: #{custom-call.55} parent=38 // loop_pre_header
                _
              $region41: #{custom-call.55} parent=38 // loop_header
                %s70 = sphi 0, %s74
                %p71 = scmp.ge.s32.totalorder %s70, 1
                %s75 = sphi %s48, %s48
                %s76 = sphi %s44, %s44
              $region42: #{custom-call.55} parent=38 // loop_header_branch
                %73 = sbr.rel (%p71) target = $region46
              $region43: #{custom-call.55} parent=38 // loop_body
                %v77 = vld [vmem:[%s75] sm:$0xf]
                %78 = vst [vmem:[%s76] sm:$0xf] %v77
              $region44: #{custom-call.55} parent=38 // loop_footer
                %s74 = sadd.s32 1, %s70
              $region45: #{custom-call.55} parent=38 // loop_footer_branch
                %69 = sbr.rel target = $region41
              $region46: #{custom-call.55} parent=38 // loop_exit
                _
            $region39: #{custom-call.55} parent=23 // pred_fallthru
              _
          $region24: #{custom-call.55} parent=19 // pred_fallthru
            _
          // Predicated region
          $region25: #{custom-call.55} parent=19 // pred_check
            _
          $region26: #{custom-call.55} parent=19 // pred_check_branch
            %54 = sbr.rel (0) target = $region28
          $region27: #{custom-call.55} parent=19 // pred_region
            loop: start=0, step=1, limit=1
            $region29: #{custom-call.55} parent=27 // loop_pre_header
              _
            $region30: #{custom-call.55} parent=27 // loop_header
              %s57 = sphi 0, %s61
              %p58 = scmp.ge.s32.totalorder %s57, 1
              %s62 = sphi %s48, %s48
              %s63 = sphi %s44, %s44
            $region31: #{custom-call.55} parent=27 // loop_header_branch
              %60 = sbr.rel (%p58) target = $region35
            $region32: #{custom-call.55} parent=27 // loop_body
              %v64 = vld [vmem:[%s62] sm:$0xf]
              %65 = vst [vmem:[%s63] sm:$0xf] %v64
            $region33: #{custom-call.55} parent=27 // loop_footer
              %s61 = sadd.s32 1, %s57
            $region34: #{custom-call.55} parent=27 // loop_footer_branch
              %56 = sbr.rel target = $region30
            $region35: #{custom-call.55} parent=27 // loop_exit
              _
          $region28: #{custom-call.55} parent=19 // pred_fallthru
            _
        $region20: #{custom-call.55} parent=15 // pred_fallthru
          _
        %79 = vnop
      $region16: #{custom-call.55} parent=5 // pred_fallthru
        _
      %p80 = scmp.le.s32.totalorder 1, %s3
      %p81 = scmp.lt.s32.totalorder %s3, 3
      %p82 = pnand %p80, %p81
      %p83 = pneg %p82
      // Predicated region
      $region47: #{custom-call.55} parent=5 // pred_check
        _
      $region48: #{custom-call.55} parent=5 // pred_check_branch
        %85 = sbr.rel (%p82) target = $region50
      $region49: #{custom-call.55} parent=5 // pred_region
        %s86 = ssub.s32 %s3, 1
        %s87 = sand.u32 %s8, 1
        %s88 = sand.u32 %s8, 1
        %s89 = smul.addr %s88, 4
        %s90 = scalar_lea.vmem [#allocation1], %s89
        %s91 = sand.u32 %s8, 1
        %s92 = sand.u32 %s8, 1
        %s93 = smul.addr %s92, 4
        %s94 = scalar_lea.vmem [#allocation1], %s93
        %s95 = sand.u32 %s8, 1
        %s96 = sand.u32 %s8, 1
        %s97 = smul.addr %s96, 4
        %s98 = scalar_lea.vmem [#allocation3], %s97
        %s100 = sshllo.u32 0, 4
        %v101 = vld [vmem:[%s94] sm:%s100]
        %102 = vst [vmem:[#allocation0] sm:%s100] %v101
        %103 = vst [vmem:[#allocation2] sm:$0xff] 0.0
        %vm104 = vcmask 7168
        %v105 = vld [vmem:[#allocation2] ss:$0 sm:$0xff]
        %v106 = vld [vmem:[#allocation0] ss:$0 sm:$0xff]
        %v107 = vmul.f32 %v105, %v105
        %108 = vadd.xlane.f32.xlu0 %v107
        %v109 = vpop.xlane.xlu0 %108
        %v110 = vsub.f32 %v106, %v109
        %v111 = vrsqrt.pop %v110
        %v112 = vld [vmem:[#allocation0] sm:$0xff]
        %v113 = vld [vmem:[#allocation2] sm:$0xff]
        %v114 = vmul.f32 %v113, %v105
        %115 = vadd.xlane.f32.xlu0 %v114
        %v116 = vpop.xlane.xlu0 %115
        %v117 = vsub.f32 %v112, %v116
        %v118 = vmul.f32 %v117, %v111
        %v119 = vsel %vm104, %v118, 0.0
        %v120 = vadd.f32 %v113, %v119
        %121 = vst [vmem:[#allocation2] sm:$0xff] %v120
        %vm122 = vcmask 15368
        %s123 = scalar_lea.vmem [#allocation2], 1
        %v124 = vld [vmem:[%s123] ss:$0 sm:$0xff]
        %s125 = scalar_lea.vmem [#allocation0], 1
        %v126 = vld [vmem:[%s125] ss:$0 sm:$0xff]
        %v127 = vmul.f32 %v124, %v124
        %128 = vadd.xlane.f32.xlu0 %v127
        %v129 = vpop.xlane.xlu0 %128
        %v130 = vsub.f32 %v126, %v129
        %v131 = vrsqrt.pop %v130
        %v132 = vld [vmem:[#allocation0] sm:$0xff]
        %v133 = vld [vmem:[#allocation2] sm:$0xff]
        %v134 = vmul.f32 %v133, %v124
        %135 = vadd.xlane.f32.xlu0 %v134
        %v136 = vpop.xlane.xlu0 %135
        %v137 = vsub.f32 %v132, %v136
        %v138 = vmul.f32 %v137, %v131
        %vm139 = vcmask 1047553
        %vm140 = vmand %vm122, %vm139
        %v141 = vsel %vm140, %v138, 0.0
        %v142 = vadd.f32 %v133, %v141
        %143 = vst [vmem:[#allocation2] sm:$0xff] %v142
        %vm144 = vcmask 23568
        %s145 = scalar_lea.vmem [#allocation2], 2
        %v146 = vld [vmem:[%s145] ss:$0 sm:$0xff]
        %s147 = scalar_lea.vmem [#allocation0], 2
        %v148 = vld [vmem:[%s147] ss:$0 sm:$0xff]
        %v149 = vmul.f32 %v146, %v146
        %150 = vadd.xlane.f32.xlu0 %v149
        %v151 = vpop.xlane.xlu0 %150
        %v152 = vsub.f32 %v148, %v151
        %v153 = vrsqrt.pop %v152
        %v154 = vld [vmem:[#allocation0] sm:$0xff]
        %v155 = vld [vmem:[#allocation2] sm:$0xff]
        %v156 = vmul.f32 %v155, %v146
        %157 = vadd.xlane.f32.xlu0 %v156
        %v158 = vpop.xlane.xlu0 %157
        %v159 = vsub.f32 %v154, %v158
        %v160 = vmul.f32 %v159, %v153
        %vm161 = vcmask 1047554
        %vm162 = vmand %vm144, %vm161
        %v163 = vsel %vm162, %v160, 0.0
        %v164 = vadd.f32 %v155, %v163
        %165 = vst [vmem:[#allocation2] sm:$0xff] %v164
        %s167 = sshllo.u32 0, 4
        %v169 = vld [vmem:[#allocation2] sm:%s167]
        %s170 = sshllo.u32 0, 4
        %171 = vst [vmem:[%s98] sm:%s170] %v169
        %s172 = sand.u32 %s8, 1
        %s173 = sand.u32 %s8, 1
        %s174 = smul.addr %s173, 4
        %s175 = scalar_lea.vmem [#allocation3], %s174
        %s176 = sadd.s32 %s15, %s14
        %s177 = sadd.s32 %s176, %s13
        %s178 = smul.addr %s177, 4
        %s179 = scalar_lea.vmem %s1, %s178
        // Predicated region
        $region51: #{custom-call.55} parent=49 // pred_check
          _
        $region52: #{custom-call.55} parent=49 // pred_check_branch
          %181 = sbr.rel (0) target = $region54
        $region53: #{custom-call.55} parent=49 // pred_region
          // Predicated region
          $region55: #{custom-call.55} parent=53 // pred_check
            _
          $region56: #{custom-call.55} parent=53 // pred_check_branch
            %183 = sbr.rel target = $region58
          $region57: #{custom-call.55} parent=53 // pred_region
            // Predicated region
            $region70: #{custom-call.55} parent=57 // pred_check
              _
            $region71: #{custom-call.55} parent=57 // pred_check_branch
              %198 = sbr.rel (0) target = $region73
            $region72: #{custom-call.55} parent=57 // pred_region
              loop: start=0, step=1, limit=1
              $region74: #{custom-call.55} parent=72 // loop_pre_header
                _
              $region75: #{custom-call.55} parent=72 // loop_header
                %s201 = sphi 0, %s205
                %p202 = scmp.ge.s32.totalorder %s201, 1
                %s206 = sphi %s175, %s175
                %s207 = sphi %s179, %s179
              $region76: #{custom-call.55} parent=72 // loop_header_branch
                %204 = sbr.rel (%p202) target = $region80
              $region77: #{custom-call.55} parent=72 // loop_body
                %v208 = vld [vmem:[%s206] sm:$0xf]
                %209 = vst [vmem:[%s207] sm:$0xf] %v208
              $region78: #{custom-call.55} parent=72 // loop_footer
                %s205 = sadd.s32 1, %s201
              $region79: #{custom-call.55} parent=72 // loop_footer_branch
                %200 = sbr.rel target = $region75
              $region80: #{custom-call.55} parent=72 // loop_exit
                _
            $region73: #{custom-call.55} parent=57 // pred_fallthru
              _
          $region58: #{custom-call.55} parent=53 // pred_fallthru
            _
          // Predicated region
          $region59: #{custom-call.55} parent=53 // pred_check
            _
          $region60: #{custom-call.55} parent=53 // pred_check_branch
            %185 = sbr.rel (0) target = $region62
          $region61: #{custom-call.55} parent=53 // pred_region
            loop: start=0, step=1, limit=1
            $region63: #{custom-call.55} parent=61 // loop_pre_header
              _
            $region64: #{custom-call.55} parent=61 // loop_header
              %s188 = sphi 0, %s192
              %p189 = scmp.ge.s32.totalorder %s188, 1
              %s193 = sphi %s175, %s175
              %s194 = sphi %s179, %s179
            $region65: #{custom-call.55} parent=61 // loop_header_branch
              %191 = sbr.rel (%p189) target = $region69
            $region66: #{custom-call.55} parent=61 // loop_body
              %v195 = vld [vmem:[%s193] sm:$0xf]
              %196 = vst [vmem:[%s194] sm:$0xf] %v195
            $region67: #{custom-call.55} parent=61 // loop_footer
              %s192 = sadd.s32 1, %s188
            $region68: #{custom-call.55} parent=61 // loop_footer_branch
              %187 = sbr.rel target = $region64
            $region69: #{custom-call.55} parent=61 // loop_exit
              _
          $region62: #{custom-call.55} parent=53 // pred_fallthru
            _
        $region54: #{custom-call.55} parent=49 // pred_fallthru
          _
        %210 = vnop
      $region50: #{custom-call.55} parent=5 // pred_fallthru
        _
      %p211 = scmp.le.s32.totalorder 2, %s3
      // Predicated region
      $region81: #{custom-call.55} parent=5 // pred_check
        %p212 = pneg %p211
      $region82: #{custom-call.55} parent=5 // pred_check_branch
        %214 = sbr.rel (%p212) target = $region84
      $region83: #{custom-call.55} parent=5 // pred_region
        %s215 = ssub.s32 %s3, 2
        %s216 = sand.u32 %s9, 1
        %s217 = sand.u32 %s9, 1
        %s218 = smul.addr %s217, 4
        %s219 = scalar_lea.vmem [#allocation3], %s218
      $region84: #{custom-call.55} parent=5 // pred_fallthru
        _
    $region6: #{custom-call.55} parent=1 // loop_footer
      %s7 = sadd.s32 1, %s3
    $region7: #{custom-call.55} parent=1 // loop_footer_branch
      %2 = sbr.rel target = $region3
    $region8: #{custom-call.55} parent=1 // loop_exit
      _

// kernel: custom-call.56
$region0: #{custom-call.56}
  %s0 = inlined_call_operand.vmem [shape: f32[2,1,3,3], index: 0, kind: input, shape index: {}]
  %s1 = inlined_call_operand.vmem [shape: f32[2,1,3,3], index: 1, kind: output, shape index: {}]
  $region1: #{custom-call.56} parent=0
    #allocation0 [shape = 'u8[4096]{0}', space=vmem, size = 0x1000, scoped, tag = 'operand span for operand 0']
    #allocation1 [shape = 'u8[4096]{0}', space=vmem, size = 0x1000, scoped, tag = 'packed  for operand 0']
    #allocation2 [shape = 'u8[4096]{0}', space=vmem, size = 0x1000, scoped, tag = 'operand span for operand 1']
    #allocation3 [shape = 'u8[4096]{0}', space=vmem, size = 0x1000, scoped, tag = 'packed  for operand 1']
    loop: start=0, step=1, limit=4
    $region2: #{custom-call.56} parent=1 // loop_pre_header
      _
    $region3: #{custom-call.56} parent=1 // loop_header
      %s3 = sphi 0, %s7
      %p4 = scmp.ge.s32.totalorder %s3, 4
      %s10 = sphi 0, %s36
      %s11 = sphi 0, %s32
      %s12 = sphi 0, %s28
      %s13 = sphi 0, %s24
      %s14 = sphi 0, %s10
      %s15 = sphi 0, %s11
      %s16 = sphi 0, %s12
      %s17 = sphi 0, %s13
      %s18 = sphi 0, %s14
      %s19 = sphi 0, %s15
      %s20 = sphi 0, %s16
      %s21 = sphi 0, %s17
    $region4: #{custom-call.56} parent=1 // loop_header_branch
      %6 = sbr.rel (%p4) target = $region8
    $region5: #{custom-call.56} parent=1 // loop_body
      %s8 = ssub.s32 %s3, 1
      %s9 = ssub.s32 %s3, 2
      %s22 = sadd.s32 1, %s13
      %p23 = scmp.ge.s32.totalorder %s22, 1
      %s24 = scalar_select %p23, 0, %s22
      %s25 = sadd.s32 1, %s12
      %s26 = scalar_select %p23, %s25, %s12
      %p27 = scmp.ge.s32.totalorder %s26, 1
      %s28 = scalar_select %p27, 0, %s26
      %s29 = sadd.s32 1, %s11
      %s30 = scalar_select %p27, %s29, %s11
      %p31 = scmp.ge.s32.totalorder %s30, 1
      %s32 = scalar_select %p31, 0, %s30
      %s33 = sadd.s32 1, %s10
      %s34 = scalar_select %p31, %s33, %s10
      %p35 = scmp.ge.s32.totalorder %s34, 2
      %s36 = scalar_select %p35, 0, %s34
      %p37 = scmp.le.s32.totalorder 1, %s3
      %p38 = scmp.lt.s32.totalorder %s3, 3
      %p39 = pnand %p37, %p38
      %p40 = pneg %p39
      // Predicated region
      $region9: #{custom-call.56} parent=5 // pred_check
        _
      $region10: #{custom-call.56} parent=5 // pred_check_branch
        %42 = sbr.rel (%p39) target = $region12
      $region11: #{custom-call.56} parent=5 // pred_region
        %s43 = ssub.s32 %s3, 1
      $region12: #{custom-call.56} parent=5 // pred_fallthru
        _
      %p44 = scmp.lt.s32.totalorder %s3, 2
      // Predicated region
      $region13: #{custom-call.56} parent=5 // pred_check
        %p45 = pneg %p44
      $region14: #{custom-call.56} parent=5 // pred_check_branch
        %47 = sbr.rel (%p45) target = $region16
      $region15: #{custom-call.56} parent=5 // pred_region
        %s48 = sand.u32 %s3, 1
        %s49 = sand.u32 %s3, 1
        %s50 = smul.addr %s49, 4
        %s51 = scalar_lea.vmem [#allocation1], %s50
        %s52 = sadd.s32 %s13, %s12
        %s53 = sadd.s32 %s52, %s11
        %s54 = sadd.s32 %s53, %s10
        %s55 = smul.addr %s54, 4
        %s56 = scalar_lea.vmem %s0, %s55
        // Predicated region
        $region17: #{custom-call.56} parent=15 // pred_check
          _
        $region18: #{custom-call.56} parent=15 // pred_check_branch
          %58 = sbr.rel (0) target = $region20
        $region19: #{custom-call.56} parent=15 // pred_region
          // Predicated region
          $region21: #{custom-call.56} parent=19 // pred_check
            _
          $region22: #{custom-call.56} parent=19 // pred_check_branch
            %60 = sbr.rel target = $region24
          $region23: #{custom-call.56} parent=19 // pred_region
            // Predicated region
            $region36: #{custom-call.56} parent=23 // pred_check
              _
            $region37: #{custom-call.56} parent=23 // pred_check_branch
              %75 = sbr.rel (0) target = $region39
            $region38: #{custom-call.56} parent=23 // pred_region
              loop: start=0, step=1, limit=1
              $region40: #{custom-call.56} parent=38 // loop_pre_header
                _
              $region41: #{custom-call.56} parent=38 // loop_header
                %s78 = sphi 0, %s82
                %p79 = scmp.ge.s32.totalorder %s78, 1
                %s83 = sphi %s56, %s56
                %s84 = sphi %s51, %s51
              $region42: #{custom-call.56} parent=38 // loop_header_branch
                %81 = sbr.rel (%p79) target = $region46
              $region43: #{custom-call.56} parent=38 // loop_body
                %v85 = vld [vmem:[%s83] sm:$0xf]
                %86 = vst [vmem:[%s84] sm:$0xf] %v85
              $region44: #{custom-call.56} parent=38 // loop_footer
                %s82 = sadd.s32 1, %s78
              $region45: #{custom-call.56} parent=38 // loop_footer_branch
                %77 = sbr.rel target = $region41
              $region46: #{custom-call.56} parent=38 // loop_exit
                _
            $region39: #{custom-call.56} parent=23 // pred_fallthru
              _
          $region24: #{custom-call.56} parent=19 // pred_fallthru
            _
          // Predicated region
          $region25: #{custom-call.56} parent=19 // pred_check
            _
          $region26: #{custom-call.56} parent=19 // pred_check_branch
            %62 = sbr.rel (0) target = $region28
          $region27: #{custom-call.56} parent=19 // pred_region
            loop: start=0, step=1, limit=1
            $region29: #{custom-call.56} parent=27 // loop_pre_header
              _
            $region30: #{custom-call.56} parent=27 // loop_header
              %s65 = sphi 0, %s69
              %p66 = scmp.ge.s32.totalorder %s65, 1
              %s70 = sphi %s56, %s56
              %s71 = sphi %s51, %s51
            $region31: #{custom-call.56} parent=27 // loop_header_branch
              %68 = sbr.rel (%p66) target = $region35
            $region32: #{custom-call.56} parent=27 // loop_body
              %v72 = vld [vmem:[%s70] sm:$0xf]
              %73 = vst [vmem:[%s71] sm:$0xf] %v72
            $region33: #{custom-call.56} parent=27 // loop_footer
              %s69 = sadd.s32 1, %s65
            $region34: #{custom-call.56} parent=27 // loop_footer_branch
              %64 = sbr.rel target = $region30
            $region35: #{custom-call.56} parent=27 // loop_exit
              _
          $region28: #{custom-call.56} parent=19 // pred_fallthru
            _
        $region20: #{custom-call.56} parent=15 // pred_fallthru
          _
        %87 = vnop
      $region16: #{custom-call.56} parent=5 // pred_fallthru
        _
      %p88 = scmp.le.s32.totalorder 1, %s3
      %p89 = scmp.lt.s32.totalorder %s3, 3
      %p90 = pnand %p88, %p89
      %p91 = pneg %p90
      // Predicated region
      $region47: #{custom-call.56} parent=5 // pred_check
        _
      $region48: #{custom-call.56} parent=5 // pred_check_branch
        %93 = sbr.rel (%p90) target = $region50
      $region49: #{custom-call.56} parent=5 // pred_region
        #allocation4 [shape = 'f32[3,3]{1,0}', space=vmem, size = 0x1000, scoped, tag = 'rescaled input a']
        %s94 = ssub.s32 %s3, 1
        %s95 = sand.u32 %s8, 1
        %s96 = sand.u32 %s8, 1
        %s97 = smul.addr %s96, 4
        %s98 = scalar_lea.vmem [#allocation1], %s97
        %s99 = sand.u32 %s8, 1
        %s100 = sand.u32 %s8, 1
        %s101 = smul.addr %s100, 4
        %s102 = scalar_lea.vmem [#allocation1], %s101
        %s103 = sand.u32 %s8, 1
        %s104 = sand.u32 %s8, 1
        %s105 = smul.addr %s104, 4
        %s106 = scalar_lea.vmem [#allocation3], %s105
        %s108 = sshllo.u32 0, 4
        %v109 = vld [vmem:[%s102] sm:%s108]
        %110 = vst [vmem:[#allocation0] sm:%s108] %v109
        %v111 = vlaneseq
        %v112 = vand.u32 %v111, 127
        %vm113 = vcmp.lt.s32.totalorder %v112, 3
        %v114 = vlaneseq
        %v115 = vshrl.u32 %v114, 7
        %vm117 = vcmp.eq.s32.totalorder %v115, %v112
        %v118 = vld [vmem:[#allocation0] sm:$0xff]
        %v119 = vsel %vm117, %v118, 0.0
        %120 = vadd.xlane.f32.xlu0 %v119
        %v121 = vpop.xlane.xlu0 %120
        %vm122 = vcmp.ge.s32.totalorder %v115, %v112
        %vm123 = vmand %vm122, %vm113
        %v124 = vsel %vm123, %v118, 0.0
        %v125 = vrcp.pop %v121
        %v126 = vmul.f32 %v124, %v125
        %127 = vst [vmem:[#allocation4] sm:$0xff] %v126
        %v128 = vlaneseq
        %v129 = vand.u32 %v128, 127
        %v130 = vlaneseq
        %v131 = vshrl.u32 %v130, 7
        %vm133 = vcmp.eq.s32.totalorder %v129, %v131
        %v134 = vlaneseq
        %v135 = vand.u32 %v134, 127
        %vm136 = vcmp.eq.s32.totalorder %v135, 0
        %v137 = vsel %vm136, 1.0, -1.0
        %v138 = vsel %vm133, %v137, 0.0
        %s139 = scalar_lea.vmem [#allocation4], 1
        %v140 = vld [vmem:[%s139] ss:$0 sm:$0xff]
        %v141 = vxor.u32 %v140, 2147483648
        %v142 = vlaneseq
        %v143 = vand.u32 %v142, 127
        %vm144 = vcmp.eq.s32.totalorder %v143, 1
        %v145 = vmul.f32 %v141, %v138
        %146 = vadd.xlane.f32.xlu0 %v145
        %v147 = vpop.xlane.xlu0 %146
        %v148 = vsel %vm144, %v147, %v138
        %s149 = scalar_lea.vmem [#allocation4], 2
        %v150 = vld [vmem:[%s149] ss:$0 sm:$0xff]
        %v151 = vxor.u32 %v150, 2147483648
        %v152 = vlaneseq
        %v153 = vand.u32 %v152, 127
        %vm154 = vcmp.eq.s32.totalorder %v153, 2
        %v155 = vmul.f32 %v151, %v148
        %156 = vadd.xlane.f32.xlu0 %v155
        %v157 = vpop.xlane.xlu0 %156
        %v158 = vsel %vm154, %v157, %v148
        %v159 = vrcp.pop %v121
        %v160 = vmul.f32 %v158, %v159
        %vm161 = vweird.f32 %v121
        %v162 = vsel %vm161, %v158, %v160
        %163 = vst [vmem:[#allocation2] sm:$0xff] %v162
        %s165 = sshllo.u32 0, 4
        %v167 = vld [vmem:[#allocation2] sm:%s165]
        %s168 = sshllo.u32 0, 4
        %169 = vst [vmem:[%s106] sm:%s168] %v167
        %s170 = sand.u32 %s8, 1
        %s171 = sand.u32 %s8, 1
        %s172 = smul.addr %s171, 4
        %s173 = scalar_lea.vmem [#allocation3], %s172
        %s174 = sadd.s32 %s17, %s16
        %s175 = sadd.s32 %s174, %s15
        %s176 = sadd.s32 %s175, %s14
        %s177 = smul.addr %s176, 4
        %s178 = scalar_lea.vmem %s1, %s177
        // Predicated region
        $region51: #{custom-call.56} parent=49 // pred_check
          _
        $region52: #{custom-call.56} parent=49 // pred_check_branch
          %180 = sbr.rel (0) target = $region54
        $region53: #{custom-call.56} parent=49 // pred_region
          // Predicated region
          $region55: #{custom-call.56} parent=53 // pred_check
            _
          $region56: #{custom-call.56} parent=53 // pred_check_branch
            %182 = sbr.rel target = $region58
          $region57: #{custom-call.56} parent=53 // pred_region
            // Predicated region
            $region70: #{custom-call.56} parent=57 // pred_check
              _
            $region71: #{custom-call.56} parent=57 // pred_check_branch
              %197 = sbr.rel (0) target = $region73
            $region72: #{custom-call.56} parent=57 // pred_region
              loop: start=0, step=1, limit=1
              $region74: #{custom-call.56} parent=72 // loop_pre_header
                _
              $region75: #{custom-call.56} parent=72 // loop_header
                %s200 = sphi 0, %s204
                %p201 = scmp.ge.s32.totalorder %s200, 1
                %s205 = sphi %s173, %s173
                %s206 = sphi %s178, %s178
              $region76: #{custom-call.56} parent=72 // loop_header_branch
                %203 = sbr.rel (%p201) target = $region80
              $region77: #{custom-call.56} parent=72 // loop_body
                %v207 = vld [vmem:[%s205] sm:$0xf]
                %208 = vst [vmem:[%s206] sm:$0xf] %v207
              $region78: #{custom-call.56} parent=72 // loop_footer
                %s204 = sadd.s32 1, %s200
              $region79: #{custom-call.56} parent=72 // loop_footer_branch
                %199 = sbr.rel target = $region75
              $region80: #{custom-call.56} parent=72 // loop_exit
                _
            $region73: #{custom-call.56} parent=57 // pred_fallthru
              _
          $region58: #{custom-call.56} parent=53 // pred_fallthru
            _
          // Predicated region
          $region59: #{custom-call.56} parent=53 // pred_check
            _
          $region60: #{custom-call.56} parent=53 // pred_check_branch
            %184 = sbr.rel (0) target = $region62
          $region61: #{custom-call.56} parent=53 // pred_region
            loop: start=0, step=1, limit=1
            $region63: #{custom-call.56} parent=61 // loop_pre_header
              _
            $region64: #{custom-call.56} parent=61 // loop_header
              %s187 = sphi 0, %s191
              %p188 = scmp.ge.s32.totalorder %s187, 1
              %s192 = sphi %s173, %s173
              %s193 = sphi %s178, %s178
            $region65: #{custom-call.56} parent=61 // loop_header_branch
              %190 = sbr.rel (%p188) target = $region69
            $region66: #{custom-call.56} parent=61 // loop_body
              %v194 = vld [vmem:[%s192] sm:$0xf]
              %195 = vst [vmem:[%s193] sm:$0xf] %v194
            $region67: #{custom-call.56} parent=61 // loop_footer
              %s191 = sadd.s32 1, %s187
            $region68: #{custom-call.56} parent=61 // loop_footer_branch
              %186 = sbr.rel target = $region64
            $region69: #{custom-call.56} parent=61 // loop_exit
              _
          $region62: #{custom-call.56} parent=53 // pred_fallthru
            _
        $region54: #{custom-call.56} parent=49 // pred_fallthru
          _
        %209 = vnop
      $region50: #{custom-call.56} parent=5 // pred_fallthru
        _
      %p210 = scmp.le.s32.totalorder 2, %s3
      // Predicated region
      $region81: #{custom-call.56} parent=5 // pred_check
        %p211 = pneg %p210
      $region82: #{custom-call.56} parent=5 // pred_check_branch
        %213 = sbr.rel (%p211) target = $region84
      $region83: #{custom-call.56} parent=5 // pred_region
        %s214 = ssub.s32 %s3, 2
        %s215 = sand.u32 %s9, 1
        %s216 = sand.u32 %s9, 1
        %s217 = smul.addr %s216, 4
        %s218 = scalar_lea.vmem [#allocation3], %s217
      $region84: #{custom-call.56} parent=5 // pred_fallthru
        _
    $region6: #{custom-call.56} parent=1 // loop_footer
      %s7 = sadd.s32 1, %s3
    $region7: #{custom-call.56} parent=1 // loop_footer_branch
      %2 = sbr.rel target = $region3
    $region8: #{custom-call.56} parent=1 // loop_exit
      _

// kernel: custom-call.22
$region0: #{custom-call.22}
  %s0 = inlined_call_operand.vmem [shape: f32[2,2,2], index: 0, kind: input, shape index: {}]
  %s1 = inlined_call_operand.vmem [shape: f32[2,2,2], index: 1, kind: input, shape index: {}]
  %s2 = inlined_call_operand.vmem [shape: f32[2,2,2], index: 2, kind: input, shape index: {}]
  %s3 = inlined_call_operand.vmem [shape: f32[2,2,2], index: 3, kind: input, shape index: {}]
  %s4 = inlined_call_operand.vmem [shape: f32[2,2], index: 4, kind: output, shape index: {0}]
  %s5 = inlined_call_operand.vmem [shape: f32[2,2], index: 5, kind: output, shape index: {1}]
  %s6 = inlined_call_operand.vmem [shape: f32[2,2,2], index: 6, kind: output, shape index: {2}]
  %s7 = inlined_call_operand.vmem [shape: f32[2,2,2], index: 7, kind: output, shape index: {3}]
  %s8 = inlined_call_operand.vmem [shape: f32[2,2,2], index: 8, kind: output, shape index: {4}]
  %s9 = inlined_call_operand.vmem [shape: f32[2,2,2], index: 9, kind: output, shape index: {5}]
  %10 = xla_tuple %s4, %s5, %s6, %s7, %s8, %s9
  $region1: #{custom-call.22} parent=0
    #allocation0 [shape = 'u8[4096]{0}', space=vmem, size = 0x1000, scoped, tag = 'operand span for operand 0']
    #allocation1 [shape = 'u8[2048]{0}', space=vmem, size = 0x800, scoped, tag = 'packed  for operand 0']
    #allocation2 [shape = 'u8[4096]{0}', space=vmem, size = 0x1000, scoped, tag = 'operand span for operand 1']
    #allocation3 [shape = 'u8[2048]{0}', space=vmem, size = 0x800, scoped, tag = 'packed  for operand 1']
    #allocation4 [shape = 'u8[4096]{0}', space=vmem, size = 0x1000, scoped, tag = 'operand span for operand 2']
    #allocation5 [shape = 'u8[2048]{0}', space=vmem, size = 0x800, scoped, tag = 'packed  for operand 2']
    #allocation6 [shape = 'u8[4096]{0}', space=vmem, size = 0x1000, scoped, tag = 'operand span for operand 3']
    #allocation7 [shape = 'u8[2048]{0}', space=vmem, size = 0x800, scoped, tag = 'packed  for operand 3']
    #allocation8 [shape = 'u8[4096]{0}', space=vmem, size = 0x1000, scoped, tag = 'operand span for operand 4']
    #allocation9 [shape = 'u8[2048]{0}', space=vmem, size = 0x800, scoped, tag = 'packed  for operand 4']
    #allocation10 [shape = 'u8[4096]{0}', space=vmem, size = 0x1000, scoped, tag = 'operand span for operand 5']
    #allocation11 [shape = 'u8[2048]{0}', space=vmem, size = 0x800, scoped, tag = 'packed  for operand 5']
    #allocation12 [shape = 'u8[4096]{0}', space=vmem, size = 0x1000, scoped, tag = 'operand span for operand 6']
    #allocation13 [shape = 'u8[2048]{0}', space=vmem, size = 0x800, scoped, tag = 'packed  for operand 6']
    #allocation14 [shape = 'u8[4096]{0}', space=vmem, size = 0x1000, scoped, tag = 'operand span for operand 7']
    #allocation15 [shape = 'u8[2048]{0}', space=vmem, size = 0x800, scoped, tag = 'packed  for operand 7']
    #allocation16 [shape = 'u8[4096]{0}', space=vmem, size = 0x1000, scoped, tag = 'operand span for operand 8']
    #allocation17 [shape = 'u8[2048]{0}', space=vmem, size = 0x800, scoped, tag = 'packed  for operand 8']
    #allocation18 [shape = 'u8[4096]{0}', space=vmem, size = 0x1000, scoped, tag = 'operand span for operand 9']
    #allocation19 [shape = 'u8[2048]{0}', space=vmem, size = 0x800, scoped, tag = 'packed  for operand 9']
    loop: start=0, step=1, limit=4
    $region2: #{custom-call.22} parent=1 // loop_pre_header
      _
    $region3: #{custom-call.22} parent=1 // loop_header
      %s12 = sphi 0, %s16
      %p13 = scmp.ge.s32.totalorder %s12, 4
      %s24 = sphi 0, %s26
      %s27 = sphi 0, %s24
      %s28 = sphi 0, %s27
      %s44 = sphi 0, %s28
      %s52 = sphi 0, %s54
      %s55 = sphi 0, %s52
      %s56 = sphi 0, %s55
      %s72 = sphi 0, %s56
    $region4: #{custom-call.22} parent=1 // loop_header_branch
      %15 = sbr.rel (%p13) target = $region8
    $region5: #{custom-call.22} parent=1 // loop_body
      %s17 = ssub.s32 %s12, 1
      %s18 = ssub.s32 %s12, 2
      %s19 = sadd.s32 %s12, 1
      %s20 = sshrl.u32 %s12, 3
      %s21 = sshrl.u32 %s19, 3
      %s22 = ssub.s32 %s20, %s21
      %p23 = scmp.eq.s32.totalorder %s22, 0
      %s25 = sadd.s32 %s24, 1
      %s26 = scalar_select %p23, %s24, %s25
      %p29 = pneg %p23
      %p30 = scmp.eq.s32.totalorder %s12, 1
      %p31 = por %p29, %p30
      %p32 = scmp.ne.s32.totalorder %s24, %s27
      %p33 = scmp.eq.s32.totalorder %s12, 0
      %p34 = por %p32, %p33
      %p35 = scmp.ne.s32.totalorder %s24, %s27
      %p36 = scmp.eq.s32.totalorder %s17, 1
      %p37 = por %p35, %p36
      %p38 = scmp.ne.s32.totalorder %s27, %s28
      %p39 = scmp.eq.s32.totalorder %s17, 0
      %p40 = por %p38, %p39
      %p41 = scmp.ne.s32.totalorder %s27, %s28
      %p42 = scmp.eq.s32.totalorder %s18, 1
      %p43 = por %p41, %p42
      %p45 = scmp.ne.s32.totalorder %s28, %s44
      %p46 = scmp.eq.s32.totalorder %s18, 0
      %p47 = por %p45, %p46
      %s48 = sshrl.u32 %s12, 3
      %s49 = sshrl.u32 %s19, 3
      %s50 = ssub.s32 %s48, %s49
      %p51 = scmp.eq.s32.totalorder %s50, 0
      %s53 = sadd.s32 %s52, 1
      %s54 = scalar_select %p51, %s52, %s53
      %p57 = pneg %p51
      %p58 = scmp.eq.s32.totalorder %s12, 1
      %p59 = por %p57, %p58
      %p60 = scmp.ne.s32.totalorder %s52, %s55
      %p61 = scmp.eq.s32.totalorder %s12, 0
      %p62 = por %p60, %p61
      %p63 = scmp.ne.s32.totalorder %s52, %s55
      %p64 = scmp.eq.s32.totalorder %s17, 1
      %p65 = por %p63, %p64
      %p66 = scmp.ne.s32.totalorder %s55, %s56
      %p67 = scmp.eq.s32.totalorder %s17, 0
      %p68 = por %p66, %p67
      %p69 = scmp.ne.s32.totalorder %s55, %s56
      %p70 = scmp.eq.s32.totalorder %s18, 1
      %p71 = por %p69, %p70
      %p73 = scmp.ne.s32.totalorder %s56, %s72
      %p74 = scmp.eq.s32.totalorder %s18, 0
      %p75 = por %p73, %p74
      %p76 = scmp.le.s32.totalorder 1, %s12
      %p77 = scmp.lt.s32.totalorder %s12, 3
      %p78 = pnand %p76, %p77
      %p79 = pneg %p78
      // Predicated region
      $region9: #{custom-call.22} parent=5 // pred_check
        _
      $region10: #{custom-call.22} parent=5 // pred_check_branch
        %81 = sbr.rel (%p78) target = $region12
      $region11: #{custom-call.22} parent=5 // pred_region
        %s82 = ssub.s32 %s12, 1
      $region12: #{custom-call.22} parent=5 // pred_fallthru
        _
      %p83 = scmp.lt.s32.totalorder %s12, 2
      // Predicated region
      $region13: #{custom-call.22} parent=5 // pred_check
        %p84 = pneg %p83
      $region14: #{custom-call.22} parent=5 // pred_check_branch
        %86 = sbr.rel (%p84) target = $region16
      $region15: #{custom-call.22} parent=5 // pred_region
        %s87 = sand.u32 %s12, 1
        %s88 = sand.u32 %s12, 1
        %s89 = smul.addr %s88, 2
        %s90 = scalar_lea.vmem [#allocation1], %s89
        %s91 = smul.addr %s12, 2
        %s92 = scalar_lea.vmem %s0, %s91
        // Predicated region
        $region17: #{custom-call.22} parent=15 // pred_check
          _
        $region18: #{custom-call.22} parent=15 // pred_check_branch
          %94 = sbr.rel (0) target = $region20
        $region19: #{custom-call.22} parent=15 // pred_region
          // Predicated region
          $region21: #{custom-call.22} parent=19 // pred_check
            _
          $region22: #{custom-call.22} parent=19 // pred_check_branch
            %96 = sbr.rel target = $region24
          $region23: #{custom-call.22} parent=19 // pred_region
            // Predicated region
            $region36: #{custom-call.22} parent=23 // pred_check
              _
            $region37: #{custom-call.22} parent=23 // pred_check_branch
              %111 = sbr.rel (0) target = $region39
            $region38: #{custom-call.22} parent=23 // pred_region
              loop: start=0, step=1, limit=1
              $region40: #{custom-call.22} parent=38 // loop_pre_header
                _
              $region41: #{custom-call.22} parent=38 // loop_header
                %s114 = sphi 0, %s118
                %p115 = scmp.ge.s32.totalorder %s114, 1
                %s119 = sphi %s92, %s92
                %s120 = sphi %s90, %s90
              $region42: #{custom-call.22} parent=38 // loop_header_branch
                %117 = sbr.rel (%p115) target = $region46
              $region43: #{custom-call.22} parent=38 // loop_body
                %v121 = vld [vmem:[%s119] sm:$0x3]
                %122 = vst [vmem:[%s120] sm:$0x3] %v121
              $region44: #{custom-call.22} parent=38 // loop_footer
                %s118 = sadd.s32 1, %s114
              $region45: #{custom-call.22} parent=38 // loop_footer_branch
                %113 = sbr.rel target = $region41
              $region46: #{custom-call.22} parent=38 // loop_exit
                _
            $region39: #{custom-call.22} parent=23 // pred_fallthru
              _
          $region24: #{custom-call.22} parent=19 // pred_fallthru
            _
          // Predicated region
          $region25: #{custom-call.22} parent=19 // pred_check
            _
          $region26: #{custom-call.22} parent=19 // pred_check_branch
            %98 = sbr.rel (0) target = $region28
          $region27: #{custom-call.22} parent=19 // pred_region
            loop: start=0, step=1, limit=1
            $region29: #{custom-call.22} parent=27 // loop_pre_header
              _
            $region30: #{custom-call.22} parent=27 // loop_header
              %s101 = sphi 0, %s105
              %p102 = scmp.ge.s32.totalorder %s101, 1
              %s106 = sphi %s92, %s92
              %s107 = sphi %s90, %s90
            $region31: #{custom-call.22} parent=27 // loop_header_branch
              %104 = sbr.rel (%p102) target = $region35
            $region32: #{custom-call.22} parent=27 // loop_body
              %v108 = vld [vmem:[%s106] sm:$0x3]
              %109 = vst [vmem:[%s107] sm:$0x3] %v108
            $region33: #{custom-call.22} parent=27 // loop_footer
              %s105 = sadd.s32 1, %s101
            $region34: #{custom-call.22} parent=27 // loop_footer_branch
              %100 = sbr.rel target = $region30
            $region35: #{custom-call.22} parent=27 // loop_exit
              _
          $region28: #{custom-call.22} parent=19 // pred_fallthru
            _
        $region20: #{custom-call.22} parent=15 // pred_fallthru
          _
        %123 = vnop
        %s124 = sand.u32 %s12, 1
        %s125 = sand.u32 %s12, 1
        %s126 = smul.addr %s125, 2
        %s127 = scalar_lea.vmem [#allocation3], %s126
        %s128 = smul.addr %s12, 2
        %s129 = scalar_lea.vmem %s1, %s128
        // Predicated region
        $region47: #{custom-call.22} parent=15 // pred_check
          _
        $region48: #{custom-call.22} parent=15 // pred_check_branch
          %131 = sbr.rel (0) target = $region50
        $region49: #{custom-call.22} parent=15 // pred_region
          // Predicated region
          $region51: #{custom-call.22} parent=49 // pred_check
            _
          $region52: #{custom-call.22} parent=49 // pred_check_branch
            %133 = sbr.rel target = $region54
          $region53: #{custom-call.22} parent=49 // pred_region
            // Predicated region
            $region66: #{custom-call.22} parent=53 // pred_check
              _
            $region67: #{custom-call.22} parent=53 // pred_check_branch
              %148 = sbr.rel (0) target = $region69
            $region68: #{custom-call.22} parent=53 // pred_region
              loop: start=0, step=1, limit=1
              $region70: #{custom-call.22} parent=68 // loop_pre_header
                _
              $region71: #{custom-call.22} parent=68 // loop_header
                %s151 = sphi 0, %s155
                %p152 = scmp.ge.s32.totalorder %s151, 1
                %s156 = sphi %s129, %s129
                %s157 = sphi %s127, %s127
              $region72: #{custom-call.22} parent=68 // loop_header_branch
                %154 = sbr.rel (%p152) target = $region76
              $region73: #{custom-call.22} parent=68 // loop_body
                %v158 = vld [vmem:[%s156] sm:$0x3]
                %159 = vst [vmem:[%s157] sm:$0x3] %v158
              $region74: #{custom-call.22} parent=68 // loop_footer
                %s155 = sadd.s32 1, %s151
              $region75: #{custom-call.22} parent=68 // loop_footer_branch
                %150 = sbr.rel target = $region71
              $region76: #{custom-call.22} parent=68 // loop_exit
                _
            $region69: #{custom-call.22} parent=53 // pred_fallthru
              _
          $region54: #{custom-call.22} parent=49 // pred_fallthru
            _
          // Predicated region
          $region55: #{custom-call.22} parent=49 // pred_check
            _
          $region56: #{custom-call.22} parent=49 // pred_check_branch
            %135 = sbr.rel (0) target = $region58
          $region57: #{custom-call.22} parent=49 // pred_region
            loop: start=0, step=1, limit=1
            $region59: #{custom-call.22} parent=57 // loop_pre_header
              _
            $region60: #{custom-call.22} parent=57 // loop_header
              %s138 = sphi 0, %s142
              %p139 = scmp.ge.s32.totalorder %s138, 1
              %s143 = sphi %s129, %s129
              %s144 = sphi %s127, %s127
            $region61: #{custom-call.22} parent=57 // loop_header_branch
              %141 = sbr.rel (%p139) target = $region65
            $region62: #{custom-call.22} parent=57 // loop_body
              %v145 = vld [vmem:[%s143] sm:$0x3]
              %146 = vst [vmem:[%s144] sm:$0x3] %v145
            $region63: #{custom-call.22} parent=57 // loop_footer
              %s142 = sadd.s32 1, %s138
            $region64: #{custom-call.22} parent=57 // loop_footer_branch
              %137 = sbr.rel target = $region60
            $region65: #{custom-call.22} parent=57 // loop_exit
              _
          $region58: #{custom-call.22} parent=49 // pred_fallthru
            _
        $region50: #{custom-call.22} parent=15 // pred_fallthru
          _
        %160 = vnop
        %s161 = sand.u32 %s12, 1
        %s162 = sand.u32 %s12, 1
        %s163 = smul.addr %s162, 2
        %s164 = scalar_lea.vmem [#allocation5], %s163
        %s165 = smul.addr %s12, 2
        %s166 = scalar_lea.vmem %s2, %s165
        // Predicated region
        $region77: #{custom-call.22} parent=15 // pred_check
          _
        $region78: #{custom-call.22} parent=15 // pred_check_branch
          %168 = sbr.rel (0) target = $region80
        $region79: #{custom-call.22} parent=15 // pred_region
          // Predicated region
          $region81: #{custom-call.22} parent=79 // pred_check
            _
          $region82: #{custom-call.22} parent=79 // pred_check_branch
            %170 = sbr.rel target = $region84
          $region83: #{custom-call.22} parent=79 // pred_region
            // Predicated region
            $region96: #{custom-call.22} parent=83 // pred_check
              _
            $region97: #{custom-call.22} parent=83 // pred_check_branch
              %185 = sbr.rel (0) target = $region99
            $region98: #{custom-call.22} parent=83 // pred_region
              loop: start=0, step=1, limit=1
              $region100: #{custom-call.22} parent=98 // loop_pre_header
                _
              $region101: #{custom-call.22} parent=98 // loop_header
                %s188 = sphi 0, %s192
                %p189 = scmp.ge.s32.totalorder %s188, 1
                %s193 = sphi %s166, %s166
                %s194 = sphi %s164, %s164
              $region102: #{custom-call.22} parent=98 // loop_header_branch
                %191 = sbr.rel (%p189) target = $region106
              $region103: #{custom-call.22} parent=98 // loop_body
                %v195 = vld [vmem:[%s193] sm:$0x3]
                %196 = vst [vmem:[%s194] sm:$0x3] %v195
              $region104: #{custom-call.22} parent=98 // loop_footer
                %s192 = sadd.s32 1, %s188
              $region105: #{custom-call.22} parent=98 // loop_footer_branch
                %187 = sbr.rel target = $region101
              $region106: #{custom-call.22} parent=98 // loop_exit
                _
            $region99: #{custom-call.22} parent=83 // pred_fallthru
              _
          $region84: #{custom-call.22} parent=79 // pred_fallthru
            _
          // Predicated region
          $region85: #{custom-call.22} parent=79 // pred_check
            _
          $region86: #{custom-call.22} parent=79 // pred_check_branch
            %172 = sbr.rel (0) target = $region88
          $region87: #{custom-call.22} parent=79 // pred_region
            loop: start=0, step=1, limit=1
            $region89: #{custom-call.22} parent=87 // loop_pre_header
              _
            $region90: #{custom-call.22} parent=87 // loop_header
              %s175 = sphi 0, %s179
              %p176 = scmp.ge.s32.totalorder %s175, 1
              %s180 = sphi %s166, %s166
              %s181 = sphi %s164, %s164
            $region91: #{custom-call.22} parent=87 // loop_header_branch
              %178 = sbr.rel (%p176) target = $region95
            $region92: #{custom-call.22} parent=87 // loop_body
              %v182 = vld [vmem:[%s180] sm:$0x3]
              %183 = vst [vmem:[%s181] sm:$0x3] %v182
            $region93: #{custom-call.22} parent=87 // loop_footer
              %s179 = sadd.s32 1, %s175
            $region94: #{custom-call.22} parent=87 // loop_footer_branch
              %174 = sbr.rel target = $region90
            $region95: #{custom-call.22} parent=87 // loop_exit
              _
          $region88: #{custom-call.22} parent=79 // pred_fallthru
            _
        $region80: #{custom-call.22} parent=15 // pred_fallthru
          _
        %197 = vnop
        %s198 = sand.u32 %s12, 1
        %s199 = sand.u32 %s12, 1
        %s200 = smul.addr %s199, 2
        %s201 = scalar_lea.vmem [#allocation7], %s200
        %s202 = smul.addr %s12, 2
        %s203 = scalar_lea.vmem %s3, %s202
        // Predicated region
        $region107: #{custom-call.22} parent=15 // pred_check
          _
        $region108: #{custom-call.22} parent=15 // pred_check_branch
          %205 = sbr.rel (0) target = $region110
        $region109: #{custom-call.22} parent=15 // pred_region
          // Predicated region
          $region111: #{custom-call.22} parent=109 // pred_check
            _
          $region112: #{custom-call.22} parent=109 // pred_check_branch
            %207 = sbr.rel target = $region114
          $region113: #{custom-call.22} parent=109 // pred_region
            // Predicated region
            $region126: #{custom-call.22} parent=113 // pred_check
              _
            $region127: #{custom-call.22} parent=113 // pred_check_branch
              %222 = sbr.rel (0) target = $region129
            $region128: #{custom-call.22} parent=113 // pred_region
              loop: start=0, step=1, limit=1
              $region130: #{custom-call.22} parent=128 // loop_pre_header
                _
              $region131: #{custom-call.22} parent=128 // loop_header
                %s225 = sphi 0, %s229
                %p226 = scmp.ge.s32.totalorder %s225, 1
                %s230 = sphi %s203, %s203
                %s231 = sphi %s201, %s201
              $region132: #{custom-call.22} parent=128 // loop_header_branch
                %228 = sbr.rel (%p226) target = $region136
              $region133: #{custom-call.22} parent=128 // loop_body
                %v232 = vld [vmem:[%s230] sm:$0x3]
                %233 = vst [vmem:[%s231] sm:$0x3] %v232
              $region134: #{custom-call.22} parent=128 // loop_footer
                %s229 = sadd.s32 1, %s225
              $region135: #{custom-call.22} parent=128 // loop_footer_branch
                %224 = sbr.rel target = $region131
              $region136: #{custom-call.22} parent=128 // loop_exit
                _
            $region129: #{custom-call.22} parent=113 // pred_fallthru
              _
          $region114: #{custom-call.22} parent=109 // pred_fallthru
            _
          // Predicated region
          $region115: #{custom-call.22} parent=109 // pred_check
            _
          $region116: #{custom-call.22} parent=109 // pred_check_branch
            %209 = sbr.rel (0) target = $region118
          $region117: #{custom-call.22} parent=109 // pred_region
            loop: start=0, step=1, limit=1
            $region119: #{custom-call.22} parent=117 // loop_pre_header
              _
            $region120: #{custom-call.22} parent=117 // loop_header
              %s212 = sphi 0, %s216
              %p213 = scmp.ge.s32.totalorder %s212, 1
              %s217 = sphi %s203, %s203
              %s218 = sphi %s201, %s201
            $region121: #{custom-call.22} parent=117 // loop_header_branch
              %215 = sbr.rel (%p213) target = $region125
            $region122: #{custom-call.22} parent=117 // loop_body
              %v219 = vld [vmem:[%s217] sm:$0x3]
              %220 = vst [vmem:[%s218] sm:$0x3] %v219
            $region123: #{custom-call.22} parent=117 // loop_footer
              %s216 = sadd.s32 1, %s212
            $region124: #{custom-call.22} parent=117 // loop_footer_branch
              %211 = sbr.rel target = $region120
            $region125: #{custom-call.22} parent=117 // loop_exit
              _
          $region118: #{custom-call.22} parent=109 // pred_fallthru
            _
        $region110: #{custom-call.22} parent=15 // pred_fallthru
          _
        %234 = vnop
      $region16: #{custom-call.22} parent=5 // pred_fallthru
        _
      %p235 = scmp.le.s32.totalorder 1, %s12
      %p236 = scmp.lt.s32.totalorder %s12, 3
      %p237 = pnand %p235, %p236
      %p238 = pneg %p237
      // Predicated region
      $region137: #{custom-call.22} parent=5 // pred_check
        _
      $region138: #{custom-call.22} parent=5 // pred_check_branch
        %240 = sbr.rel (%p237) target = $region140
      $region139: #{custom-call.22} parent=5 // pred_region
        #allocation20 [shape = 'f32[2,2]{1,0}', space=vmem, size = 0x1000, scoped, tag = 'a top-left matrix']
        #allocation21 [shape = 'f32[2,2]{1,0}', space=vmem, size = 0x1000, scoped, tag = 'a top-right matrix']
        #allocation22 [shape = 'f32[2,2]{1,0}', space=vmem, size = 0x1000, scoped, tag = 'a bottom-left matrix']
        #allocation23 [shape = 'f32[2,2]{1,0}', space=vmem, size = 0x1000, scoped, tag = 'a bottom-right matrix']
        %s241 = ssub.s32 %s12, 1
        %s242 = sand.u32 %s17, 1
        %s243 = sand.u32 %s17, 1
        %s244 = smul.addr %s243, 2
        %s245 = scalar_lea.vmem [#allocation1], %s244
        %s246 = sand.u32 %s17, 1
        %s247 = sand.u32 %s17, 1
        %s248 = smul.addr %s247, 2
        %s249 = scalar_lea.vmem [#allocation3], %s248
        %s250 = sand.u32 %s17, 1
        %s251 = sand.u32 %s17, 1
        %s252 = smul.addr %s251, 2
        %s253 = scalar_lea.vmem [#allocation5], %s252
        %s254 = sand.u32 %s17, 1
        %s255 = sand.u32 %s17, 1
        %s256 = smul.addr %s255, 2
        %s257 = scalar_lea.vmem [#allocation7], %s256
        %s258 = sand.u32 %s17, 1
        %s259 = sand.u32 %s17, 1
        %s260 = smul.addr %s259, 2
        %s261 = scalar_lea.vmem [#allocation1], %s260
        %s262 = sand.u32 %s17, 1
        %s263 = sand.u32 %s17, 1
        %s264 = smul.addr %s263, 2
        %s265 = scalar_lea.vmem [#allocation3], %s264
        %s266 = sand.u32 %s17, 1
        %s267 = sand.u32 %s17, 1
        %s268 = smul.addr %s267, 2
        %s269 = scalar_lea.vmem [#allocation5], %s268
        %s270 = sand.u32 %s17, 1
        %s271 = sand.u32 %s17, 1
        %s272 = smul.addr %s271, 2
        %s273 = scalar_lea.vmem [#allocation7], %s272
        %p274 = pneg %p40
        %p275 = pneg %p37
        %s276 = sand.u32 %s27, 1
        %s277 = sand.u32 %s27, 1
        %s278 = smul.addr %s277, 2
        %s279 = scalar_lea.vmem [#allocation9], %s278
        %p280 = pneg %p68
        %p281 = pneg %p65
        %s282 = sand.u32 %s55, 1
        %s283 = sand.u32 %s55, 1
        %s284 = smul.addr %s283, 2
        %s285 = scalar_lea.vmem [#allocation11], %s284
        %s286 = sand.u32 %s17, 1
        %s287 = sand.u32 %s17, 1
        %s288 = smul.addr %s287, 2
        %s289 = scalar_lea.vmem [#allocation13], %s288
        %s290 = sand.u32 %s17, 1
        %s291 = sand.u32 %s17, 1
        %s292 = smul.addr %s291, 2
        %s293 = scalar_lea.vmem [#allocation15], %s292
        %s294 = sand.u32 %s17, 1
        %s295 = sand.u32 %s17, 1
        %s296 = smul.addr %s295, 2
        %s297 = scalar_lea.vmem [#allocation17], %s296
        %s298 = sand.u32 %s17, 1
        %s299 = sand.u32 %s17, 1
        %s300 = smul.addr %s299, 2
        %s301 = scalar_lea.vmem [#allocation19], %s300
        %s303 = sshllo.u32 0, 2
        %v304 = vld [vmem:[%s261] sm:%s303]
        %305 = vst [vmem:[#allocation0] sm:%s303] %v304
        %s307 = sshllo.u32 0, 2
        %v308 = vld [vmem:[%s265] sm:%s307]
        %309 = vst [vmem:[#allocation2] sm:%s307] %v308
        %s311 = sshllo.u32 0, 2
        %v312 = vld [vmem:[%s269] sm:%s311]
        %313 = vst [vmem:[#allocation4] sm:%s311] %v312
        %s315 = sshllo.u32 0, 2
        %v316 = vld [vmem:[%s273] sm:%s315]
        %317 = vst [vmem:[#allocation6] sm:%s315] %v316
        %s318 = sshrl.u32 %s17, 3
        %s319 = sshrl.u32 %s17, 3
        %s320 = smov [#allocation20]
        %v321 = vld [vmem:[#allocation0] sm:$0xff]
        %322 = vst [vmem:[%s320] sm:$0xff] %v321
        %s323 = smov [#allocation21]
        %v324 = vld [vmem:[#allocation2] sm:$0xff]
        %325 = vst [vmem:[%s323] sm:$0xff] %v324
        %s326 = smov [#allocation22]
        %v327 = vld [vmem:[#allocation4] sm:$0xff]
        %328 = vst [vmem:[%s326] sm:$0xff] %v327
        %s329 = smov [#allocation23]
        %v330 = vld [vmem:[#allocation6] sm:$0xff]
        %331 = vst [vmem:[%s329] sm:$0xff] %v330
        %332 = vst [vmem:[#allocation12] sm:$0xff] 0.0
        %333 = vst [vmem:[#allocation14] sm:$0xff] 0.0
        %334 = vst [vmem:[#allocation16] sm:$0xff] 0.0
        %335 = vst [vmem:[#allocation18] sm:$0xff] 0.0
        %s336 = smov [#allocation12]
        %v337 = vlaneseq
        %v338 = vand.u32 %v337, 127
        %v339 = vmov %v338
        %v340 = vlaneseq
        %v341 = vshrl.u32 %v340, 7
        %v342 = vmov %v341
        %v343 = vld [vmem:[%s336] sm:$0x3]
        %vm346 = vcmp.eq.s32.totalorder %v342, %v339
        %v347 = vsel %vm346, 1.0, %v343
        %348 = vst [vmem:[%s336] sm:$0x3] %v347
        %s349 = smov [#allocation18]
        %v350 = vlaneseq
        %v351 = vand.u32 %v350, 127
        %v352 = vmov %v351
        %v353 = vlaneseq
        %v354 = vshrl.u32 %v353, 7
        %v355 = vmov %v354
        %v356 = vld [vmem:[%s349] sm:$0x3]
        %vm359 = vcmp.eq.s32.totalorder %v355, %v352
        %v360 = vsel %vm359, 1.0, %v356
        %361 = vst [vmem:[%s349] sm:$0x3] %v360
        // While loop
        $region141: #{custom-call.22} parent=139 // loop_pre_header
          _
        $region142: #{custom-call.22} parent=139 // loop_header
          %s363 = sphi 0, %s905
          %v364 = vlaneseq
          %v365 = vand.u32 %v364, 127
          %v366 = vmov %v365
          %v367 = vlaneseq
          %v368 = vshrl.u32 %v367, 7
          %v369 = vmov %v368
          %s370 = smov [#allocation20]
          %v371 = vlaneseq
          %v372 = vand.u32 %v371, 127
          %vm373 = vcmp.ge.s32.totalorder %v372, 0
          %vm374 = vcmp.lt.s32.totalorder %v372, 2
          %vm375 = vmand %vm373, %vm374
          %v376 = vld [vmem:[%s370] sm:$0x3]
          %v377 = vsel %vm375, %v376, 0.0
          %v378 = vmul.f32 %v377, %v377
          %vm381 = vcmp.eq.s32.totalorder %v369, %v366
          %v382 = vsel %vm381, 0.0, %v378
          %v383 = vlaneseq
          %v384 = vand.u32 %v383, 127
          %v385 = vmov %v384
          %v386 = vlaneseq
          %v387 = vshrl.u32 %v386, 7
          %v388 = vmov %v387
          %s389 = smov [#allocation21]
          %v390 = vlaneseq
          %v391 = vand.u32 %v390, 127
          %vm392 = vcmp.ge.s32.totalorder %v391, 0
          %vm393 = vcmp.lt.s32.totalorder %v391, 2
          %vm394 = vmand %vm392, %vm393
          %v395 = vld [vmem:[%s389] sm:$0x3]
          %v396 = vsel %vm394, %v395, 0.0
          %v397 = vmul.f32 %v396, %v396
          %v398 = vadd.f32 %v382, %v397
          %v399 = vadd.f32 %v378, %v397
          %v400 = vlaneseq
          %v401 = vand.u32 %v400, 127
          %v402 = vmov %v401
          %v403 = vlaneseq
          %v404 = vshrl.u32 %v403, 7
          %v405 = vmov %v404
          %s406 = smov [#allocation22]
          %v407 = vlaneseq
          %v408 = vand.u32 %v407, 127
          %vm409 = vcmp.ge.s32.totalorder %v408, 0
          %vm410 = vcmp.lt.s32.totalorder %v408, 2
          %vm411 = vmand %vm409, %vm410
          %v412 = vld [vmem:[%s406] sm:$0x3]
          %v413 = vsel %vm411, %v412, 0.0
          %v414 = vmul.f32 %v413, %v413
          %v415 = vadd.f32 %v398, %v414
          %v416 = vadd.f32 %v399, %v414
          %v417 = vlaneseq
          %v418 = vand.u32 %v417, 127
          %v419 = vmov %v418
          %v420 = vlaneseq
          %v421 = vshrl.u32 %v420, 7
          %v422 = vmov %v421
          %s423 = smov [#allocation23]
          %v424 = vlaneseq
          %v425 = vand.u32 %v424, 127
          %vm426 = vcmp.ge.s32.totalorder %v425, 0
          %vm427 = vcmp.lt.s32.totalorder %v425, 2
          %vm428 = vmand %vm426, %vm427
          %v429 = vld [vmem:[%s423] sm:$0x3]
          %v430 = vsel %vm428, %v429, 0.0
          %v431 = vmul.f32 %v430, %v430
          %vm434 = vcmp.eq.s32.totalorder %v422, %v419
          %v435 = vsel %vm434, 0.0, %v431
          %v436 = vadd.f32 %v415, %v435
          %v437 = vadd.f32 %v416, %v431
          %438 = vadd.xlane.f32.xlu0 %v437
          %v439 = vpop.xlane.xlu0 %438
          %v440 = vrot.slane %v439, 4
          %v441 = vadd.f32 %v439, %v440
          %v442 = vrot.slane %v441, 2
          %v443 = vadd.f32 %v441, %v442
          %v444 = vrot.slane %v443, 1
          %v445 = vadd.f32 %v443, %v444
          %446 = vadd.xlane.f32.xlu0 %v436
          %v447 = vpop.xlane.xlu0 %446
          %v448 = vrot.slane %v447, 4
          %v449 = vadd.f32 %v447, %v448
          %v450 = vrot.slane %v449, 2
          %v451 = vadd.f32 %v449, %v450
          %v452 = vrot.slane %v451, 1
          %v453 = vadd.f32 %v451, %v452
          %s454 = vtos %v453
          %s455 = vtos %v445
          %s456 = smul.f32 1e-10, %s455
          %p457 = scmp.le.f32.partialorder %s454, %s456
          %p458 = scmp.ge.s32.totalorder %s363, 15
          %p459 = por %p457, %p458
        $region143: #{custom-call.22} parent=139 // loop_header_branch
          %907 = sbr.rel (%p459) target = $region147
        $region144: #{custom-call.22} parent=139 // loop_body
          loop: start=0, step=1, limit=3
          $region148: #{custom-call.22} parent=144 // loop_pre_header
            _
          $region149: #{custom-call.22} parent=144 // loop_header
            %s461 = sphi 0, %s465
            %p462 = scmp.ge.s32.totalorder %s461, 3
          $region150: #{custom-call.22} parent=144 // loop_header_branch
            %464 = sbr.rel (%p462) target = $region154
          $region151: #{custom-call.22} parent=144 // loop_body
            #allocation24 [shape = 'f32[1024]{0}', space=vmem, size = 0x1000, scoped, tag = 'a_tl_diag vmem']
            #allocation25 [shape = 'f32[1024]{0}', space=vmem, size = 0x1000, scoped, tag = 'a_tr_diag vmem']
            #allocation26 [shape = 'f32[1024]{0}', space=vmem, size = 0x1000, scoped, tag = 'a_br_diag vmem']
            #allocation27 [shape = 'f32[1024]{0}', space=vmem, size = 0x1000, scoped, tag = 'rt1 vmem']
            #allocation28 [shape = 'f32[1024]{0}', space=vmem, size = 0x1000, scoped, tag = 'rt2 vmem']
            #allocation29 [shape = 'f32[1024]{0}', space=vmem, size = 0x1000, scoped, tag = 'c vmem']
            #allocation30 [shape = 'f32[1024]{0}', space=vmem, size = 0x1000, scoped, tag = 's vmem']
            #allocation31 [shape = 'f32[4096]{0}', space=vmem, size = 0x4000, scoped, tag = 'c broadcast']
            #allocation32 [shape = 'f32[4096]{0}', space=vmem, size = 0x4000, scoped, tag = 's broadcast']
            %s466 = smov [#allocation20]
            %s467 = smov [#allocation24]
            %v468 = vlaneseq
            %v469 = vand.u32 %v468, 127
            %v470 = vmov %v469
            %v471 = vlaneseq
            %v472 = vshrl.u32 %v471, 7
            %v473 = vmov %v472
            %v474 = vld [vmem:[%s466] sm:$0x3]
            %vm477 = vcmp.eq.s32.totalorder %v473, %v470
            %v478 = vsel %vm477, %v474, 0.0
            %v479 = vrot.slane %v478, 4
            %v480 = vadd.f32 %v478, %v479
            %v481 = vrot.slane %v480, 2
            %v482 = vadd.f32 %v480, %v481
            %v483 = vrot.slane %v482, 1
            %v484 = vadd.f32 %v482, %v483
            %485 = vst [vmem:[%s467] sm:$0x1] %v484
            %s486 = smov [#allocation21]
            %s487 = smov [#allocation25]
            %v488 = vlaneseq
            %v489 = vand.u32 %v488, 127
            %v490 = vmov %v489
            %v491 = vlaneseq
            %v492 = vshrl.u32 %v491, 7
            %v493 = vmov %v492
            %v494 = vld [vmem:[%s486] sm:$0x3]
            %vm497 = vcmp.eq.s32.totalorder %v493, %v490
            %v498 = vsel %vm497, %v494, 0.0
            %v499 = vrot.slane %v498, 4
            %v500 = vadd.f32 %v498, %v499
            %v501 = vrot.slane %v500, 2
            %v502 = vadd.f32 %v500, %v501
            %v503 = vrot.slane %v502, 1
            %v504 = vadd.f32 %v502, %v503
            %505 = vst [vmem:[%s487] sm:$0x1] %v504
            %s506 = smov [#allocation23]
            %s507 = smov [#allocation26]
            %v508 = vlaneseq
            %v509 = vand.u32 %v508, 127
            %v510 = vmov %v509
            %v511 = vlaneseq
            %v512 = vshrl.u32 %v511, 7
            %v513 = vmov %v512
            %v514 = vld [vmem:[%s506] sm:$0x3]
            %vm517 = vcmp.eq.s32.totalorder %v513, %v510
            %v518 = vsel %vm517, %v514, 0.0
            %v519 = vrot.slane %v518, 4
            %v520 = vadd.f32 %v518, %v519
            %v521 = vrot.slane %v520, 2
            %v522 = vadd.f32 %v520, %v521
            %v523 = vrot.slane %v522, 1
            %v524 = vadd.f32 %v522, %v523
            %525 = vst [vmem:[%s507] sm:$0x1] %v524
            %s526 = smov [#allocation29]
            %s527 = smov [#allocation30]
            %s528 = smov [#allocation24]
            %v529 = vld [vmem:[%s528] sm:$0xff]
            %s530 = smov [#allocation25]
            %v531 = vld [vmem:[%s530] sm:$0xff]
            %s532 = smov [#allocation26]
            %v533 = vld [vmem:[%s532] sm:$0xff]
            %v534 = vsub.f32 %v533, %v529
            %v535 = vmul.f32 2.0, %v531
            %v536 = vrcp.pop %v535
            %v537 = vmul.f32 %v534, %v536
            %vm538 = vcmp.ge.f32.partialorder %v537, 0.0
            %v539 = vmul.f32 %v537, %v537
            %v540 = vadd.f32 1.0, %v539
            %v541 = vrsqrt.pop %v540
            %v542 = vmul.f32 %v540, %v541
            %vm543 = vcmp.eq.f32.partialorder %v540, inf
            %v544 = vsel %vm543, %v540, %v542
            %vm545 = vcmp.eq.f32.partialorder %v540, 0.0
            %v546 = vand.u32 %v540, 2147483648
            %v547 = vsel %vm545, %v546, %v544
            %v548 = vxor.u32 %v547, 2147483648
            %v549 = vsel %vm538, %v547, %v548
            %v550 = vadd.f32 %v537, %v549
            %v551 = vrcp.pop %v550
            %v552 = vand.u32 2147483647, %v529
            %v553 = vand.u32 2147483647, %v531
            %v554 = vand.u32 2147483647, %v533
            %v555 = vmin.f32 %v552, %v554
            %v556 = vmul.f32 1.1920929e-08, %v555
            %vm557 = vcmp.le.f32.partialorder %v553, %v556
            %v558 = vsel %vm557, 0.0, %v551
            %v559 = vmul.f32 %v558, %v558
            %v560 = vadd.f32 1.0, %v559
            %v561 = vrsqrt.pop %v560
            %v562 = vmul.f32 %v558, %v561
            %v563 = vmul.f32 %v558, %v531
            %v564 = vsub.f32 %v529, %v563
            %v565 = vmul.f32 %v558, %v531
            %v566 = vadd.f32 %v533, %v565
            %s567 = smov [#allocation27]
            %568 = vst [vmem:[%s567] sm:$0xff] %v564
            %s569 = smov [#allocation28]
            %570 = vst [vmem:[%s569] sm:$0xff] %v566
            %s571 = smov %s526
            %572 = vst [vmem:[%s571] sm:$0xff] %v561
            %s573 = smov %s527
            %574 = vst [vmem:[%s573] sm:$0xff] %v562
            %s575 = smov [#allocation29]
            %v576 = vld [vmem:[%s575] ss:$0 sm:$0xff]
            %v577 = vlaneseq
            %v578 = vand.u32 %v577, 127
            %v579 = vmov %v578
            %v580 = vlaneseq
            %v581 = vshrl.u32 %v580, 7
            %v582 = vmov %v581
            %vm584 = vcmp.eq.s32.totalorder %v582, %v579
            %v585 = vsel %vm584, %v576, 0.0
            %586 = vadd.xlane.f32.xlu0 %v585
            %v587 = vpop.xlane.xlu0 %586
            %s588 = smov [#allocation31]
            %589 = vst [vmem:[%s588] sm:$0xff] %v587
            %s590 = smov [#allocation30]
            %v591 = vld [vmem:[%s590] ss:$0 sm:$0xff]
            %v592 = vlaneseq
            %v593 = vand.u32 %v592, 127
            %v594 = vmov %v593
            %v595 = vlaneseq
            %v596 = vshrl.u32 %v595, 7
            %v597 = vmov %v596
            %vm599 = vcmp.eq.s32.totalorder %v597, %v594
            %v600 = vsel %vm599, %v591, 0.0
            %601 = vadd.xlane.f32.xlu0 %v600
            %v602 = vpop.xlane.xlu0 %601
            %s603 = smov [#allocation32]
            %604 = vst [vmem:[%s603] sm:$0xff] %v602
            %s605 = smov [#allocation31]
            %v606 = vld [vmem:[%s605] sm:$0xff]
            %s607 = smov [#allocation32]
            %v608 = vld [vmem:[%s607] sm:$0xff]
            %s609 = smov [#allocation20]
            %s610 = smov [#allocation21]
            %s611 = smov [#allocation22]
            %s612 = smov [#allocation23]
            %v613 = vld [vmem:[%s609] sm:$0x3]
            %v614 = vld [vmem:[%s610] sm:$0x3]
            %v615 = vld [vmem:[%s611] sm:$0x3]
            %v616 = vld [vmem:[%s612] sm:$0x3]
            %v617 = vmul.f32 %v606, %v613
            %v618 = vmul.f32 %v608, %v615
            %v619 = vsub.f32 %v617, %v618
            %v620 = vmul.f32 %v606, %v614
            %v621 = vmul.f32 %v608, %v616
            %v622 = vsub.f32 %v620, %v621
            %v623 = vmul.f32 %v608, %v613
            %v624 = vmul.f32 %v606, %v615
            %v625 = vadd.f32 %v623, %v624
            %v626 = vmul.f32 %v608, %v614
            %v627 = vmul.f32 %v606, %v616
            %v628 = vadd.f32 %v626, %v627
            %629 = vst [vmem:[%s609] sm:$0x3] %v619
            %630 = vst [vmem:[%s610] sm:$0x3] %v622
            %631 = vst [vmem:[%s611] sm:$0x3] %v625
            %632 = vst [vmem:[%s612] sm:$0x3] %v628
            %s633 = smov [#allocation29]
            %v634 = vld [vmem:[%s633] ss:$0 sm:$0xff]
            %s635 = smov [#allocation30]
            %v636 = vld [vmem:[%s635] ss:$0 sm:$0xff]
            %s637 = smov [#allocation20]
            %s638 = smov [#allocation21]
            %s639 = smov [#allocation22]
            %s640 = smov [#allocation23]
            %v641 = vld [vmem:[%s637] sm:$0x3]
            %v642 = vld [vmem:[%s638] sm:$0x3]
            %v643 = vld [vmem:[%s639] sm:$0x3]
            %v644 = vld [vmem:[%s640] sm:$0x3]
            %v645 = vmul.f32 %v634, %v641
            %v646 = vmul.f32 %v636, %v642
            %v647 = vsub.f32 %v645, %v646
            %v648 = vmul.f32 %v636, %v641
            %v649 = vmul.f32 %v634, %v642
            %v650 = vadd.f32 %v648, %v649
            %v651 = vmul.f32 %v634, %v643
            %v652 = vmul.f32 %v636, %v644
            %v653 = vsub.f32 %v651, %v652
            %v654 = vmul.f32 %v636, %v643
            %v655 = vmul.f32 %v634, %v644
            %v656 = vadd.f32 %v654, %v655
            %657 = vst [vmem:[%s637] sm:$0x3] %v647
            %658 = vst [vmem:[%s638] sm:$0x3] %v650
            %659 = vst [vmem:[%s639] sm:$0x3] %v653
            %660 = vst [vmem:[%s640] sm:$0x3] %v656
            %s661 = smov [#allocation20]
            %s662 = smov [#allocation27]
            %v663 = vlaneseq
            %v664 = vand.u32 %v663, 127
            %v665 = vmov %v664
            %v666 = vlaneseq
            %v667 = vshrl.u32 %v666, 7
            %v668 = vmov %v667
            %v669 = vld [vmem:[%s662] ss:$0 sm:$0xff]
            %v670 = vld [vmem:[%s661] sm:$0x3]
            %vm673 = vcmp.eq.s32.totalorder %v668, %v665
            %v674 = vsel %vm673, %v669, %v670
            %675 = vst [vmem:[%s661] sm:$0x3] %v674
            %s676 = smov [#allocation21]
            %v677 = vlaneseq
            %v678 = vand.u32 %v677, 127
            %v679 = vmov %v678
            %v680 = vlaneseq
            %v681 = vshrl.u32 %v680, 7
            %v682 = vmov %v681
            %v683 = vld [vmem:[%s676] sm:$0x3]
            %vm686 = vcmp.eq.s32.totalorder %v682, %v679
            %v687 = vsel %vm686, 0.0, %v683
            %688 = vst [vmem:[%s676] sm:$0x3] %v687
            %s689 = smov [#allocation22]
            %v690 = vlaneseq
            %v691 = vand.u32 %v690, 127
            %v692 = vmov %v691
            %v693 = vlaneseq
            %v694 = vshrl.u32 %v693, 7
            %v695 = vmov %v694
            %v696 = vld [vmem:[%s689] sm:$0x3]
            %vm699 = vcmp.eq.s32.totalorder %v695, %v692
            %v700 = vsel %vm699, 0.0, %v696
            %701 = vst [vmem:[%s689] sm:$0x3] %v700
            %s702 = smov [#allocation23]
            %s703 = smov [#allocation28]
            %v704 = vlaneseq
            %v705 = vand.u32 %v704, 127
            %v706 = vmov %v705
            %v707 = vlaneseq
            %v708 = vshrl.u32 %v707, 7
            %v709 = vmov %v708
            %v710 = vld [vmem:[%s703] ss:$0 sm:$0xff]
            %v711 = vld [vmem:[%s702] sm:$0x3]
            %vm714 = vcmp.eq.s32.totalorder %v709, %v706
            %v715 = vsel %vm714, %v710, %v711
            %716 = vst [vmem:[%s702] sm:$0x3] %v715
            %s717 = smov [#allocation20]
            %s718 = smov [#allocation21]
            %v719 = vld [vmem:[%s718] sm:$0x3]
            %720 = vrot.lane.b32.xlu0 %v719, 1
            %v721 = vpop.permute.xlu0 %720
            %v722 = vld [vmem:[%s717] sm:$0x3]
            %v723 = vld [vmem:[%s717] sm:$0x3]
            %724 = vrot.lane.b32.xlu0 %v723, 1
            %v725 = vpop.permute.xlu0 %724
            %v726 = vlaneseq
            %v727 = vand.u32 %v726, 127
            %vm728 = vcmp.eq.s32.totalorder %v727, 0
            %v729 = vsel %vm728, %v723, %v725
            %v730 = vlaneseq
            %v731 = vand.u32 %v730, 127
            %vm732 = vcmp.eq.s32.totalorder %v731, 1
            %v733 = vsel %vm732, %v721, %v729
            %v734 = vlaneseq
            %v735 = vand.u32 %v734, 127
            %vm736 = vcmp.ge.s32.totalorder %v735, 0
            %vm737 = vcmp.lt.s32.totalorder %v735, 2
            %vm738 = vmand %vm736, %vm737
            %v739 = vsel %vm738, %v733, 0.0
            %v740 = vld [vmem:[%s718] sm:$0x3]
            %741 = vrot.lane.b32.xlu0 %v740, 127
            %v742 = vpop.permute.xlu0 %741
            %v743 = vlaneseq
            %v744 = vand.u32 %v743, 127
            %vm745 = vcmp.eq.s32.totalorder %v744, 1
            %v746 = vsel %vm745, %v722, %v742
            %747 = vst [vmem:[%s717] sm:$0x3] %v739
            %748 = vst [vmem:[%s718] sm:$0x3] %v746
            %s749 = smov [#allocation22]
            %s750 = smov [#allocation23]
            %v751 = vld [vmem:[%s750] sm:$0x3]
            %752 = vrot.lane.b32.xlu0 %v751, 1
            %v753 = vpop.permute.xlu0 %752
            %v754 = vld [vmem:[%s749] sm:$0x3]
            %v755 = vld [vmem:[%s749] sm:$0x3]
            %756 = vrot.lane.b32.xlu0 %v755, 1
            %v757 = vpop.permute.xlu0 %756
            %v758 = vlaneseq
            %v759 = vand.u32 %v758, 127
            %vm760 = vcmp.eq.s32.totalorder %v759, 0
            %v761 = vsel %vm760, %v755, %v757
            %v762 = vlaneseq
            %v763 = vand.u32 %v762, 127
            %vm764 = vcmp.eq.s32.totalorder %v763, 1
            %v765 = vsel %vm764, %v753, %v761
            %v766 = vlaneseq
            %v767 = vand.u32 %v766, 127
            %vm768 = vcmp.ge.s32.totalorder %v767, 0
            %vm769 = vcmp.lt.s32.totalorder %v767, 2
            %vm770 = vmand %vm768, %vm769
            %v771 = vsel %vm770, %v765, 0.0
            %v772 = vld [vmem:[%s750] sm:$0x3]
            %773 = vrot.lane.b32.xlu0 %v772, 127
            %v774 = vpop.permute.xlu0 %773
            %v775 = vlaneseq
            %v776 = vand.u32 %v775, 127
            %vm777 = vcmp.eq.s32.totalorder %v776, 1
            %v778 = vsel %vm777, %v754, %v774
            %779 = vst [vmem:[%s749] sm:$0x3] %v771
            %780 = vst [vmem:[%s750] sm:$0x3] %v778
            %s781 = smov [#allocation20]
            %s782 = smov [#allocation22]
            %v783 = vld [vmem:[%s781] ss:$0 sm:$0xff]
            %s785 = scalar_lea.vmem %s781, 4294967295
            %v786 = vld [vmem:[%s785] sm:$0x2]
            %v787 = vlaneseq
            %v788 = vshrl.u32 %v787, 7
            %vm789 = vcmp.eq.s32.totalorder %v788, 0
            %v790 = vsel %vm789, %v783, %v786
            %s791 = scalar_lea.vmem %s781, 1
            %v792 = vld [vmem:[%s791] ss:$0 sm:$0xff]
            %793 = vst [vmem:[%s781] sm:$0x3] %v790
            %v794 = vld [vmem:[%s782] ss:$0 sm:$0xff]
            %s795 = scalar_lea.vmem %s781, 1
            %796 = vst [vmem:[%s795] sm:$0x1] %v794
            %s797 = scalar_lea.vmem %s782, 1
            %v798 = vld [vmem:[%s797] sm:$0x1]
            %v799 = vlaneseq
            %v800 = vshrl.u32 %v799, 7
            %vm801 = vcmp.eq.s32.totalorder %v800, 1
            %v802 = vsel %vm801, %v792, %v798
            %v803 = vld [vmem:[%s782] ss:$0 sm:$0xff]
            %804 = vst [vmem:[%s782] sm:$0x3] %v802
            %s805 = smov [#allocation21]
            %s806 = smov [#allocation23]
            %v807 = vld [vmem:[%s805] ss:$0 sm:$0xff]
            %s809 = scalar_lea.vmem %s805, 4294967295
            %v810 = vld [vmem:[%s809] sm:$0x2]
            %v811 = vlaneseq
            %v812 = vshrl.u32 %v811, 7
            %vm813 = vcmp.eq.s32.totalorder %v812, 0
            %v814 = vsel %vm813, %v807, %v810
            %s815 = scalar_lea.vmem %s805, 1
            %v816 = vld [vmem:[%s815] ss:$0 sm:$0xff]
            %817 = vst [vmem:[%s805] sm:$0x3] %v814
            %v818 = vld [vmem:[%s806] ss:$0 sm:$0xff]
            %s819 = scalar_lea.vmem %s805, 1
            %820 = vst [vmem:[%s819] sm:$0x1] %v818
            %s821 = scalar_lea.vmem %s806, 1
            %v822 = vld [vmem:[%s821] sm:$0x1]
            %v823 = vlaneseq
            %v824 = vshrl.u32 %v823, 7
            %vm825 = vcmp.eq.s32.totalorder %v824, 1
            %v826 = vsel %vm825, %v816, %v822
            %v827 = vld [vmem:[%s806] ss:$0 sm:$0xff]
            %828 = vst [vmem:[%s806] sm:$0x3] %v826
            %s829 = smov [#allocation31]
            %v830 = vld [vmem:[%s829] sm:$0xff]
            %s831 = smov [#allocation32]
            %v832 = vld [vmem:[%s831] sm:$0xff]
            %s833 = smov [#allocation12]
            %s834 = smov [#allocation14]
            %s835 = smov [#allocation16]
            %s836 = smov [#allocation18]
            %v837 = vld [vmem:[%s833] sm:$0x3]
            %v838 = vld [vmem:[%s834] sm:$0x3]
            %v839 = vld [vmem:[%s835] sm:$0x3]
            %v840 = vld [vmem:[%s836] sm:$0x3]
            %v841 = vmul.f32 %v830, %v837
            %v842 = vmul.f32 %v832, %v839
            %v843 = vsub.f32 %v841, %v842
            %v844 = vmul.f32 %v830, %v838
            %v845 = vmul.f32 %v832, %v840
            %v846 = vsub.f32 %v844, %v845
            %v847 = vmul.f32 %v832, %v837
            %v848 = vmul.f32 %v830, %v839
            %v849 = vadd.f32 %v847, %v848
            %v850 = vmul.f32 %v832, %v838
            %v851 = vmul.f32 %v830, %v840
            %v852 = vadd.f32 %v850, %v851
            %853 = vst [vmem:[%s833] sm:$0x3] %v843
            %854 = vst [vmem:[%s834] sm:$0x3] %v846
            %855 = vst [vmem:[%s835] sm:$0x3] %v849
            %856 = vst [vmem:[%s836] sm:$0x3] %v852
            %s857 = smov [#allocation12]
            %s858 = smov [#allocation16]
            %v859 = vld [vmem:[%s857] ss:$0 sm:$0xff]
            %s861 = scalar_lea.vmem %s857, 4294967295
            %v862 = vld [vmem:[%s861] sm:$0x2]
            %v863 = vlaneseq
            %v864 = vshrl.u32 %v863, 7
            %vm865 = vcmp.eq.s32.totalorder %v864, 0
            %v866 = vsel %vm865, %v859, %v862
            %s867 = scalar_lea.vmem %s857, 1
            %v868 = vld [vmem:[%s867] ss:$0 sm:$0xff]
            %869 = vst [vmem:[%s857] sm:$0x3] %v866
            %v870 = vld [vmem:[%s858] ss:$0 sm:$0xff]
            %s871 = scalar_lea.vmem %s857, 1
            %872 = vst [vmem:[%s871] sm:$0x1] %v870
            %s873 = scalar_lea.vmem %s858, 1
            %v874 = vld [vmem:[%s873] sm:$0x1]
            %v875 = vlaneseq
            %v876 = vshrl.u32 %v875, 7
            %vm877 = vcmp.eq.s32.totalorder %v876, 1
            %v878 = vsel %vm877, %v868, %v874
            %v879 = vld [vmem:[%s858] ss:$0 sm:$0xff]
            %880 = vst [vmem:[%s858] sm:$0x3] %v878
            %s881 = smov [#allocation14]
            %s882 = smov [#allocation18]
            %v883 = vld [vmem:[%s881] ss:$0 sm:$0xff]
            %s885 = scalar_lea.vmem %s881, 4294967295
            %v886 = vld [vmem:[%s885] sm:$0x2]
            %v887 = vlaneseq
            %v888 = vshrl.u32 %v887, 7
            %vm889 = vcmp.eq.s32.totalorder %v888, 0
            %v890 = vsel %vm889, %v883, %v886
            %s891 = scalar_lea.vmem %s881, 1
            %v892 = vld [vmem:[%s891] ss:$0 sm:$0xff]
            %893 = vst [vmem:[%s881] sm:$0x3] %v890
            %v894 = vld [vmem:[%s882] ss:$0 sm:$0xff]
            %s895 = scalar_lea.vmem %s881, 1
            %896 = vst [vmem:[%s895] sm:$0x1] %v894
            %s897 = scalar_lea.vmem %s882, 1
            %v898 = vld [vmem:[%s897] sm:$0x1]
            %v899 = vlaneseq
            %v900 = vshrl.u32 %v899, 7
            %vm901 = vcmp.eq.s32.totalorder %v900, 1
            %v902 = vsel %vm901, %v892, %v898
            %v903 = vld [vmem:[%s882] ss:$0 sm:$0xff]
            %904 = vst [vmem:[%s882] sm:$0x3] %v902
          $region152: #{custom-call.22} parent=144 // loop_footer
            %s465 = sadd.s32 1, %s461
          $region153: #{custom-call.22} parent=144 // loop_footer_branch
            %460 = sbr.rel target = $region149
          $region154: #{custom-call.22} parent=144 // loop_exit
            _
          %s905 = sadd.s32 %s363, 1
        $region145: #{custom-call.22} parent=139 // loop_footer
          _
        $region146: #{custom-call.22} parent=139 // loop_footer_branch
          %362 = sbr.rel target = $region142
        $region147: #{custom-call.22} parent=139 // loop_exit
          _
        %s908 = sand.u32 %s17, 7
        %s909 = scalar_lea.vmem [#allocation8], %s908
        %s910 = sand.u32 %s17, 7
        %s911 = scalar_lea.vmem [#allocation10], %s910
        %s912 = smov [#allocation20]
        %s913 = smov %s909
        %v914 = vlaneseq
        %v915 = vand.u32 %v914, 127
        %v916 = vmov %v915
        %v917 = vlaneseq
        %v918 = vshrl.u32 %v917, 7
        %v919 = vmov %v918
        %v920 = vld [vmem:[%s912] sm:$0x3]
        %vm923 = vcmp.eq.s32.totalorder %v919, %v916
        %v924 = vsel %vm923, %v920, 0.0
        %v925 = vrot.slane %v924, 4
        %v926 = vadd.f32 %v924, %v925
        %v927 = vrot.slane %v926, 2
        %v928 = vadd.f32 %v926, %v927
        %v929 = vrot.slane %v928, 1
        %v930 = vadd.f32 %v928, %v929
        %931 = vst [vmem:[%s913] sm:$0x1] %v930
        %s932 = smov [#allocation23]
        %s933 = smov %s911
        %v934 = vlaneseq
        %v935 = vand.u32 %v934, 127
        %v936 = vmov %v935
        %v937 = vlaneseq
        %v938 = vshrl.u32 %v937, 7
        %v939 = vmov %v938
        %v940 = vld [vmem:[%s932] sm:$0x3]
        %vm943 = vcmp.eq.s32.totalorder %v939, %v936
        %v944 = vsel %vm943, %v940, 0.0
        %v945 = vrot.slane %v944, 4
        %v946 = vadd.f32 %v944, %v945
        %v947 = vrot.slane %v946, 2
        %v948 = vadd.f32 %v946, %v947
        %v949 = vrot.slane %v948, 1
        %v950 = vadd.f32 %v948, %v949
        %951 = vst [vmem:[%s933] sm:$0x1] %v950
        %s953 = sshllo.u32 0, 2
        %v955 = vld [vmem:[#allocation8] sm:%s953]
        %s956 = sshllo.u32 0, 2
        %957 = vst [vmem:[%s279] sm:%s956] %v955
        %s959 = sshllo.u32 0, 2
        %v961 = vld [vmem:[#allocation10] sm:%s959]
        %s962 = sshllo.u32 0, 2
        %963 = vst [vmem:[%s285] sm:%s962] %v961
        %s965 = sshllo.u32 0, 2
        %v967 = vld [vmem:[#allocation12] sm:%s965]
        %s968 = sshllo.u32 0, 2
        %969 = vst [vmem:[%s289] sm:%s968] %v967
        %s971 = sshllo.u32 0, 2
        %v973 = vld [vmem:[#allocation14] sm:%s971]
        %s974 = sshllo.u32 0, 2
        %975 = vst [vmem:[%s293] sm:%s974] %v973
        %s977 = sshllo.u32 0, 2
        %v979 = vld [vmem:[#allocation16] sm:%s977]
        %s980 = sshllo.u32 0, 2
        %981 = vst [vmem:[%s297] sm:%s980] %v979
        %s983 = sshllo.u32 0, 2
        %v985 = vld [vmem:[#allocation18] sm:%s983]
        %s986 = sshllo.u32 0, 2
        %987 = vst [vmem:[%s301] sm:%s986] %v985
        %s988 = sand.u32 %s27, 1
        %s989 = sand.u32 %s27, 1
        %s990 = smul.addr %s989, 2
        %s991 = scalar_lea.vmem [#allocation9], %s990
        %s992 = sand.u32 %s55, 1
        %s993 = sand.u32 %s55, 1
        %s994 = smul.addr %s993, 2
        %s995 = scalar_lea.vmem [#allocation11], %s994
        %s996 = sand.u32 %s17, 1
        %s997 = sand.u32 %s17, 1
        %s998 = smul.addr %s997, 2
        %s999 = scalar_lea.vmem [#allocation13], %s998
        %s1000 = sand.u32 %s17, 1
        %s1001 = sand.u32 %s17, 1
        %s1002 = smul.addr %s1001, 2
        %s1003 = scalar_lea.vmem [#allocation15], %s1002
        %s1004 = sand.u32 %s17, 1
        %s1005 = sand.u32 %s17, 1
        %s1006 = smul.addr %s1005, 2
        %s1007 = scalar_lea.vmem [#allocation17], %s1006
        %s1008 = sand.u32 %s17, 1
        %s1009 = sand.u32 %s17, 1
        %s1010 = smul.addr %s1009, 2
        %s1011 = scalar_lea.vmem [#allocation19], %s1010
        // Predicated region
        $region155: #{custom-call.22} parent=139 // pred_check
          %p1012 = pneg %p37
        $region156: #{custom-call.22} parent=139 // pred_check_branch
          %1014 = sbr.rel (%p1012) target = $region158
        $region157: #{custom-call.22} parent=139 // pred_region
          %s1015 = sshrl.u32 %s17, 3
          %s1016 = smul.addr %s1015, 2
          %s1017 = scalar_lea.vmem %s4, %s1016
          // Predicated region
          $region159: #{custom-call.22} parent=157 // pred_check
            _
          $region160: #{custom-call.22} parent=157 // pred_check_branch
            %1019 = sbr.rel (0) target = $region162
          $region161: #{custom-call.22} parent=157 // pred_region
            // Predicated region
            $region163: #{custom-call.22} parent=161 // pred_check
              _
            $region164: #{custom-call.22} parent=161 // pred_check_branch
              %1021 = sbr.rel target = $region166
            $region165: #{custom-call.22} parent=161 // pred_region
              // Predicated region
              $region178: #{custom-call.22} parent=165 // pred_check
                _
              $region179: #{custom-call.22} parent=165 // pred_check_branch
                %1036 = sbr.rel (0) target = $region181
              $region180: #{custom-call.22} parent=165 // pred_region
                loop: start=0, step=1, limit=1
                $region182: #{custom-call.22} parent=180 // loop_pre_header
                  _
                $region183: #{custom-call.22} parent=180 // loop_header
                  %s1039 = sphi 0, %s1043
                  %p1040 = scmp.ge.s32.totalorder %s1039, 1
                  %s1044 = sphi %s991, %s991
                  %s1045 = sphi %s1017, %s1017
                $region184: #{custom-call.22} parent=180 // loop_header_branch
                  %1042 = sbr.rel (%p1040) target = $region188
                $region185: #{custom-call.22} parent=180 // loop_body
                  %v1046 = vld [vmem:[%s1044] sm:$0x3]
                  %1047 = vst [vmem:[%s1045] sm:$0x3] %v1046
                $region186: #{custom-call.22} parent=180 // loop_footer
                  %s1043 = sadd.s32 1, %s1039
                $region187: #{custom-call.22} parent=180 // loop_footer_branch
                  %1038 = sbr.rel target = $region183
                $region188: #{custom-call.22} parent=180 // loop_exit
                  _
              $region181: #{custom-call.22} parent=165 // pred_fallthru
                _
            $region166: #{custom-call.22} parent=161 // pred_fallthru
              _
            // Predicated region
            $region167: #{custom-call.22} parent=161 // pred_check
              _
            $region168: #{custom-call.22} parent=161 // pred_check_branch
              %1023 = sbr.rel (0) target = $region170
            $region169: #{custom-call.22} parent=161 // pred_region
              loop: start=0, step=1, limit=1
              $region171: #{custom-call.22} parent=169 // loop_pre_header
                _
              $region172: #{custom-call.22} parent=169 // loop_header
                %s1026 = sphi 0, %s1030
                %p1027 = scmp.ge.s32.totalorder %s1026, 1
                %s1031 = sphi %s991, %s991
                %s1032 = sphi %s1017, %s1017
              $region173: #{custom-call.22} parent=169 // loop_header_branch
                %1029 = sbr.rel (%p1027) target = $region177
              $region174: #{custom-call.22} parent=169 // loop_body
                %v1033 = vld [vmem:[%s1031] sm:$0x3]
                %1034 = vst [vmem:[%s1032] sm:$0x3] %v1033
              $region175: #{custom-call.22} parent=169 // loop_footer
                %s1030 = sadd.s32 1, %s1026
              $region176: #{custom-call.22} parent=169 // loop_footer_branch
                %1025 = sbr.rel target = $region172
              $region177: #{custom-call.22} parent=169 // loop_exit
                _
            $region170: #{custom-call.22} parent=161 // pred_fallthru
              _
          $region162: #{custom-call.22} parent=157 // pred_fallthru
            _
          %1048 = vnop
        $region158: #{custom-call.22} parent=139 // pred_fallthru
          _
        // Predicated region
        $region189: #{custom-call.22} parent=139 // pred_check
          %p1049 = pneg %p65
        $region190: #{custom-call.22} parent=139 // pred_check_branch
          %1051 = sbr.rel (%p1049) target = $region192
        $region191: #{custom-call.22} parent=139 // pred_region
          %s1052 = sshrl.u32 %s17, 3
          %s1053 = smul.addr %s1052, 2
          %s1054 = scalar_lea.vmem %s5, %s1053
          // Predicated region
          $region193: #{custom-call.22} parent=191 // pred_check
            _
          $region194: #{custom-call.22} parent=191 // pred_check_branch
            %1056 = sbr.rel (0) target = $region196
          $region195: #{custom-call.22} parent=191 // pred_region
            // Predicated region
            $region197: #{custom-call.22} parent=195 // pred_check
              _
            $region198: #{custom-call.22} parent=195 // pred_check_branch
              %1058 = sbr.rel target = $region200
            $region199: #{custom-call.22} parent=195 // pred_region
              // Predicated region
              $region212: #{custom-call.22} parent=199 // pred_check
                _
              $region213: #{custom-call.22} parent=199 // pred_check_branch
                %1073 = sbr.rel (0) target = $region215
              $region214: #{custom-call.22} parent=199 // pred_region
                loop: start=0, step=1, limit=1
                $region216: #{custom-call.22} parent=214 // loop_pre_header
                  _
                $region217: #{custom-call.22} parent=214 // loop_header
                  %s1076 = sphi 0, %s1080
                  %p1077 = scmp.ge.s32.totalorder %s1076, 1
                  %s1081 = sphi %s995, %s995
                  %s1082 = sphi %s1054, %s1054
                $region218: #{custom-call.22} parent=214 // loop_header_branch
                  %1079 = sbr.rel (%p1077) target = $region222
                $region219: #{custom-call.22} parent=214 // loop_body
                  %v1083 = vld [vmem:[%s1081] sm:$0x3]
                  %1084 = vst [vmem:[%s1082] sm:$0x3] %v1083
                $region220: #{custom-call.22} parent=214 // loop_footer
                  %s1080 = sadd.s32 1, %s1076
                $region221: #{custom-call.22} parent=214 // loop_footer_branch
                  %1075 = sbr.rel target = $region217
                $region222: #{custom-call.22} parent=214 // loop_exit
                  _
              $region215: #{custom-call.22} parent=199 // pred_fallthru
                _
            $region200: #{custom-call.22} parent=195 // pred_fallthru
              _
            // Predicated region
            $region201: #{custom-call.22} parent=195 // pred_check
              _
            $region202: #{custom-call.22} parent=195 // pred_check_branch
              %1060 = sbr.rel (0) target = $region204
            $region203: #{custom-call.22} parent=195 // pred_region
              loop: start=0, step=1, limit=1
              $region205: #{custom-call.22} parent=203 // loop_pre_header
                _
              $region206: #{custom-call.22} parent=203 // loop_header
                %s1063 = sphi 0, %s1067
                %p1064 = scmp.ge.s32.totalorder %s1063, 1
                %s1068 = sphi %s995, %s995
                %s1069 = sphi %s1054, %s1054
              $region207: #{custom-call.22} parent=203 // loop_header_branch
                %1066 = sbr.rel (%p1064) target = $region211
              $region208: #{custom-call.22} parent=203 // loop_body
                %v1070 = vld [vmem:[%s1068] sm:$0x3]
                %1071 = vst [vmem:[%s1069] sm:$0x3] %v1070
              $region209: #{custom-call.22} parent=203 // loop_footer
                %s1067 = sadd.s32 1, %s1063
              $region210: #{custom-call.22} parent=203 // loop_footer_branch
                %1062 = sbr.rel target = $region206
              $region211: #{custom-call.22} parent=203 // loop_exit
                _
            $region204: #{custom-call.22} parent=195 // pred_fallthru
              _
          $region196: #{custom-call.22} parent=191 // pred_fallthru
            _
          %1085 = vnop
        $region192: #{custom-call.22} parent=139 // pred_fallthru
          _
        %s1086 = smul.addr %s17, 2
        %s1087 = scalar_lea.vmem %s6, %s1086
        // Predicated region
        $region223: #{custom-call.22} parent=139 // pred_check
          _
        $region224: #{custom-call.22} parent=139 // pred_check_branch
          %1089 = sbr.rel (0) target = $region226
        $region225: #{custom-call.22} parent=139 // pred_region
          // Predicated region
          $region227: #{custom-call.22} parent=225 // pred_check
            _
          $region228: #{custom-call.22} parent=225 // pred_check_branch
            %1091 = sbr.rel target = $region230
          $region229: #{custom-call.22} parent=225 // pred_region
            // Predicated region
            $region242: #{custom-call.22} parent=229 // pred_check
              _
            $region243: #{custom-call.22} parent=229 // pred_check_branch
              %1106 = sbr.rel (0) target = $region245
            $region244: #{custom-call.22} parent=229 // pred_region
              loop: start=0, step=1, limit=1
              $region246: #{custom-call.22} parent=244 // loop_pre_header
                _
              $region247: #{custom-call.22} parent=244 // loop_header
                %s1109 = sphi 0, %s1113
                %p1110 = scmp.ge.s32.totalorder %s1109, 1
                %s1114 = sphi %s999, %s999
                %s1115 = sphi %s1087, %s1087
              $region248: #{custom-call.22} parent=244 // loop_header_branch
                %1112 = sbr.rel (%p1110) target = $region252
              $region249: #{custom-call.22} parent=244 // loop_body
                %v1116 = vld [vmem:[%s1114] sm:$0x3]
                %1117 = vst [vmem:[%s1115] sm:$0x3] %v1116
              $region250: #{custom-call.22} parent=244 // loop_footer
                %s1113 = sadd.s32 1, %s1109
              $region251: #{custom-call.22} parent=244 // loop_footer_branch
                %1108 = sbr.rel target = $region247
              $region252: #{custom-call.22} parent=244 // loop_exit
                _
            $region245: #{custom-call.22} parent=229 // pred_fallthru
              _
          $region230: #{custom-call.22} parent=225 // pred_fallthru
            _
          // Predicated region
          $region231: #{custom-call.22} parent=225 // pred_check
            _
          $region232: #{custom-call.22} parent=225 // pred_check_branch
            %1093 = sbr.rel (0) target = $region234
          $region233: #{custom-call.22} parent=225 // pred_region
            loop: start=0, step=1, limit=1
            $region235: #{custom-call.22} parent=233 // loop_pre_header
              _
            $region236: #{custom-call.22} parent=233 // loop_header
              %s1096 = sphi 0, %s1100
              %p1097 = scmp.ge.s32.totalorder %s1096, 1
              %s1101 = sphi %s999, %s999
              %s1102 = sphi %s1087, %s1087
            $region237: #{custom-call.22} parent=233 // loop_header_branch
              %1099 = sbr.rel (%p1097) target = $region241
            $region238: #{custom-call.22} parent=233 // loop_body
              %v1103 = vld [vmem:[%s1101] sm:$0x3]
              %1104 = vst [vmem:[%s1102] sm:$0x3] %v1103
            $region239: #{custom-call.22} parent=233 // loop_footer
              %s1100 = sadd.s32 1, %s1096
            $region240: #{custom-call.22} parent=233 // loop_footer_branch
              %1095 = sbr.rel target = $region236
            $region241: #{custom-call.22} parent=233 // loop_exit
              _
          $region234: #{custom-call.22} parent=225 // pred_fallthru
            _
        $region226: #{custom-call.22} parent=139 // pred_fallthru
          _
        %1118 = vnop
        %s1119 = smul.addr %s17, 2
        %s1120 = scalar_lea.vmem %s7, %s1119
        // Predicated region
        $region253: #{custom-call.22} parent=139 // pred_check
          _
        $region254: #{custom-call.22} parent=139 // pred_check_branch
          %1122 = sbr.rel (0) target = $region256
        $region255: #{custom-call.22} parent=139 // pred_region
          // Predicated region
          $region257: #{custom-call.22} parent=255 // pred_check
            _
          $region258: #{custom-call.22} parent=255 // pred_check_branch
            %1124 = sbr.rel target = $region260
          $region259: #{custom-call.22} parent=255 // pred_region
            // Predicated region
            $region272: #{custom-call.22} parent=259 // pred_check
              _
            $region273: #{custom-call.22} parent=259 // pred_check_branch
              %1139 = sbr.rel (0) target = $region275
            $region274: #{custom-call.22} parent=259 // pred_region
              loop: start=0, step=1, limit=1
              $region276: #{custom-call.22} parent=274 // loop_pre_header
                _
              $region277: #{custom-call.22} parent=274 // loop_header
                %s1142 = sphi 0, %s1146
                %p1143 = scmp.ge.s32.totalorder %s1142, 1
                %s1147 = sphi %s1003, %s1003
                %s1148 = sphi %s1120, %s1120
              $region278: #{custom-call.22} parent=274 // loop_header_branch
                %1145 = sbr.rel (%p1143) target = $region282
              $region279: #{custom-call.22} parent=274 // loop_body
                %v1149 = vld [vmem:[%s1147] sm:$0x3]
                %1150 = vst [vmem:[%s1148] sm:$0x3] %v1149
              $region280: #{custom-call.22} parent=274 // loop_footer
                %s1146 = sadd.s32 1, %s1142
              $region281: #{custom-call.22} parent=274 // loop_footer_branch
                %1141 = sbr.rel target = $region277
              $region282: #{custom-call.22} parent=274 // loop_exit
                _
            $region275: #{custom-call.22} parent=259 // pred_fallthru
              _
          $region260: #{custom-call.22} parent=255 // pred_fallthru
            _
          // Predicated region
          $region261: #{custom-call.22} parent=255 // pred_check
            _
          $region262: #{custom-call.22} parent=255 // pred_check_branch
            %1126 = sbr.rel (0) target = $region264
          $region263: #{custom-call.22} parent=255 // pred_region
            loop: start=0, step=1, limit=1
            $region265: #{custom-call.22} parent=263 // loop_pre_header
              _
            $region266: #{custom-call.22} parent=263 // loop_header
              %s1129 = sphi 0, %s1133
              %p1130 = scmp.ge.s32.totalorder %s1129, 1
              %s1134 = sphi %s1003, %s1003
              %s1135 = sphi %s1120, %s1120
            $region267: #{custom-call.22} parent=263 // loop_header_branch
              %1132 = sbr.rel (%p1130) target = $region271
            $region268: #{custom-call.22} parent=263 // loop_body
              %v1136 = vld [vmem:[%s1134] sm:$0x3]
              %1137 = vst [vmem:[%s1135] sm:$0x3] %v1136
            $region269: #{custom-call.22} parent=263 // loop_footer
              %s1133 = sadd.s32 1, %s1129
            $region270: #{custom-call.22} parent=263 // loop_footer_branch
              %1128 = sbr.rel target = $region266
            $region271: #{custom-call.22} parent=263 // loop_exit
              _
          $region264: #{custom-call.22} parent=255 // pred_fallthru
            _
        $region256: #{custom-call.22} parent=139 // pred_fallthru
          _
        %1151 = vnop
        %s1152 = smul.addr %s17, 2
        %s1153 = scalar_lea.vmem %s8, %s1152
        // Predicated region
        $region283: #{custom-call.22} parent=139 // pred_check
          _
        $region284: #{custom-call.22} parent=139 // pred_check_branch
          %1155 = sbr.rel (0) target = $region286
        $region285: #{custom-call.22} parent=139 // pred_region
          // Predicated region
          $region287: #{custom-call.22} parent=285 // pred_check
            _
          $region288: #{custom-call.22} parent=285 // pred_check_branch
            %1157 = sbr.rel target = $region290
          $region289: #{custom-call.22} parent=285 // pred_region
            // Predicated region
            $region302: #{custom-call.22} parent=289 // pred_check
              _
            $region303: #{custom-call.22} parent=289 // pred_check_branch
              %1172 = sbr.rel (0) target = $region305
            $region304: #{custom-call.22} parent=289 // pred_region
              loop: start=0, step=1, limit=1
              $region306: #{custom-call.22} parent=304 // loop_pre_header
                _
              $region307: #{custom-call.22} parent=304 // loop_header
                %s1175 = sphi 0, %s1179
                %p1176 = scmp.ge.s32.totalorder %s1175, 1
                %s1180 = sphi %s1007, %s1007
                %s1181 = sphi %s1153, %s1153
              $region308: #{custom-call.22} parent=304 // loop_header_branch
                %1178 = sbr.rel (%p1176) target = $region312
              $region309: #{custom-call.22} parent=304 // loop_body
                %v1182 = vld [vmem:[%s1180] sm:$0x3]
                %1183 = vst [vmem:[%s1181] sm:$0x3] %v1182
              $region310: #{custom-call.22} parent=304 // loop_footer
                %s1179 = sadd.s32 1, %s1175
              $region311: #{custom-call.22} parent=304 // loop_footer_branch
                %1174 = sbr.rel target = $region307
              $region312: #{custom-call.22} parent=304 // loop_exit
                _
            $region305: #{custom-call.22} parent=289 // pred_fallthru
              _
          $region290: #{custom-call.22} parent=285 // pred_fallthru
            _
          // Predicated region
          $region291: #{custom-call.22} parent=285 // pred_check
            _
          $region292: #{custom-call.22} parent=285 // pred_check_branch
            %1159 = sbr.rel (0) target = $region294
          $region293: #{custom-call.22} parent=285 // pred_region
            loop: start=0, step=1, limit=1
            $region295: #{custom-call.22} parent=293 // loop_pre_header
              _
            $region296: #{custom-call.22} parent=293 // loop_header
              %s1162 = sphi 0, %s1166
              %p1163 = scmp.ge.s32.totalorder %s1162, 1
              %s1167 = sphi %s1007, %s1007
              %s1168 = sphi %s1153, %s1153
            $region297: #{custom-call.22} parent=293 // loop_header_branch
              %1165 = sbr.rel (%p1163) target = $region301
            $region298: #{custom-call.22} parent=293 // loop_body
              %v1169 = vld [vmem:[%s1167] sm:$0x3]
              %1170 = vst [vmem:[%s1168] sm:$0x3] %v1169
            $region299: #{custom-call.22} parent=293 // loop_footer
              %s1166 = sadd.s32 1, %s1162
            $region300: #{custom-call.22} parent=293 // loop_footer_branch
              %1161 = sbr.rel target = $region296
            $region301: #{custom-call.22} parent=293 // loop_exit
              _
          $region294: #{custom-call.22} parent=285 // pred_fallthru
            _
        $region286: #{custom-call.22} parent=139 // pred_fallthru
          _
        %1184 = vnop
        %s1185 = smul.addr %s17, 2
        %s1186 = scalar_lea.vmem %s9, %s1185
        // Predicated region
        $region313: #{custom-call.22} parent=139 // pred_check
          _
        $region314: #{custom-call.22} parent=139 // pred_check_branch
          %1188 = sbr.rel (0) target = $region316
        $region315: #{custom-call.22} parent=139 // pred_region
          // Predicated region
          $region317: #{custom-call.22} parent=315 // pred_check
            _
          $region318: #{custom-call.22} parent=315 // pred_check_branch
            %1190 = sbr.rel target = $region320
          $region319: #{custom-call.22} parent=315 // pred_region
            // Predicated region
            $region332: #{custom-call.22} parent=319 // pred_check
              _
            $region333: #{custom-call.22} parent=319 // pred_check_branch
              %1205 = sbr.rel (0) target = $region335
            $region334: #{custom-call.22} parent=319 // pred_region
              loop: start=0, step=1, limit=1
              $region336: #{custom-call.22} parent=334 // loop_pre_header
                _
              $region337: #{custom-call.22} parent=334 // loop_header
                %s1208 = sphi 0, %s1212
                %p1209 = scmp.ge.s32.totalorder %s1208, 1
                %s1213 = sphi %s1011, %s1011
                %s1214 = sphi %s1186, %s1186
              $region338: #{custom-call.22} parent=334 // loop_header_branch
                %1211 = sbr.rel (%p1209) target = $region342
              $region339: #{custom-call.22} parent=334 // loop_body
                %v1215 = vld [vmem:[%s1213] sm:$0x3]
                %1216 = vst [vmem:[%s1214] sm:$0x3] %v1215
              $region340: #{custom-call.22} parent=334 // loop_footer
                %s1212 = sadd.s32 1, %s1208
              $region341: #{custom-call.22} parent=334 // loop_footer_branch
                %1207 = sbr.rel target = $region337
              $region342: #{custom-call.22} parent=334 // loop_exit
                _
            $region335: #{custom-call.22} parent=319 // pred_fallthru
              _
          $region320: #{custom-call.22} parent=315 // pred_fallthru
            _
          // Predicated region
          $region321: #{custom-call.22} parent=315 // pred_check
            _
          $region322: #{custom-call.22} parent=315 // pred_check_branch
            %1192 = sbr.rel (0) target = $region324
          $region323: #{custom-call.22} parent=315 // pred_region
            loop: start=0, step=1, limit=1
            $region325: #{custom-call.22} parent=323 // loop_pre_header
              _
            $region326: #{custom-call.22} parent=323 // loop_header
              %s1195 = sphi 0, %s1199
              %p1196 = scmp.ge.s32.totalorder %s1195, 1
              %s1200 = sphi %s1011, %s1011
              %s1201 = sphi %s1186, %s1186
            $region327: #{custom-call.22} parent=323 // loop_header_branch
              %1198 = sbr.rel (%p1196) target = $region331
            $region328: #{custom-call.22} parent=323 // loop_body
              %v1202 = vld [vmem:[%s1200] sm:$0x3]
              %1203 = vst [vmem:[%s1201] sm:$0x3] %v1202
            $region329: #{custom-call.22} parent=323 // loop_footer
              %s1199 = sadd.s32 1, %s1195
            $region330: #{custom-call.22} parent=323 // loop_footer_branch
              %1194 = sbr.rel target = $region326
            $region331: #{custom-call.22} parent=323 // loop_exit
              _
          $region324: #{custom-call.22} parent=315 // pred_fallthru
            _
        $region316: #{custom-call.22} parent=139 // pred_fallthru
          _
        %1217 = vnop
      $region140: #{custom-call.22} parent=5 // pred_fallthru
        _
      %p1218 = scmp.le.s32.totalorder 2, %s12
      // Predicated region
      $region343: #{custom-call.22} parent=5 // pred_check
        %p1219 = pneg %p1218
      $region344: #{custom-call.22} parent=5 // pred_check_branch
        %1221 = sbr.rel (%p1219) target = $region346
      $region345: #{custom-call.22} parent=5 // pred_region
        %s1222 = ssub.s32 %s12, 2
        // Predicated region
        $region347: #{custom-call.22} parent=345 // pred_check
          %p1223 = pneg %p43
        $region348: #{custom-call.22} parent=345 // pred_check_branch
          %1225 = sbr.rel (%p1223) target = $region350
        $region349: #{custom-call.22} parent=345 // pred_region
          %s1226 = sand.u32 %s28, 1
          %s1227 = sand.u32 %s28, 1
          %s1228 = smul.addr %s1227, 2
          %s1229 = scalar_lea.vmem [#allocation9], %s1228
        $region350: #{custom-call.22} parent=345 // pred_fallthru
          _
        // Predicated region
        $region351: #{custom-call.22} parent=345 // pred_check
          %p1230 = pneg %p71
        $region352: #{custom-call.22} parent=345 // pred_check_branch
          %1232 = sbr.rel (%p1230) target = $region354
        $region353: #{custom-call.22} parent=345 // pred_region
          %s1233 = sand.u32 %s56, 1
          %s1234 = sand.u32 %s56, 1
          %s1235 = smul.addr %s1234, 2
          %s1236 = scalar_lea.vmem [#allocation11], %s1235
        $region354: #{custom-call.22} parent=345 // pred_fallthru
          _
        %s1237 = sand.u32 %s18, 1
        %s1238 = sand.u32 %s18, 1
        %s1239 = smul.addr %s1238, 2
        %s1240 = scalar_lea.vmem [#allocation13], %s1239
        %s1241 = sand.u32 %s18, 1
        %s1242 = sand.u32 %s18, 1
        %s1243 = smul.addr %s1242, 2
        %s1244 = scalar_lea.vmem [#allocation15], %s1243
        %s1245 = sand.u32 %s18, 1
        %s1246 = sand.u32 %s18, 1
        %s1247 = smul.addr %s1246, 2
        %s1248 = scalar_lea.vmem [#allocation17], %s1247
        %s1249 = sand.u32 %s18, 1
        %s1250 = sand.u32 %s18, 1
        %s1251 = smul.addr %s1250, 2
        %s1252 = scalar_lea.vmem [#allocation19], %s1251
      $region346: #{custom-call.22} parent=5 // pred_fallthru
        _
    $region6: #{custom-call.22} parent=1 // loop_footer
      %s16 = sadd.s32 1, %s12
    $region7: #{custom-call.22} parent=1 // loop_footer_branch
      %11 = sbr.rel target = $region3
    $region8: #{custom-call.22} parent=1 // loop_exit
      _

// kernel: reverse
$region0: #{reverse}
  %s0 = inlined_call_operand.vmem [shape: f32[2,3], index: 0, kind: input, shape index: {}]
  %s1 = inlined_call_operand.vmem [shape: f32[2,3], index: 1, kind: output, shape index: {}]
  %v2 = vlaneseq
  %v3 = vsub.s32 2, %v2
  %4 = vset.pattern.permute.xlu0 %v3
  $region1: #{reverse} parent=0
    #allocation0 [shape = 'u8[4096]{0}', space=vmem, size = 0x1000, scoped, tag = 'operand span for operand 0']
    #allocation1 [shape = 'u8[1024]{0}', space=vmem, size = 0x400, scoped, tag = 'packed  for operand 0']
    #allocation2 [shape = 'u8[4096]{0}', space=vmem, size = 0x1000, scoped, tag = 'operand span for operand 1']
    #allocation3 [shape = 'u8[1024]{0}', space=vmem, size = 0x400, scoped, tag = 'packed  for operand 1']
    // Predicated region
    $region2: #{reverse} parent=1 // pred_check
      _
    $region3: #{reverse} parent=1 // pred_check_branch
      %6 = sbr.rel (0) target = $region5
    $region4: #{reverse} parent=1 // pred_region
      // Predicated region
      $region6: #{reverse} parent=4 // pred_check
        _
      $region7: #{reverse} parent=4 // pred_check_branch
        %8 = sbr.rel target = $region9
      $region8: #{reverse} parent=4 // pred_region
        // Predicated region
        $region21: #{reverse} parent=8 // pred_check
          _
        $region22: #{reverse} parent=8 // pred_check_branch
          %23 = sbr.rel (0) target = $region24
        $region23: #{reverse} parent=8 // pred_region
          loop: start=0, step=1, limit=1
          $region25: #{reverse} parent=23 // loop_pre_header
            _
          $region26: #{reverse} parent=23 // loop_header
            %s26 = sphi 0, %s30
            %p27 = scmp.ge.s32.totalorder %s26, 1
            %s31 = sphi %s0, %s0
            %s32 = sphi [#allocation1], [#allocation1]
          $region27: #{reverse} parent=23 // loop_header_branch
            %29 = sbr.rel (%p27) target = $region31
          $region28: #{reverse} parent=23 // loop_body
            %v33 = vld [vmem:[%s31] sm:$0x3]
            %34 = vst [vmem:[%s32] sm:$0x3] %v33
          $region29: #{reverse} parent=23 // loop_footer
            %s30 = sadd.s32 1, %s26
          $region30: #{reverse} parent=23 // loop_footer_branch
            %25 = sbr.rel target = $region26
          $region31: #{reverse} parent=23 // loop_exit
            _
        $region24: #{reverse} parent=8 // pred_fallthru
          _
      $region9: #{reverse} parent=4 // pred_fallthru
        _
      // Predicated region
      $region10: #{reverse} parent=4 // pred_check
        _
      $region11: #{reverse} parent=4 // pred_check_branch
        %10 = sbr.rel (0) target = $region13
      $region12: #{reverse} parent=4 // pred_region
        loop: start=0, step=1, limit=1
        $region14: #{reverse} parent=12 // loop_pre_header
          _
        $region15: #{reverse} parent=12 // loop_header
          %s13 = sphi 0, %s17
          %p14 = scmp.ge.s32.totalorder %s13, 1
          %s18 = sphi %s0, %s0
          %s19 = sphi [#allocation1], [#allocation1]
        $region16: #{reverse} parent=12 // loop_header_branch
          %16 = sbr.rel (%p14) target = $region20
        $region17: #{reverse} parent=12 // loop_body
          %v20 = vld [vmem:[%s18] sm:$0x3]
          %21 = vst [vmem:[%s19] sm:$0x3] %v20
        $region18: #{reverse} parent=12 // loop_footer
          %s17 = sadd.s32 1, %s13
        $region19: #{reverse} parent=12 // loop_footer_branch
          %12 = sbr.rel target = $region15
        $region20: #{reverse} parent=12 // loop_exit
          _
      $region13: #{reverse} parent=4 // pred_fallthru
        _
    $region5: #{reverse} parent=1 // pred_fallthru
      _
    %35 = vnop
    %s37 = sshllo.u32 0, 2
    %v38 = vld [vmem:[#allocation1] sm:%s37]
    %39 = vst [vmem:[#allocation0] sm:%s37] %v38
    %v40 = vld [vmem:[#allocation0] sm:$0xff]
    %41 = vperm.xlu0 %4, %v40
    %v42 = vpop.permute.xlu0 %41
    %43 = vst [vmem:[#allocation2] sm:$0xff] %v42
    %s45 = sshllo.u32 0, 2
    %v47 = vld [vmem:[#allocation2] sm:%s45]
    %s48 = sshllo.u32 0, 2
    %49 = vst [vmem:[#allocation3] sm:%s48] %v47
    // Predicated region
    $region32: #{reverse} parent=1 // pred_check
      _
    $region33: #{reverse} parent=1 // pred_check_branch
      %51 = sbr.rel (0) target = $region35
    $region34: #{reverse} parent=1 // pred_region
      // Predicated region
      $region36: #{reverse} parent=34 // pred_check
        _
      $region37: #{reverse} parent=34 // pred_check_branch
        %53 = sbr.rel target = $region39
      $region38: #{reverse} parent=34 // pred_region
        // Predicated region
        $region51: #{reverse} parent=38 // pred_check
          _
        $region52: #{reverse} parent=38 // pred_check_branch
          %68 = sbr.rel (0) target = $region54
        $region53: #{reverse} parent=38 // pred_region
          loop: start=0, step=1, limit=1
          $region55: #{reverse} parent=53 // loop_pre_header
            _
          $region56: #{reverse} parent=53 // loop_header
            %s71 = sphi 0, %s75
            %p72 = scmp.ge.s32.totalorder %s71, 1
            %s76 = sphi [#allocation3], [#allocation3]
            %s77 = sphi %s1, %s1
          $region57: #{reverse} parent=53 // loop_header_branch
            %74 = sbr.rel (%p72) target = $region61
          $region58: #{reverse} parent=53 // loop_body
            %v78 = vld [vmem:[%s76] sm:$0x3]
            %79 = vst [vmem:[%s77] sm:$0x3] %v78
          $region59: #{reverse} parent=53 // loop_footer
            %s75 = sadd.s32 1, %s71
          $region60: #{reverse} parent=53 // loop_footer_branch
            %70 = sbr.rel target = $region56
          $region61: #{reverse} parent=53 // loop_exit
            _
        $region54: #{reverse} parent=38 // pred_fallthru
          _
      $region39: #{reverse} parent=34 // pred_fallthru
        _
      // Predicated region
      $region40: #{reverse} parent=34 // pred_check
        _
      $region41: #{reverse} parent=34 // pred_check_branch
        %55 = sbr.rel (0) target = $region43
      $region42: #{reverse} parent=34 // pred_region
        loop: start=0, step=1, limit=1
        $region44: #{reverse} parent=42 // loop_pre_header
          _
        $region45: #{reverse} parent=42 // loop_header
          %s58 = sphi 0, %s62
          %p59 = scmp.ge.s32.totalorder %s58, 1
          %s63 = sphi [#allocation3], [#allocation3]
          %s64 = sphi %s1, %s1
        $region46: #{reverse} parent=42 // loop_header_branch
          %61 = sbr.rel (%p59) target = $region50
        $region47: #{reverse} parent=42 // loop_body
          %v65 = vld [vmem:[%s63] sm:$0x3]
          %66 = vst [vmem:[%s64] sm:$0x3] %v65
        $region48: #{reverse} parent=42 // loop_footer
          %s62 = sadd.s32 1, %s58
        $region49: #{reverse} parent=42 // loop_footer_branch
          %57 = sbr.rel target = $region45
        $region50: #{reverse} parent=42 // loop_exit
          _
      $region43: #{reverse} parent=34 // pred_fallthru
        _
    $region35: #{reverse} parent=1 // pred_fallthru
      _
    %80 = vnop

// kernel: vcrnet_forward.1
$region0: #{vcrnet_forward.1}
  #allocation0 [shape = 'u32[]', space=smem, size = 0x4, offset = 0x4, fixed_abs, tag = 'smem constant byte address 0x4 - core index']
  #allocation1 [shape = 'u32[144,128]{1,0:T(1,128)}', space=vmem, size = 0x12000, scoped, tag = 'internal scratch']
  %s0 = inlined_call_operand.vmem [shape: f32[3,512], index: 0, kind: input, shape index: {}]
  %s1 = inlined_call_operand.vmem [shape: f32[32,37], index: 1, kind: input, shape index: {}]
  %s2 = inlined_call_operand.vmem [shape: f32[2,3,128], index: 2, kind: output, shape index: {0}]
  %s3 = inlined_call_operand.vmem [shape: f32[2,3,8], index: 3, kind: output, shape index: {1}]
  %4 = xla_tuple %s2, %s3
  %s5 = sld [smem:[#allocation0]]
  $region26: #{vcrnet_forward.1} parent=0
    _
  %s7 = ssub.s32 1, %s5
  %s8 = scalar_select 0, %s7, %s5
  // Predicated region
  $region2: #{vcrnet_forward.1} parent=0 // pred_check
    _
  $region3: #{vcrnet_forward.1} parent=0 // pred_check_branch
    %10 = sbr.rel (0) target = $region5
  $region4: #{vcrnet_forward.1} parent=0 // pred_region
    _
  $region5: #{vcrnet_forward.1} parent=0 // pred_fallthru
    _
  // Predicated region
  $region6: #{vcrnet_forward.1} parent=0 // pred_check
    _
  $region7: #{vcrnet_forward.1} parent=0 // pred_check_branch
    %12 = sbr.rel (0) target = $region9
  $region8: #{vcrnet_forward.1} parent=0 // pred_region
    _
  $region9: #{vcrnet_forward.1} parent=0 // pred_fallthru
    _
  %v13 = vld [vmem:[%s0] sm:$0x77]
  %v14 = vld [vmem:[%s0 + $0x8] sm:$0x77]
  %v15 = vld [vmem:[%s1] sm:$0xff]
  %v16 = vld [vmem:[%s1 + $0x8] sm:$0xff]
  %v17 = vld [vmem:[%s1 + $0x10] sm:$0xff]
  %v18 = vld [vmem:[%s1 + $0x18] sm:$0xff]
  %20 = vset.pattern.permute.xlu0 32
  %21 = vperm.xlu0 %20, %v15
  %v22 = vpop.permute.xlu0 %21
  %25 = vset.pattern.permute.xlu0 32
  %26 = vperm.xlu0 %25, %v16
  %v27 = vpop.permute.xlu0 %26
  %30 = vset.pattern.permute.xlu0 32
  %31 = vperm.xlu0 %30, %v17
  %v32 = vpop.permute.xlu0 %31
  %35 = vset.pattern.permute.xlu0 32
  %36 = vperm.xlu0 %35, %v18
  %v37 = vpop.permute.xlu0 %36
  %v41 = vlaneseq
  %v42 = vshrl.u32 %v41, 7
  %v43 = vsub.s32 0, %v42
  %v44 = vrot.slane %v13, %v43
  %v45 = vlaneseq
  %v46 = vshrl.u32 %v45, 7
  %v47 = vsub.s32 4, %v46
  %v48 = vrot.slane %v13, %v47
  %v49 = vlaneseq
  %v50 = vshrl.u32 %v49, 7
  %v51 = vsub.s32 0, %v50
  %v52 = vrot.slane %v14, %v51
  %v53 = vlaneseq
  %v54 = vshrl.u32 %v53, 7
  %v55 = vsub.s32 4, %v54
  %v56 = vrot.slane %v14, %v55
  %v61 = vlaneseq
  %v62 = vshrl.u32 %v61, 7
  %v63 = vsub.s32 0, %v62
  %v64 = vrot.slane %v44, %v63
  %v65 = vlaneseq
  %v66 = vshrl.u32 %v65, 7
  %v67 = vsub.s32 0, %v66
  %v68 = vrot.slane %v48, %v67
  %v69 = vlaneseq
  %v70 = vshrl.u32 %v69, 7
  %v71 = vsub.s32 0, %v70
  %v72 = vrot.slane %v52, %v71
  %v73 = vlaneseq
  %v74 = vshrl.u32 %v73, 7
  %v75 = vsub.s32 0, %v74
  %v76 = vrot.slane %v56, %v75
  %v77 = vmul.f32 %v22, %v64
  %v78 = vmul.f32 %v22, %v68
  %v79 = vmul.f32 %v22, %v72
  %v80 = vmul.f32 %v22, %v76
  %v81 = vmul.f32 %v27, %v64
  %v82 = vmul.f32 %v27, %v68
  %v83 = vmul.f32 %v27, %v72
  %v84 = vmul.f32 %v27, %v76
  %v85 = vmul.f32 %v32, %v64
  %v86 = vmul.f32 %v32, %v68
  %v87 = vmul.f32 %v32, %v72
  %v88 = vmul.f32 %v32, %v76
  %v89 = vmul.f32 %v37, %v64
  %v90 = vmul.f32 %v37, %v68
  %v91 = vmul.f32 %v37, %v72
  %v92 = vmul.f32 %v37, %v76
  %93 = vset.pattern.permute.xlu0 33
  %94 = vperm.xlu0 %93, %v15
  %v95 = vpop.permute.xlu0 %94
  %97 = vset.pattern.permute.xlu0 33
  %98 = vperm.xlu0 %97, %v16
  %v99 = vpop.permute.xlu0 %98
  %101 = vset.pattern.permute.xlu0 33
  %102 = vperm.xlu0 %101, %v17
  %v103 = vpop.permute.xlu0 %102
  %105 = vset.pattern.permute.xlu0 33
  %106 = vperm.xlu0 %105, %v18
  %v107 = vpop.permute.xlu0 %106
  %v109 = vlaneseq
  %v110 = vshrl.u32 %v109, 7
  %v111 = vsub.s32 1, %v110
  %v112 = vrot.slane %v13, %v111
  %v113 = vlaneseq
  %v114 = vshrl.u32 %v113, 7
  %v115 = vsub.s32 5, %v114
  %v116 = vrot.slane %v13, %v115
  %v117 = vlaneseq
  %v118 = vshrl.u32 %v117, 7
  %v119 = vsub.s32 1, %v118
  %v120 = vrot.slane %v14, %v119
  %v121 = vlaneseq
  %v122 = vshrl.u32 %v121, 7
  %v123 = vsub.s32 5, %v122
  %v124 = vrot.slane %v14, %v123
  %v129 = vlaneseq
  %v130 = vshrl.u32 %v129, 7
  %v131 = vsub.s32 1, %v130
  %v132 = vrot.slane %v112, %v131
  %v133 = vlaneseq
  %v134 = vshrl.u32 %v133, 7
  %v135 = vsub.s32 1, %v134
  %v136 = vrot.slane %v116, %v135
  %v137 = vlaneseq
  %v138 = vshrl.u32 %v137, 7
  %v139 = vsub.s32 1, %v138
  %v140 = vrot.slane %v120, %v139
  %v141 = vlaneseq
  %v142 = vshrl.u32 %v141, 7
  %v143 = vsub.s32 1, %v142
  %v144 = vrot.slane %v124, %v143
  %v145 = vmul.f32 %v95, %v132
  %v146 = vmul.f32 %v95, %v136
  %v147 = vmul.f32 %v95, %v140
  %v148 = vmul.f32 %v95, %v144
  %v149 = vmul.f32 %v99, %v132
  %v150 = vmul.f32 %v99, %v136
  %v151 = vmul.f32 %v99, %v140
  %v152 = vmul.f32 %v99, %v144
  %v153 = vmul.f32 %v103, %v132
  %v154 = vmul.f32 %v103, %v136
  %v155 = vmul.f32 %v103, %v140
  %v156 = vmul.f32 %v103, %v144
  %v157 = vmul.f32 %v107, %v132
  %v158 = vmul.f32 %v107, %v136
  %v159 = vmul.f32 %v107, %v140
  %v160 = vmul.f32 %v107, %v144
  %v161 = vadd.f32 %v77, %v145
  %v162 = vadd.f32 %v78, %v146
  %v163 = vadd.f32 %v79, %v147
  %v164 = vadd.f32 %v80, %v148
  %v165 = vadd.f32 %v81, %v149
  %v166 = vadd.f32 %v82, %v150
  %v167 = vadd.f32 %v83, %v151
  %v168 = vadd.f32 %v84, %v152
  %v169 = vadd.f32 %v85, %v153
  %v170 = vadd.f32 %v86, %v154
  %v171 = vadd.f32 %v87, %v155
  %v172 = vadd.f32 %v88, %v156
  %v173 = vadd.f32 %v89, %v157
  %v174 = vadd.f32 %v90, %v158
  %v175 = vadd.f32 %v91, %v159
  %v176 = vadd.f32 %v92, %v160
  %177 = vset.pattern.permute.xlu0 34
  %178 = vperm.xlu0 %177, %v15
  %v179 = vpop.permute.xlu0 %178
  %181 = vset.pattern.permute.xlu0 34
  %182 = vperm.xlu0 %181, %v16
  %v183 = vpop.permute.xlu0 %182
  %185 = vset.pattern.permute.xlu0 34
  %186 = vperm.xlu0 %185, %v17
  %v187 = vpop.permute.xlu0 %186
  %189 = vset.pattern.permute.xlu0 34
  %190 = vperm.xlu0 %189, %v18
  %v191 = vpop.permute.xlu0 %190
  %v193 = vlaneseq
  %v194 = vshrl.u32 %v193, 7
  %v195 = vsub.s32 2, %v194
  %v196 = vrot.slane %v13, %v195
  %v197 = vlaneseq
  %v198 = vshrl.u32 %v197, 7
  %v199 = vsub.s32 6, %v198
  %v200 = vrot.slane %v13, %v199
  %v201 = vlaneseq
  %v202 = vshrl.u32 %v201, 7
  %v203 = vsub.s32 2, %v202
  %v204 = vrot.slane %v14, %v203
  %v205 = vlaneseq
  %v206 = vshrl.u32 %v205, 7
  %v207 = vsub.s32 6, %v206
  %v208 = vrot.slane %v14, %v207
  %v213 = vlaneseq
  %v214 = vshrl.u32 %v213, 7
  %v215 = vsub.s32 2, %v214
  %v216 = vrot.slane %v196, %v215
  %v217 = vlaneseq
  %v218 = vshrl.u32 %v217, 7
  %v219 = vsub.s32 2, %v218
  %v220 = vrot.slane %v200, %v219
  %v221 = vlaneseq
  %v222 = vshrl.u32 %v221, 7
  %v223 = vsub.s32 2, %v222
  %v224 = vrot.slane %v204, %v223
  %v225 = vlaneseq
  %v226 = vshrl.u32 %v225, 7
  %v227 = vsub.s32 2, %v226
  %v228 = vrot.slane %v208, %v227
  %v229 = vmul.f32 %v179, %v216
  %v230 = vmul.f32 %v179, %v220
  %v231 = vmul.f32 %v179, %v224
  %v232 = vmul.f32 %v179, %v228
  %v233 = vmul.f32 %v183, %v216
  %v234 = vmul.f32 %v183, %v220
  %v235 = vmul.f32 %v183, %v224
  %v236 = vmul.f32 %v183, %v228
  %v237 = vmul.f32 %v187, %v216
  %v238 = vmul.f32 %v187, %v220
  %v239 = vmul.f32 %v187, %v224
  %v240 = vmul.f32 %v187, %v228
  %v241 = vmul.f32 %v191, %v216
  %v242 = vmul.f32 %v191, %v220
  %v243 = vmul.f32 %v191, %v224
  %v244 = vmul.f32 %v191, %v228
  %v245 = vadd.f32 %v161, %v229
  %v246 = vadd.f32 %v162, %v230
  %v247 = vadd.f32 %v163, %v231
  %v248 = vadd.f32 %v164, %v232
  %v249 = vadd.f32 %v165, %v233
  %v250 = vadd.f32 %v166, %v234
  %v251 = vadd.f32 %v167, %v235
  %v252 = vadd.f32 %v168, %v236
  %v253 = vadd.f32 %v169, %v237
  %v254 = vadd.f32 %v170, %v238
  %v255 = vadd.f32 %v171, %v239
  %v256 = vadd.f32 %v172, %v240
  %v257 = vadd.f32 %v173, %v241
  %v258 = vadd.f32 %v174, %v242
  %v259 = vadd.f32 %v175, %v243
  %v260 = vadd.f32 %v176, %v244
  %261 = vset.pattern.permute.xlu0 35
  %262 = vperm.xlu0 %261, %v15
  %v263 = vpop.permute.xlu0 %262
  %265 = vset.pattern.permute.xlu0 35
  %266 = vperm.xlu0 %265, %v16
  %v267 = vpop.permute.xlu0 %266
  %269 = vset.pattern.permute.xlu0 35
  %270 = vperm.xlu0 %269, %v17
  %v271 = vpop.permute.xlu0 %270
  %273 = vset.pattern.permute.xlu0 35
  %274 = vperm.xlu0 %273, %v18
  %v275 = vpop.permute.xlu0 %274
  %v277 = vadd.f32 %v245, %v263
  %v278 = vadd.f32 %v246, %v263
  %v279 = vadd.f32 %v247, %v263
  %v280 = vadd.f32 %v248, %v263
  %v281 = vadd.f32 %v249, %v267
  %v282 = vadd.f32 %v250, %v267
  %v283 = vadd.f32 %v251, %v267
  %v284 = vadd.f32 %v252, %v267
  %v285 = vadd.f32 %v253, %v271
  %v286 = vadd.f32 %v254, %v271
  %v287 = vadd.f32 %v255, %v271
  %v288 = vadd.f32 %v256, %v271
  %v289 = vadd.f32 %v257, %v275
  %v290 = vadd.f32 %v258, %v275
  %v291 = vadd.f32 %v259, %v275
  %v292 = vadd.f32 %v260, %v275
  %v293 = vmax.f32 %v277, 0.0
  %v294 = vmax.f32 %v278, 0.0
  %v295 = vmax.f32 %v279, 0.0
  %v296 = vmax.f32 %v280, 0.0
  %v297 = vmax.f32 %v281, 0.0
  %v298 = vmax.f32 %v282, 0.0
  %v299 = vmax.f32 %v283, 0.0
  %v300 = vmax.f32 %v284, 0.0
  %v301 = vmax.f32 %v285, 0.0
  %v302 = vmax.f32 %v286, 0.0
  %v303 = vmax.f32 %v287, 0.0
  %v304 = vmax.f32 %v288, 0.0
  %v305 = vmax.f32 %v289, 0.0
  %v306 = vmax.f32 %v290, 0.0
  %v307 = vmax.f32 %v291, 0.0
  %v308 = vmax.f32 %v292, 0.0
  %309 = vset.pattern.permute.xlu0 36
  %310 = vperm.xlu0 %309, %v15
  %v311 = vpop.permute.xlu0 %310
  %313 = vset.pattern.permute.xlu0 36
  %314 = vperm.xlu0 %313, %v16
  %v315 = vpop.permute.xlu0 %314
  %317 = vset.pattern.permute.xlu0 36
  %318 = vperm.xlu0 %317, %v17
  %v319 = vpop.permute.xlu0 %318
  %321 = vset.pattern.permute.xlu0 36
  %322 = vperm.xlu0 %321, %v18
  %v323 = vpop.permute.xlu0 %322
  %vm325 = vcmask 261120
  %v326 = vsel %vm325, %v15, 0
  %v328 = vsel %vm325, %v16, 0
  %v330 = vsel %vm325, %v17, 0
  %v332 = vsel %vm325, %v18, 0
  %334 = vmatprep.subr.mxu0 %v294
  %335 = vmatpush1.msra.mxu0 %v293
  %336 = vmatprep.subr.mxu0 %v298
  %337 = vmatpush1.msra.mxu0 %v297
  %338 = vmatprep.subr.mxu0 %v302
  %339 = vmatpush1.msra.mxu0 %v301
  %340 = vmatprep.subr.mxu0 %v306
  %341 = vmatpush1.msra.mxu0 %v305
  %342 = vmatprep.subr.mxu0 0.0
  %343 = vmatpush1.msra.mxu0 0.0
  %344 = vmatprep.subr.mxu0 0.0
  %345 = vmatpush1.msra.mxu0 0.0
  %346 = vmatprep.subr.mxu0 0.0
  %347 = vmatpush1.msra.mxu0 0.0
  %348 = vmatprep.subr.mxu0 0.0
  %349 = vmatpush1.msra.mxu0 0.0
  %350 = vmatprep.subr.mxu0 0.0
  %351 = vmatpush1.msra.mxu0 0.0
  %352 = vmatprep.subr.mxu0 0.0
  %353 = vmatpush1.msra.mxu0 0.0
  %354 = vmatprep.subr.mxu0 0.0
  %355 = vmatpush1.msra.mxu0 0.0
  %356 = vmatprep.subr.mxu0 0.0
  %357 = vmatpush1.msra.mxu0 0.0
  %358 = vmatprep.subr.mxu0 0.0
  %359 = vmatpush1.msra.mxu0 0.0
  %360 = vmatprep.subr.mxu0 0.0
  %361 = vmatpush1.msra.mxu0 0.0
  %362 = vmatprep.subr.mxu0 0.0
  %363 = vmatpush1.msra.mxu0 0.0
  %364 = vmatprep.subr.mxu0 0.0
  %365 = vmatpush1.msra.mxu0 0.0
  %366 = vmatprep.subr.mxu0 0.0
  %367 = vmatpush1.msra.mxu0 0.0
  %368 = vmatprep.subr.mxu0 0.0
  %369 = vmatpush1.msra.mxu0 0.0
  %370 = vmatprep.subr.mxu0 0.0
  %371 = vmatpush1.msra.mxu0 0.0
  %372 = vmatprep.subr.mxu0 0.0
  %373 = vmatpush1.msra.mxu0 0.0
  %374 = vmatprep.subr.mxu0 0.0
  %375 = vmatpush1.msra.mxu0 0.0
  %376 = vmatprep.subr.mxu0 0.0
  %377 = vmatpush1.msra.mxu0 0.0
  %378 = vmatprep.subr.mxu0 0.0
  %379 = vmatpush1.msra.mxu0 0.0
  %380 = vmatprep.subr.mxu0 0.0
  %381 = vmatpush1.msra.mxu0 0.0
  %382 = vmatprep.subr.mxu0 0.0
  %383 = vmatpush1.msra.mxu0 0.0
  %384 = vmatprep.subr.mxu0 0.0
  %385 = vmatpush1.msra.mxu0 0.0
  %386 = vmatprep.subr.mxu0 0.0
  %387 = vmatpush1.msra.mxu0 0.0
  %388 = vmatprep.subr.mxu0 0.0
  %389 = vmatpush1.msra.mxu0 0.0
  %390 = vmatprep.subr.mxu0 0.0
  %391 = vmatpush1.msra.mxu0 0.0
  %392 = vmatprep.subr.mxu0 0.0
  %393 = vmatpush1.msra.mxu0 0.0
  %394 = vmatprep.subr.mxu0 0.0
  %395 = vmatpush1.msra.mxu0 0.0
  %396 = vmatprep.subr.mxu0 0.0
  %397 = vmatpush1.msra.mxu0 0.0
  %398 = vmatprep.mubr.f32.mxu0 0.0
  %399 = vmatmul.mubr.f32.gmra.mrb[0].mxu0 %v326
  %v400 = vpop.f32.mrb[0].mxu0
  %v401 = vadd.f32 %v311, %v400
  %v402 = vpop.f32.mrb[0].mxu0
  %v403 = vadd.f32 %v311, %v402
  %404 = vmatprep.mubr.f32.mxu0 0.0
  %405 = vmatmul.mubr.f32.gmra.mrb[0].mxu0 %v328
  %v406 = vpop.f32.mrb[0].mxu0
  %v407 = vadd.f32 %v315, %v406
  %v408 = vpop.f32.mrb[0].mxu0
  %v409 = vadd.f32 %v315, %v408
  %410 = vmatprep.mubr.f32.mxu0 0.0
  %411 = vmatmul.mubr.f32.gmra.mrb[0].mxu0 %v330
  %v412 = vpop.f32.mrb[0].mxu0
  %v413 = vadd.f32 %v319, %v412
  %v414 = vpop.f32.mrb[0].mxu0
  %v415 = vadd.f32 %v319, %v414
  %416 = vmatprep.mubr.f32.mxu0 0.0
  %417 = vmatmul.mubr.f32.gmra.mrb[0].mxu0 %v332
  %v418 = vpop.f32.mrb[0].mxu0
  %v419 = vadd.f32 %v323, %v418
  %v420 = vpop.f32.mrb[0].mxu0
  %v421 = vadd.f32 %v323, %v420
  %422 = vdwg.mxu0
  %423 = vmatprep.subr.mxu0 %v296
  %424 = vmatpush1.msra.mxu0 %v295
  %425 = vmatprep.subr.mxu0 %v300
  %426 = vmatpush1.msra.mxu0 %v299
  %427 = vmatprep.subr.mxu0 %v304
  %428 = vmatpush1.msra.mxu0 %v303
  %429 = vmatprep.subr.mxu0 %v308
  %430 = vmatpush1.msra.mxu0 %v307
  %431 = vmatprep.subr.mxu0 0.0
  %432 = vmatpush1.msra.mxu0 0.0
  %433 = vmatprep.subr.mxu0 0.0
  %434 = vmatpush1.msra.mxu0 0.0
  %435 = vmatprep.subr.mxu0 0.0
  %436 = vmatpush1.msra.mxu0 0.0
  %437 = vmatprep.subr.mxu0 0.0
  %438 = vmatpush1.msra.mxu0 0.0
  %439 = vmatprep.subr.mxu0 0.0
  %440 = vmatpush1.msra.mxu0 0.0
  %441 = vmatprep.subr.mxu0 0.0
  %442 = vmatpush1.msra.mxu0 0.0
  %443 = vmatprep.subr.mxu0 0.0
  %444 = vmatpush1.msra.mxu0 0.0
  %445 = vmatprep.subr.mxu0 0.0
  %446 = vmatpush1.msra.mxu0 0.0
  %447 = vmatprep.subr.mxu0 0.0
  %448 = vmatpush1.msra.mxu0 0.0
  %449 = vmatprep.subr.mxu0 0.0
  %450 = vmatpush1.msra.mxu0 0.0
  %451 = vmatprep.subr.mxu0 0.0
  %452 = vmatpush1.msra.mxu0 0.0
  %453 = vmatprep.subr.mxu0 0.0
  %454 = vmatpush1.msra.mxu0 0.0
  %455 = vmatprep.subr.mxu0 0.0
  %456 = vmatpush1.msra.mxu0 0.0
  %457 = vmatprep.subr.mxu0 0.0
  %458 = vmatpush1.msra.mxu0 0.0
  %459 = vmatprep.subr.mxu0 0.0
  %460 = vmatpush1.msra.mxu0 0.0
  %461 = vmatprep.subr.mxu0 0.0
  %462 = vmatpush1.msra.mxu0 0.0
  %463 = vmatprep.subr.mxu0 0.0
  %464 = vmatpush1.msra.mxu0 0.0
  %465 = vmatprep.subr.mxu0 0.0
  %466 = vmatpush1.msra.mxu0 0.0
  %467 = vmatprep.subr.mxu0 0.0
  %468 = vmatpush1.msra.mxu0 0.0
  %469 = vmatprep.subr.mxu0 0.0
  %470 = vmatpush1.msra.mxu0 0.0
  %471 = vmatprep.subr.mxu0 0.0
  %472 = vmatpush1.msra.mxu0 0.0
  %473 = vmatprep.subr.mxu0 0.0
  %474 = vmatpush1.msra.mxu0 0.0
  %475 = vmatprep.subr.mxu0 0.0
  %476 = vmatpush1.msra.mxu0 0.0
  %477 = vmatprep.subr.mxu0 0.0
  %478 = vmatpush1.msra.mxu0 0.0
  %479 = vmatprep.subr.mxu0 0.0
  %480 = vmatpush1.msra.mxu0 0.0
  %481 = vmatprep.subr.mxu0 0.0
  %482 = vmatpush1.msra.mxu0 0.0
  %483 = vmatprep.subr.mxu0 0.0
  %484 = vmatpush1.msra.mxu0 0.0
  %485 = vmatprep.subr.mxu0 0.0
  %486 = vmatpush1.msra.mxu0 0.0
  %487 = vmatprep.mubr.f32.mxu0 0.0
  %488 = vmatmul.mubr.f32.gmra.mrb[0].mxu0 %v326
  %v489 = vpop.f32.mrb[0].mxu0
  %v490 = vadd.f32 %v311, %v489
  %v491 = vpop.f32.mrb[0].mxu0
  %v492 = vadd.f32 %v311, %v491
  %493 = vmatprep.mubr.f32.mxu0 0.0
  %494 = vmatmul.mubr.f32.gmra.mrb[0].mxu0 %v328
  %v495 = vpop.f32.mrb[0].mxu0
  %v496 = vadd.f32 %v315, %v495
  %v497 = vpop.f32.mrb[0].mxu0
  %v498 = vadd.f32 %v315, %v497
  %499 = vmatprep.mubr.f32.mxu0 0.0
  %500 = vmatmul.mubr.f32.gmra.mrb[0].mxu0 %v330
  %v501 = vpop.f32.mrb[0].mxu0
  %v502 = vadd.f32 %v319, %v501
  %v503 = vpop.f32.mrb[0].mxu0
  %v504 = vadd.f32 %v319, %v503
  %505 = vmatprep.mubr.f32.mxu0 0.0
  %506 = vmatmul.mubr.f32.gmra.mrb[0].mxu0 %v332
  %v507 = vpop.f32.mrb[0].mxu0
  %v508 = vadd.f32 %v323, %v507
  %v509 = vpop.f32.mrb[0].mxu0
  %v510 = vadd.f32 %v323, %v509
  %511 = vdwg.mxu0
  %v512 = vadd.f32 %v401, %v401
  %v513 = vadd.f32 %v407, %v407
  %v514 = vadd.f32 %v413, %v413
  %v515 = vadd.f32 %v419, %v419
  %516 = vxpose.xlu0.b32.start [1/16] %v512, 128
  %517 = vxpose.xlu0.b32.cont [2/16] %v513, 128
  %518 = vxpose.xlu0.b32.cont [3/16] %v514, 128
  %519 = vxpose.xlu0.b32.cont [4/16] %v515, 128
  %520 = vxpose.xlu0.b32.cont [5/16] 0.0, 128
  %521 = vxpose.xlu0.b32.cont [6/16] 0.0, 128
  %522 = vxpose.xlu0.b32.cont [7/16] 0.0, 128
  %523 = vxpose.xlu0.b32.cont [8/16] 0.0, 128
  %524 = vxpose.xlu0.b32.cont [9/16] 0.0, 128
  %525 = vxpose.xlu0.b32.cont [10/16] 0.0, 128
  %526 = vxpose.xlu0.b32.cont [11/16] 0.0, 128
  %527 = vxpose.xlu0.b32.cont [12/16] 0.0, 128
  %528 = vxpose.xlu0.b32.cont [13/16] 0.0, 128
  %529 = vxpose.xlu0.b32.cont [14/16] 0.0, 128
  %530 = vxpose.xlu0.b32.cont [15/16] 0.0, 128
  %531 = vxpose.xlu0.b32.end [16/16] 0.0, 128
  %v532 = vpop.trf.xlu0
  %v533 = vpop.trf.xlu0
  %v534 = vpop.trf.xlu0
  %v535 = vpop.trf.xlu0
  %v536 = vpop.trf.xlu0
  %v537 = vpop.trf.xlu0
  %v538 = vpop.trf.xlu0
  %v539 = vpop.trf.xlu0
  %v540 = vpop.trf.xlu0
  %v541 = vpop.trf.xlu0
  %v542 = vpop.trf.xlu0
  %v543 = vpop.trf.xlu0
  %v544 = vpop.trf.xlu0
  %v545 = vpop.trf.xlu0
  %v546 = vpop.trf.xlu0
  %v547 = vpop.trf.xlu0
  %v549 = vsel %vm325, %v532, 0
  %v552 = vsel %vm325, %v533, 0
  %v555 = vsel %vm325, %v534, 0
  %v558 = vsel %vm325, %v535, 0
  %v561 = vsel %vm325, %v536, 0
  %v564 = vsel %vm325, %v537, 0
  %v567 = vsel %vm325, %v538, 0
  %v570 = vsel %vm325, %v539, 0
  %v573 = vsel %vm325, %v540, 0
  %v576 = vsel %vm325, %v541, 0
  %v579 = vsel %vm325, %v542, 0
  %v582 = vsel %vm325, %v543, 0
  %v585 = vsel %vm325, %v544, 0
  %v588 = vsel %vm325, %v545, 0
  %v591 = vsel %vm325, %v546, 0
  %v594 = vsel %vm325, %v547, 0
  %596 = vmatprep.subr.mxu0 0.0
  %597 = vmatpush1.msra.mxu0 %v403
  %598 = vmatprep.subr.mxu0 0.0
  %599 = vmatpush1.msra.mxu0 %v409
  %600 = vmatprep.subr.mxu0 0.0
  %601 = vmatpush1.msra.mxu0 %v415
  %602 = vmatprep.subr.mxu0 0.0
  %603 = vmatpush1.msra.mxu0 %v421
  %604 = vmatprep.subr.mxu0 0.0
  %605 = vmatpush1.msra.mxu0 0.0
  %606 = vmatprep.subr.mxu0 0.0
  %607 = vmatpush1.msra.mxu0 0.0
  %608 = vmatprep.subr.mxu0 0.0
  %609 = vmatpush1.msra.mxu0 0.0
  %610 = vmatprep.subr.mxu0 0.0
  %611 = vmatpush1.msra.mxu0 0.0
  %612 = vmatprep.subr.mxu0 0.0
  %613 = vmatpush1.msra.mxu0 0.0
  %614 = vmatprep.subr.mxu0 0.0
  %615 = vmatpush1.msra.mxu0 0.0
  %616 = vmatprep.subr.mxu0 0.0
  %617 = vmatpush1.msra.mxu0 0.0
  %618 = vmatprep.subr.mxu0 0.0
  %619 = vmatpush1.msra.mxu0 0.0
  %620 = vmatprep.subr.mxu0 0.0
  %621 = vmatpush1.msra.mxu0 0.0
  %622 = vmatprep.subr.mxu0 0.0
  %623 = vmatpush1.msra.mxu0 0.0
  %624 = vmatprep.subr.mxu0 0.0
  %625 = vmatpush1.msra.mxu0 0.0
  %626 = vmatprep.subr.mxu0 0.0
  %627 = vmatpush1.msra.mxu0 0.0
  %628 = vmatprep.subr.mxu0 0.0
  %629 = vmatpush1.msra.mxu0 0.0
  %630 = vmatprep.subr.mxu0 0.0
  %631 = vmatpush1.msra.mxu0 0.0
  %632 = vmatprep.subr.mxu0 0.0
  %633 = vmatpush1.msra.mxu0 0.0
  %634 = vmatprep.subr.mxu0 0.0
  %635 = vmatpush1.msra.mxu0 0.0
  %636 = vmatprep.subr.mxu0 0.0
  %637 = vmatpush1.msra.mxu0 0.0
  %638 = vmatprep.subr.mxu0 0.0
  %639 = vmatpush1.msra.mxu0 0.0
  %640 = vmatprep.subr.mxu0 0.0
  %641 = vmatpush1.msra.mxu0 0.0
  %642 = vmatprep.subr.mxu0 0.0
  %643 = vmatpush1.msra.mxu0 0.0
  %644 = vmatprep.subr.mxu0 0.0
  %645 = vmatpush1.msra.mxu0 0.0
  %646 = vmatprep.subr.mxu0 0.0
  %647 = vmatpush1.msra.mxu0 0.0
  %648 = vmatprep.subr.mxu0 0.0
  %649 = vmatpush1.msra.mxu0 0.0
  %650 = vmatprep.subr.mxu0 0.0
  %651 = vmatpush1.msra.mxu0 0.0
  %652 = vmatprep.subr.mxu0 0.0
  %653 = vmatpush1.msra.mxu0 0.0
  %654 = vmatprep.subr.mxu0 0.0
  %655 = vmatpush1.msra.mxu0 0.0
  %656 = vmatprep.subr.mxu0 0.0
  %657 = vmatpush1.msra.mxu0 0.0
  %658 = vmatprep.subr.mxu0 0.0
  %659 = vmatpush1.msra.mxu0 0.0
  %660 = vmatprep.mubr.f32.mxu0 0.0
  %661 = vmatmul.mubr.f32.gmra.mrb[0].mxu0 %v549
  %v662 = vpop.f32.mrb[0].mxu0
  %v663 = vadd.f32 0.0, %v662
  %v664 = vpop.f32.mrb[0].mxu0
  %665 = vmatprep.mubr.f32.mxu0 0.0
  %666 = vmatmul.mubr.f32.gmra.mrb[0].mxu0 %v552
  %v667 = vpop.f32.mrb[0].mxu0
  %v668 = vadd.f32 0.0, %v667
  %v669 = vpop.f32.mrb[0].mxu0
  %670 = vmatprep.mubr.f32.mxu0 0.0
  %671 = vmatmul.mubr.f32.gmra.mrb[0].mxu0 %v555
  %v672 = vpop.f32.mrb[0].mxu0
  %v673 = vadd.f32 0.0, %v672
  %v674 = vpop.f32.mrb[0].mxu0
  %675 = vmatprep.mubr.f32.mxu0 0.0
  %676 = vmatmul.mubr.f32.gmra.mrb[0].mxu0 %v558
  %v677 = vpop.f32.mrb[0].mxu0
  %v678 = vadd.f32 0.0, %v677
  %v679 = vpop.f32.mrb[0].mxu0
  %680 = vmatprep.mubr.f32.mxu0 0.0
  %681 = vmatmul.mubr.f32.gmra.mrb[0].mxu0 %v561
  %v682 = vpop.f32.mrb[0].mxu0
  %v683 = vadd.f32 0.0, %v682
  %v684 = vpop.f32.mrb[0].mxu0
  %685 = vmatprep.mubr.f32.mxu0 0.0
  %686 = vmatmul.mubr.f32.gmra.mrb[0].mxu0 %v564
  %v687 = vpop.f32.mrb[0].mxu0
  %v688 = vadd.f32 0.0, %v687
  %v689 = vpop.f32.mrb[0].mxu0
  %690 = vmatprep.mubr.f32.mxu0 0.0
  %691 = vmatmul.mubr.f32.gmra.mrb[0].mxu0 %v567
  %v692 = vpop.f32.mrb[0].mxu0
  %v693 = vadd.f32 0.0, %v692
  %v694 = vpop.f32.mrb[0].mxu0
  %695 = vmatprep.mubr.f32.mxu0 0.0
  %696 = vmatmul.mubr.f32.gmra.mrb[0].mxu0 %v570
  %v697 = vpop.f32.mrb[0].mxu0
  %v698 = vadd.f32 0.0, %v697
  %v699 = vpop.f32.mrb[0].mxu0
  %700 = vmatprep.mubr.f32.mxu0 0.0
  %701 = vmatmul.mubr.f32.gmra.mrb[0].mxu0 %v573
  %v702 = vpop.f32.mrb[0].mxu0
  %v703 = vadd.f32 0.0, %v702
  %v704 = vpop.f32.mrb[0].mxu0
  %705 = vmatprep.mubr.f32.mxu0 0.0
  %706 = vmatmul.mubr.f32.gmra.mrb[0].mxu0 %v576
  %v707 = vpop.f32.mrb[0].mxu0
  %v708 = vadd.f32 0.0, %v707
  %v709 = vpop.f32.mrb[0].mxu0
  %710 = vmatprep.mubr.f32.mxu0 0.0
  %711 = vmatmul.mubr.f32.gmra.mrb[0].mxu0 %v579
  %v712 = vpop.f32.mrb[0].mxu0
  %v713 = vadd.f32 0.0, %v712
  %v714 = vpop.f32.mrb[0].mxu0
  %715 = vmatprep.mubr.f32.mxu0 0.0
  %716 = vmatmul.mubr.f32.gmra.mrb[0].mxu0 %v582
  %v717 = vpop.f32.mrb[0].mxu0
  %v718 = vadd.f32 0.0, %v717
  %v719 = vpop.f32.mrb[0].mxu0
  %720 = vmatprep.mubr.f32.mxu0 0.0
  %721 = vmatmul.mubr.f32.gmra.mrb[0].mxu0 %v585
  %v722 = vpop.f32.mrb[0].mxu0
  %v723 = vadd.f32 0.0, %v722
  %v724 = vpop.f32.mrb[0].mxu0
  %725 = vmatprep.mubr.f32.mxu0 0.0
  %726 = vmatmul.mubr.f32.gmra.mrb[0].mxu0 %v588
  %v727 = vpop.f32.mrb[0].mxu0
  %v728 = vadd.f32 0.0, %v727
  %v729 = vpop.f32.mrb[0].mxu0
  %730 = vmatprep.mubr.f32.mxu0 0.0
  %731 = vmatmul.mubr.f32.gmra.mrb[0].mxu0 %v591
  %v732 = vpop.f32.mrb[0].mxu0
  %v733 = vadd.f32 0.0, %v732
  %v734 = vpop.f32.mrb[0].mxu0
  %735 = vmatprep.mubr.f32.mxu0 0.0
  %736 = vmatmul.mubr.f32.gmra.mrb[0].mxu0 %v594
  %v737 = vpop.f32.mrb[0].mxu0
  %v738 = vadd.f32 0.0, %v737
  %v739 = vpop.f32.mrb[0].mxu0
  %740 = vdwg.mxu0
  %v741 = vmul.f32 %v403, %v403
  %v742 = vmul.f32 %v409, %v409
  %v743 = vmul.f32 %v415, %v415
  %v744 = vmul.f32 %v421, %v421
  %v745 = vadd.f32 %v741, %v742
  %v746 = vadd.f32 %v745, %v743
  %v747 = vadd.f32 %v746, %v744
  %v748 = vrot.slane %v747, 4
  %v749 = vadd.f32 %v747, %v748
  %v750 = vrot.slane %v749, 2
  %v751 = vadd.f32 %v749, %v750
  %v752 = vrot.slane %v751, 1
  %v753 = vadd.f32 %v751, %v752
  %v754 = vsub.f32 %v663, %v753
  %v755 = vsub.f32 %v668, %v753
  %v756 = vsub.f32 %v673, %v753
  %v757 = vsub.f32 %v678, %v753
  %v758 = vsub.f32 %v683, %v753
  %v759 = vsub.f32 %v688, %v753
  %v760 = vsub.f32 %v693, %v753
  %v761 = vsub.f32 %v698, %v753
  %v762 = vsub.f32 %v703, %v753
  %v763 = vsub.f32 %v708, %v753
  %v764 = vsub.f32 %v713, %v753
  %v765 = vsub.f32 %v718, %v753
  %v766 = vsub.f32 %v723, %v753
  %v767 = vsub.f32 %v728, %v753
  %v768 = vsub.f32 %v733, %v753
  %v769 = vsub.f32 %v738, %v753
  %770 = vmax.xlane.f32.xlu0 %v754
  %v771 = vpop.xlane.xlu0 %770
  %772 = vmax.xlane.f32.xlu0 %v755
  %v773 = vpop.xlane.xlu0 %772
  %774 = vmax.xlane.f32.xlu0 %v756
  %v775 = vpop.xlane.xlu0 %774
  %776 = vmax.xlane.f32.xlu0 %v757
  %v777 = vpop.xlane.xlu0 %776
  %778 = vmax.xlane.f32.xlu0 %v758
  %v779 = vpop.xlane.xlu0 %778
  %780 = vmax.xlane.f32.xlu0 %v759
  %v781 = vpop.xlane.xlu0 %780
  %782 = vmax.xlane.f32.xlu0 %v760
  %v783 = vpop.xlane.xlu0 %782
  %784 = vmax.xlane.f32.xlu0 %v761
  %v785 = vpop.xlane.xlu0 %784
  %786 = vmax.xlane.f32.xlu0 %v762
  %v787 = vpop.xlane.xlu0 %786
  %788 = vmax.xlane.f32.xlu0 %v763
  %v789 = vpop.xlane.xlu0 %788
  %790 = vmax.xlane.f32.xlu0 %v764
  %v791 = vpop.xlane.xlu0 %790
  %792 = vmax.xlane.f32.xlu0 %v765
  %v793 = vpop.xlane.xlu0 %792
  %794 = vmax.xlane.f32.xlu0 %v766
  %v795 = vpop.xlane.xlu0 %794
  %796 = vmax.xlane.f32.xlu0 %v767
  %v797 = vpop.xlane.xlu0 %796
  %798 = vmax.xlane.f32.xlu0 %v768
  %v799 = vpop.xlane.xlu0 %798
  %800 = vmax.xlane.f32.xlu0 %v769
  %v801 = vpop.xlane.xlu0 %800
  %v802 = vsub.f32 %v754, %v771
  %v803 = vsub.f32 %v755, %v773
  %v804 = vsub.f32 %v756, %v775
  %v805 = vsub.f32 %v757, %v777
  %v806 = vsub.f32 %v758, %v779
  %v807 = vsub.f32 %v759, %v781
  %v808 = vsub.f32 %v760, %v783
  %v809 = vsub.f32 %v761, %v785
  %v810 = vsub.f32 %v762, %v787
  %v811 = vsub.f32 %v763, %v789
  %v812 = vsub.f32 %v764, %v791
  %v813 = vsub.f32 %v765, %v793
  %v814 = vsub.f32 %v766, %v795
  %v815 = vsub.f32 %v767, %v797
  %v816 = vsub.f32 %v768, %v799
  %v817 = vsub.f32 %v769, %v801
  %v818 = vmul.f32 %v802, 1.442695
  %v819 = vpow.pop %v818
  %v820 = vmul.f32 %v803, 1.442695
  %v821 = vpow.pop %v820
  %v822 = vmul.f32 %v804, 1.442695
  %v823 = vpow.pop %v822
  %v824 = vmul.f32 %v805, 1.442695
  %v825 = vpow.pop %v824
  %v826 = vmul.f32 %v806, 1.442695
  %v827 = vpow.pop %v826
  %v828 = vmul.f32 %v807, 1.442695
  %v829 = vpow.pop %v828
  %v830 = vmul.f32 %v808, 1.442695
  %v831 = vpow.pop %v830
  %v832 = vmul.f32 %v809, 1.442695
  %v833 = vpow.pop %v832
  %v834 = vmul.f32 %v810, 1.442695
  %v835 = vpow.pop %v834
  %v836 = vmul.f32 %v811, 1.442695
  %v837 = vpow.pop %v836
  %v838 = vmul.f32 %v812, 1.442695
  %v839 = vpow.pop %v838
  %v840 = vmul.f32 %v813, 1.442695
  %v841 = vpow.pop %v840
  %v842 = vmul.f32 %v814, 1.442695
  %v843 = vpow.pop %v842
  %v844 = vmul.f32 %v815, 1.442695
  %v845 = vpow.pop %v844
  %v846 = vmul.f32 %v816, 1.442695
  %v847 = vpow.pop %v846
  %v848 = vmul.f32 %v817, 1.442695
  %v849 = vpow.pop %v848
  %850 = vadd.xlane.f32.xlu0 %v819
  %v851 = vpop.xlane.xlu0 %850
  %852 = vadd.xlane.f32.xlu0 %v821
  %v853 = vpop.xlane.xlu0 %852
  %854 = vadd.xlane.f32.xlu0 %v823
  %v855 = vpop.xlane.xlu0 %854
  %856 = vadd.xlane.f32.xlu0 %v825
  %v857 = vpop.xlane.xlu0 %856
  %858 = vadd.xlane.f32.xlu0 %v827
  %v859 = vpop.xlane.xlu0 %858
  %860 = vadd.xlane.f32.xlu0 %v829
  %v861 = vpop.xlane.xlu0 %860
  %862 = vadd.xlane.f32.xlu0 %v831
  %v863 = vpop.xlane.xlu0 %862
  %864 = vadd.xlane.f32.xlu0 %v833
  %v865 = vpop.xlane.xlu0 %864
  %866 = vadd.xlane.f32.xlu0 %v835
  %v867 = vpop.xlane.xlu0 %866
  %868 = vadd.xlane.f32.xlu0 %v837
  %v869 = vpop.xlane.xlu0 %868
  %870 = vadd.xlane.f32.xlu0 %v839
  %v871 = vpop.xlane.xlu0 %870
  %872 = vadd.xlane.f32.xlu0 %v841
  %v873 = vpop.xlane.xlu0 %872
  %874 = vadd.xlane.f32.xlu0 %v843
  %v875 = vpop.xlane.xlu0 %874
  %876 = vadd.xlane.f32.xlu0 %v845
  %v877 = vpop.xlane.xlu0 %876
  %878 = vadd.xlane.f32.xlu0 %v847
  %v879 = vpop.xlane.xlu0 %878
  %880 = vadd.xlane.f32.xlu0 %v849
  %v881 = vpop.xlane.xlu0 %880
  %v882 = vrcp.pop %v851
  %v883 = vrcp.pop %v853
  %v884 = vrcp.pop %v855
  %v885 = vrcp.pop %v857
  %v886 = vrcp.pop %v859
  %v887 = vrcp.pop %v861
  %v888 = vrcp.pop %v863
  %v889 = vrcp.pop %v865
  %v890 = vrcp.pop %v867
  %v891 = vrcp.pop %v869
  %v892 = vrcp.pop %v871
  %v893 = vrcp.pop %v873
  %v894 = vrcp.pop %v875
  %v895 = vrcp.pop %v877
  %v896 = vrcp.pop %v879
  %v897 = vrcp.pop %v881
  %v898 = vcombine.high %v13, %v13
  %900 = vmatprep.subr.mxu0 0.0
  %901 = vmatpush1.xpose.msra.mxu0 %v898
  %902 = vmatprep.subr.mxu0 0.0
  %903 = vmatpush1.xpose.msra.mxu0 0.0
  %904 = vmatprep.subr.mxu0 0.0
  %905 = vmatpush1.xpose.msra.mxu0 0.0
  %906 = vmatprep.subr.mxu0 0.0
  %907 = vmatpush1.xpose.msra.mxu0 0.0
  %908 = vmatprep.subr.mxu0 0.0
  %909 = vmatpush1.xpose.msra.mxu0 0.0
  %910 = vmatprep.subr.mxu0 0.0
  %911 = vmatpush1.xpose.msra.mxu0 0.0
  %912 = vmatprep.subr.mxu0 0.0
  %913 = vmatpush1.xpose.msra.mxu0 0.0
  %914 = vmatprep.subr.mxu0 0.0
  %915 = vmatpush1.xpose.msra.mxu0 0.0
  %916 = vmatprep.subr.mxu0 0.0
  %917 = vmatpush1.xpose.msra.mxu0 0.0
  %918 = vmatprep.subr.mxu0 0.0
  %919 = vmatpush1.xpose.msra.mxu0 0.0
  %920 = vmatprep.subr.mxu0 0.0
  %921 = vmatpush1.xpose.msra.mxu0 0.0
  %922 = vmatprep.subr.mxu0 0.0
  %923 = vmatpush1.xpose.msra.mxu0 0.0
  %924 = vmatprep.subr.mxu0 0.0
  %925 = vmatpush1.xpose.msra.mxu0 0.0
  %926 = vmatprep.subr.mxu0 0.0
  %927 = vmatpush1.xpose.msra.mxu0 0.0
  %928 = vmatprep.subr.mxu0 0.0
  %929 = vmatpush1.xpose.msra.mxu0 0.0
  %930 = vmatprep.subr.mxu0 0.0
  %931 = vmatpush1.xpose.msra.mxu0 0.0
  %932 = vmatprep.subr.mxu0 0.0
  %933 = vmatpush1.xpose.msra.mxu0 0.0
  %934 = vmatprep.subr.mxu0 0.0
  %935 = vmatpush1.xpose.msra.mxu0 0.0
  %936 = vmatprep.subr.mxu0 0.0
  %937 = vmatpush1.xpose.msra.mxu0 0.0
  %938 = vmatprep.subr.mxu0 0.0
  %939 = vmatpush1.xpose.msra.mxu0 0.0
  %940 = vmatprep.subr.mxu0 0.0
  %941 = vmatpush1.xpose.msra.mxu0 0.0
  %942 = vmatprep.subr.mxu0 0.0
  %943 = vmatpush1.xpose.msra.mxu0 0.0
  %944 = vmatprep.subr.mxu0 0.0
  %945 = vmatpush1.xpose.msra.mxu0 0.0
  %946 = vmatprep.subr.mxu0 0.0
  %947 = vmatpush1.xpose.msra.mxu0 0.0
  %948 = vmatprep.subr.mxu0 0.0
  %949 = vmatpush1.xpose.msra.mxu0 0.0
  %950 = vmatprep.subr.mxu0 0.0
  %951 = vmatpush1.xpose.msra.mxu0 0.0
  %952 = vmatprep.subr.mxu0 0.0
  %953 = vmatpush1.xpose.msra.mxu0 0.0
  %954 = vmatprep.subr.mxu0 0.0
  %955 = vmatpush1.xpose.msra.mxu0 0.0
  %956 = vmatprep.subr.mxu0 0.0
  %957 = vmatpush1.xpose.msra.mxu0 0.0
  %958 = vmatprep.subr.mxu0 0.0
  %959 = vmatpush1.xpose.msra.mxu0 0.0
  %960 = vmatprep.subr.mxu0 0.0
  %961 = vmatpush1.xpose.msra.mxu0 0.0
  %962 = vmatprep.subr.mxu0 0.0
  %963 = vmatpush1.xpose.msra.mxu0 0.0
  %964 = vmatprep.mubr.f32.mxu0 0.0
  %965 = vmatmul.mubr.f32.gmra.mrb[0].mxu0 %v819
  %v966 = vpop.f32.mrb[0].mxu0
  %v967 = vadd.f32 0.0, %v966
  %v968 = vpop.f32.mrb[0].mxu0
  %969 = vmatprep.mubr.f32.mxu0 0.0
  %970 = vmatmul.mubr.f32.gmra.mrb[0].mxu0 %v821
  %v971 = vpop.f32.mrb[0].mxu0
  %v972 = vadd.f32 0.0, %v971
  %v973 = vpop.f32.mrb[0].mxu0
  %974 = vmatprep.mubr.f32.mxu0 0.0
  %975 = vmatmul.mubr.f32.gmra.mrb[0].mxu0 %v823
  %v976 = vpop.f32.mrb[0].mxu0
  %v977 = vadd.f32 0.0, %v976
  %v978 = vpop.f32.mrb[0].mxu0
  %979 = vmatprep.mubr.f32.mxu0 0.0
  %980 = vmatmul.mubr.f32.gmra.mrb[0].mxu0 %v825
  %v981 = vpop.f32.mrb[0].mxu0
  %v982 = vadd.f32 0.0, %v981
  %v983 = vpop.f32.mrb[0].mxu0
  %984 = vmatprep.mubr.f32.mxu0 0.0
  %985 = vmatmul.mubr.f32.gmra.mrb[0].mxu0 %v827
  %v986 = vpop.f32.mrb[0].mxu0
  %v987 = vadd.f32 0.0, %v986
  %v988 = vpop.f32.mrb[0].mxu0
  %989 = vmatprep.mubr.f32.mxu0 0.0
  %990 = vmatmul.mubr.f32.gmra.mrb[0].mxu0 %v829
  %v991 = vpop.f32.mrb[0].mxu0
  %v992 = vadd.f32 0.0, %v991
  %v993 = vpop.f32.mrb[0].mxu0
  %994 = vmatprep.mubr.f32.mxu0 0.0
  %995 = vmatmul.mubr.f32.gmra.mrb[0].mxu0 %v831
  %v996 = vpop.f32.mrb[0].mxu0
  %v997 = vadd.f32 0.0, %v996
  %v998 = vpop.f32.mrb[0].mxu0
  %999 = vmatprep.mubr.f32.mxu0 0.0
  %1000 = vmatmul.mubr.f32.gmra.mrb[0].mxu0 %v833
  %v1001 = vpop.f32.mrb[0].mxu0
  %v1002 = vadd.f32 0.0, %v1001
  %v1003 = vpop.f32.mrb[0].mxu0
  %1004 = vmatprep.mubr.f32.mxu0 0.0
  %1005 = vmatmul.mubr.f32.gmra.mrb[0].mxu0 %v835
  %v1006 = vpop.f32.mrb[0].mxu0
  %v1007 = vadd.f32 0.0, %v1006
  %v1008 = vpop.f32.mrb[0].mxu0
  %1009 = vmatprep.mubr.f32.mxu0 0.0
  %1010 = vmatmul.mubr.f32.gmra.mrb[0].mxu0 %v837
  %v1011 = vpop.f32.mrb[0].mxu0
  %v1012 = vadd.f32 0.0, %v1011
  %v1013 = vpop.f32.mrb[0].mxu0
  %1014 = vmatprep.mubr.f32.mxu0 0.0
  %1015 = vmatmul.mubr.f32.gmra.mrb[0].mxu0 %v839
  %v1016 = vpop.f32.mrb[0].mxu0
  %v1017 = vadd.f32 0.0, %v1016
  %v1018 = vpop.f32.mrb[0].mxu0
  %1019 = vmatprep.mubr.f32.mxu0 0.0
  %1020 = vmatmul.mubr.f32.gmra.mrb[0].mxu0 %v841
  %v1021 = vpop.f32.mrb[0].mxu0
  %v1022 = vadd.f32 0.0, %v1021
  %v1023 = vpop.f32.mrb[0].mxu0
  %1024 = vmatprep.mubr.f32.mxu0 0.0
  %1025 = vmatmul.mubr.f32.gmra.mrb[0].mxu0 %v843
  %v1026 = vpop.f32.mrb[0].mxu0
  %v1027 = vadd.f32 0.0, %v1026
  %v1028 = vpop.f32.mrb[0].mxu0
  %1029 = vmatprep.mubr.f32.mxu0 0.0
  %1030 = vmatmul.mubr.f32.gmra.mrb[0].mxu0 %v845
  %v1031 = vpop.f32.mrb[0].mxu0
  %v1032 = vadd.f32 0.0, %v1031
  %v1033 = vpop.f32.mrb[0].mxu0
  %1034 = vmatprep.mubr.f32.mxu0 0.0
  %1035 = vmatmul.mubr.f32.gmra.mrb[0].mxu0 %v847
  %v1036 = vpop.f32.mrb[0].mxu0
  %v1037 = vadd.f32 0.0, %v1036
  %v1038 = vpop.f32.mrb[0].mxu0
  %1039 = vmatprep.mubr.f32.mxu0 0.0
  %1040 = vmatmul.mubr.f32.gmra.mrb[0].mxu0 %v849
  %v1041 = vpop.f32.mrb[0].mxu0
  %v1042 = vadd.f32 0.0, %v1041
  %v1043 = vpop.f32.mrb[0].mxu0
  %1044 = vdwg.mxu0
  %v1045 = vmul.f32 %v967, %v882
  %v1046 = vmul.f32 %v972, %v883
  %v1047 = vmul.f32 %v977, %v884
  %v1048 = vmul.f32 %v982, %v885
  %v1049 = vmul.f32 %v987, %v886
  %v1050 = vmul.f32 %v992, %v887
  %v1051 = vmul.f32 %v997, %v888
  %v1052 = vmul.f32 %v1002, %v889
  %v1053 = vmul.f32 %v1007, %v890
  %v1054 = vmul.f32 %v1012, %v891
  %v1055 = vmul.f32 %v1017, %v892
  %v1056 = vmul.f32 %v1022, %v893
  %v1057 = vmul.f32 %v1027, %v894
  %v1058 = vmul.f32 %v1032, %v895
  %v1059 = vmul.f32 %v1037, %v896
  %v1060 = vmul.f32 %v1042, %v897
  %vm1061 = vcmask 1042432
  %v1062 = vsel %vm1061, %v13, 0.0
  %1063 = vadd.xlane.f32.xlu0 %v1062
  %v1064 = vpop.xlane.xlu0 %1063
  %v1065 = vmul.f32 %v1064, 0.007812422
  %vm1066 = vcmask 23552
  %v1067 = vsel %vm1066, %v1045, 0.0
  %v1068 = vsel %vm1066, %v1046, 0.0
  %v1069 = vadd.f32 %v1067, %v1068
  %v1070 = vsel %vm1066, %v1047, 0.0
  %v1071 = vadd.f32 %v1069, %v1070
  %v1072 = vsel %vm1066, %v1048, 0.0
  %v1073 = vadd.f32 %v1071, %v1072
  %v1074 = vsel %vm1066, %v1049, 0.0
  %v1075 = vadd.f32 %v1073, %v1074
  %v1076 = vsel %vm1066, %v1050, 0.0
  %v1077 = vadd.f32 %v1075, %v1076
  %v1078 = vsel %vm1066, %v1051, 0.0
  %v1079 = vadd.f32 %v1077, %v1078
  %v1080 = vsel %vm1066, %v1052, 0.0
  %v1081 = vadd.f32 %v1079, %v1080
  %v1082 = vsel %vm1066, %v1053, 0.0
  %v1083 = vadd.f32 %v1081, %v1082
  %v1084 = vsel %vm1066, %v1054, 0.0
  %v1085 = vadd.f32 %v1083, %v1084
  %v1086 = vsel %vm1066, %v1055, 0.0
  %v1087 = vadd.f32 %v1085, %v1086
  %v1088 = vsel %vm1066, %v1056, 0.0
  %v1089 = vadd.f32 %v1087, %v1088
  %v1090 = vsel %vm1066, %v1057, 0.0
  %v1091 = vadd.f32 %v1089, %v1090
  %v1092 = vsel %vm1066, %v1058, 0.0
  %v1093 = vadd.f32 %v1091, %v1092
  %v1094 = vsel %vm1066, %v1059, 0.0
  %v1095 = vadd.f32 %v1093, %v1094
  %v1096 = vsel %vm1066, %v1060, 0.0
  %v1097 = vadd.f32 %v1095, %v1096
  %v1098 = vrot.slane %v1097, 4
  %v1099 = vadd.f32 %v1097, %v1098
  %v1100 = vrot.slane %v1099, 2
  %v1101 = vadd.f32 %v1099, %v1100
  %v1102 = vrot.slane %v1101, 1
  %v1103 = vadd.f32 %v1101, %v1102
  %v1104 = vmul.f32 %v1103, 0.007812422
  %v1105 = vsub.f32 %v13, %v1065
  %v1106 = vsub.f32 %v1045, %v1104
  %v1107 = vsub.f32 %v1046, %v1104
  %v1108 = vsub.f32 %v1047, %v1104
  %v1109 = vsub.f32 %v1048, %v1104
  %v1110 = vsub.f32 %v1049, %v1104
  %v1111 = vsub.f32 %v1050, %v1104
  %v1112 = vsub.f32 %v1051, %v1104
  %v1113 = vsub.f32 %v1052, %v1104
  %v1114 = vsub.f32 %v1053, %v1104
  %v1115 = vsub.f32 %v1054, %v1104
  %v1116 = vsub.f32 %v1055, %v1104
  %v1117 = vsub.f32 %v1056, %v1104
  %v1118 = vsub.f32 %v1057, %v1104
  %v1119 = vsub.f32 %v1058, %v1104
  %v1120 = vsub.f32 %v1059, %v1104
  %v1121 = vsub.f32 %v1060, %v1104
  %v1122 = vmul.f32 %v1106, 0.007812422
  %v1123 = vmul.f32 %v1107, 0.007812422
  %v1124 = vmul.f32 %v1108, 0.007812422
  %v1125 = vmul.f32 %v1109, 0.007812422
  %v1126 = vmul.f32 %v1110, 0.007812422
  %v1127 = vmul.f32 %v1111, 0.007812422
  %v1128 = vmul.f32 %v1112, 0.007812422
  %v1129 = vmul.f32 %v1113, 0.007812422
  %v1130 = vmul.f32 %v1114, 0.007812422
  %v1131 = vmul.f32 %v1115, 0.007812422
  %v1132 = vmul.f32 %v1116, 0.007812422
  %v1133 = vmul.f32 %v1117, 0.007812422
  %v1134 = vmul.f32 %v1118, 0.007812422
  %v1135 = vmul.f32 %v1119, 0.007812422
  %v1136 = vmul.f32 %v1120, 0.007812422
  %v1137 = vmul.f32 %v1121, 0.007812422
  %1138 = vmatprep.subr.mxu0 0.0
  %1139 = vmatpush1.msra.mxu0 %v1122
  %1140 = vmatprep.subr.mxu0 0.0
  %1141 = vmatpush1.msra.mxu0 %v1123
  %1142 = vmatprep.subr.mxu0 0.0
  %1143 = vmatpush1.msra.mxu0 %v1124
  %1144 = vmatprep.subr.mxu0 0.0
  %1145 = vmatpush1.msra.mxu0 %v1125
  %1146 = vmatprep.subr.mxu0 0.0
  %1147 = vmatpush1.msra.mxu0 %v1126
  %1148 = vmatprep.subr.mxu0 0.0
  %1149 = vmatpush1.msra.mxu0 %v1127
  %1150 = vmatprep.subr.mxu0 0.0
  %1151 = vmatpush1.msra.mxu0 %v1128
  %1152 = vmatprep.subr.mxu0 0.0
  %1153 = vmatpush1.msra.mxu0 %v1129
  %1154 = vmatprep.subr.mxu0 0.0
  %1155 = vmatpush1.msra.mxu0 %v1130
  %1156 = vmatprep.subr.mxu0 0.0
  %1157 = vmatpush1.msra.mxu0 %v1131
  %1158 = vmatprep.subr.mxu0 0.0
  %1159 = vmatpush1.msra.mxu0 %v1132
  %1160 = vmatprep.subr.mxu0 0.0
  %1161 = vmatpush1.msra.mxu0 %v1133
  %1162 = vmatprep.subr.mxu0 0.0
  %1163 = vmatpush1.msra.mxu0 %v1134
  %1164 = vmatprep.subr.mxu0 0.0
  %1165 = vmatpush1.msra.mxu0 %v1135
  %1166 = vmatprep.subr.mxu0 0.0
  %1167 = vmatpush1.msra.mxu0 %v1136
  %1168 = vmatprep.subr.mxu0 0.0
  %1169 = vmatpush1.msra.mxu0 %v1137
  %1170 = vmatprep.subr.mxu0 0.0
  %1171 = vmatpush1.msra.mxu0 0.0
  %1172 = vmatprep.subr.mxu0 0.0
  %1173 = vmatpush1.msra.mxu0 0.0
  %1174 = vmatprep.subr.mxu0 0.0
  %1175 = vmatpush1.msra.mxu0 0.0
  %1176 = vmatprep.subr.mxu0 0.0
  %1177 = vmatpush1.msra.mxu0 0.0
  %1178 = vmatprep.subr.mxu0 0.0
  %1179 = vmatpush1.msra.mxu0 0.0
  %1180 = vmatprep.subr.mxu0 0.0
  %1181 = vmatpush1.msra.mxu0 0.0
  %1182 = vmatprep.subr.mxu0 0.0
  %1183 = vmatpush1.msra.mxu0 0.0
  %1184 = vmatprep.subr.mxu0 0.0
  %1185 = vmatpush1.msra.mxu0 0.0
  %1186 = vmatprep.subr.mxu0 0.0
  %1187 = vmatpush1.msra.mxu0 0.0
  %1188 = vmatprep.subr.mxu0 0.0
  %1189 = vmatpush1.msra.mxu0 0.0
  %1190 = vmatprep.subr.mxu0 0.0
  %1191 = vmatpush1.msra.mxu0 0.0
  %1192 = vmatprep.subr.mxu0 0.0
  %1193 = vmatpush1.msra.mxu0 0.0
  %1194 = vmatprep.subr.mxu0 0.0
  %1195 = vmatpush1.msra.mxu0 0.0
  %1196 = vmatprep.subr.mxu0 0.0
  %1197 = vmatpush1.msra.mxu0 0.0
  %1198 = vmatprep.subr.mxu0 0.0
  %1199 = vmatpush1.msra.mxu0 0.0
  %1200 = vmatprep.subr.mxu0 0.0
  %1201 = vmatpush1.msra.mxu0 0.0
  %1202 = vmatprep.mubr.f32.mxu0 0.0
  %1203 = vmatmul.mubr.f32.gmra.mrb[0].mxu0 %v1105
  %v1204 = vpop.f32.mrb[0].mxu0
  %v1205 = vadd.f32 0.0, %v1204
  %v1206 = vpop.f32.mrb[0].mxu0
  %1207 = vdwg.mxu0
  %1208 = vxpose.xlu0.b32.start [1/16] %v1045, 128
  %1209 = vxpose.xlu0.b32.cont [2/16] %v1046, 128
  %1210 = vxpose.xlu0.b32.cont [3/16] %v1047, 128
  %1211 = vxpose.xlu0.b32.cont [4/16] %v1048, 128
  %1212 = vxpose.xlu0.b32.cont [5/16] %v1049, 128
  %1213 = vxpose.xlu0.b32.cont [6/16] %v1050, 128
  %1214 = vxpose.xlu0.b32.cont [7/16] %v1051, 128
  %1215 = vxpose.xlu0.b32.cont [8/16] %v1052, 128
  %1216 = vxpose.xlu0.b32.cont [9/16] %v1053, 128
  %1217 = vxpose.xlu0.b32.cont [10/16] %v1054, 128
  %1218 = vxpose.xlu0.b32.cont [11/16] %v1055, 128
  %1219 = vxpose.xlu0.b32.cont [12/16] %v1056, 128
  %1220 = vxpose.xlu0.b32.cont [13/16] %v1057, 128
  %1221 = vxpose.xlu0.b32.cont [14/16] %v1058, 128
  %1222 = vxpose.xlu0.b32.cont [15/16] %v1059, 128
  %1223 = vxpose.xlu0.b32.end [16/16] %v1060, 128
  %v1224 = vpop.trf.xlu0
  %v1225 = vpop.trf.xlu0
  %v1226 = vpop.trf.xlu0
  %v1227 = vpop.trf.xlu0
  %v1228 = vpop.trf.xlu0
  %v1229 = vpop.trf.xlu0
  %v1230 = vpop.trf.xlu0
  %v1231 = vpop.trf.xlu0
  %v1232 = vpop.trf.xlu0
  %v1233 = vpop.trf.xlu0
  %v1234 = vpop.trf.xlu0
  %v1235 = vpop.trf.xlu0
  %v1236 = vpop.trf.xlu0
  %v1237 = vpop.trf.xlu0
  %v1238 = vpop.trf.xlu0
  %v1239 = vpop.trf.xlu0
  %1240 = vst [vmem:[%s2] sm:$0x7] %v1224
  %1241 = vxpose.xlu0.b32.start [1/16] %v1104, 128
  %1242 = vxpose.xlu0.b32.cont [2/16] 0.0, 128
  %1243 = vxpose.xlu0.b32.cont [3/16] 0.0, 128
  %1244 = vxpose.xlu0.b32.cont [4/16] 0.0, 128
  %1245 = vxpose.xlu0.b32.cont [5/16] 0.0, 128
  %1246 = vxpose.xlu0.b32.cont [6/16] 0.0, 128
  %1247 = vxpose.xlu0.b32.cont [7/16] 0.0, 128
  %1248 = vxpose.xlu0.b32.cont [8/16] 0.0, 128
  %1249 = vxpose.xlu0.b32.cont [9/16] 0.0, 128
  %1250 = vxpose.xlu0.b32.cont [10/16] 0.0, 128
  %1251 = vxpose.xlu0.b32.cont [11/16] 0.0, 128
  %1252 = vxpose.xlu0.b32.cont [12/16] 0.0, 128
  %1253 = vxpose.xlu0.b32.cont [13/16] 0.0, 128
  %1254 = vxpose.xlu0.b32.cont [14/16] 0.0, 128
  %1255 = vxpose.xlu0.b32.cont [15/16] 0.0, 128
  %1256 = vxpose.xlu0.b32.end [16/16] 0.0, 128
  %v1257 = vpop.trf.xlu0
  %v1258 = vpop.trf.xlu0
  %v1259 = vpop.trf.xlu0
  %v1260 = vpop.trf.xlu0
  %v1261 = vpop.trf.xlu0
  %v1262 = vpop.trf.xlu0
  %v1263 = vpop.trf.xlu0
  %v1264 = vpop.trf.xlu0
  %v1265 = vpop.trf.xlu0
  %v1266 = vpop.trf.xlu0
  %v1267 = vpop.trf.xlu0
  %v1268 = vpop.trf.xlu0
  %v1269 = vpop.trf.xlu0
  %v1270 = vpop.trf.xlu0
  %v1271 = vpop.trf.xlu0
  %v1272 = vpop.trf.xlu0
  %1274 = vrot.lane.b32.xlu0 %v1257, 1
  %v1275 = vpop.permute.xlu0 %1274
  %1278 = vrot.lane.b32.xlu0 %v1205, 2
  %v1279 = vpop.permute.xlu0 %1278
  %vm1281 = vcmask 7168
  %v1282 = vsel %vm1281, %v1065, %v1275
  %vm1283 = vcmask 15360
  %v1284 = vsel %vm1283, %v1282, %v1279
  %vm1285 = vcmask 39936
  %v1286 = vsel %vm1285, %v1284, 0.0
  %vm1287 = vcmask 59392
  %1288 = vst.msk [vmem:[%s3] sm:$0x7] %vm1287, %v1286
  %v1289 = vadd.f32 %v490, %v490
  %v1290 = vadd.f32 %v496, %v496
  %v1291 = vadd.f32 %v502, %v502
  %v1292 = vadd.f32 %v508, %v508
  %1293 = vxpose.xlu0.b32.start [1/16] %v1289, 128
  %1294 = vxpose.xlu0.b32.cont [2/16] %v1290, 128
  %1295 = vxpose.xlu0.b32.cont [3/16] %v1291, 128
  %1296 = vxpose.xlu0.b32.cont [4/16] %v1292, 128
  %1297 = vxpose.xlu0.b32.cont [5/16] 0.0, 128
  %1298 = vxpose.xlu0.b32.cont [6/16] 0.0, 128
  %1299 = vxpose.xlu0.b32.cont [7/16] 0.0, 128
  %1300 = vxpose.xlu0.b32.cont [8/16] 0.0, 128
  %1301 = vxpose.xlu0.b32.cont [9/16] 0.0, 128
  %1302 = vxpose.xlu0.b32.cont [10/16] 0.0, 128
  %1303 = vxpose.xlu0.b32.cont [11/16] 0.0, 128
  %1304 = vxpose.xlu0.b32.cont [12/16] 0.0, 128
  %1305 = vxpose.xlu0.b32.cont [13/16] 0.0, 128
  %1306 = vxpose.xlu0.b32.cont [14/16] 0.0, 128
  %1307 = vxpose.xlu0.b32.cont [15/16] 0.0, 128
  %1308 = vxpose.xlu0.b32.end [16/16] 0.0, 128
  %v1309 = vpop.trf.xlu0
  %v1310 = vpop.trf.xlu0
  %v1311 = vpop.trf.xlu0
  %v1312 = vpop.trf.xlu0
  %v1313 = vpop.trf.xlu0
  %v1314 = vpop.trf.xlu0
  %v1315 = vpop.trf.xlu0
  %v1316 = vpop.trf.xlu0
  %v1317 = vpop.trf.xlu0
  %v1318 = vpop.trf.xlu0
  %v1319 = vpop.trf.xlu0
  %v1320 = vpop.trf.xlu0
  %v1321 = vpop.trf.xlu0
  %v1322 = vpop.trf.xlu0
  %v1323 = vpop.trf.xlu0
  %v1324 = vpop.trf.xlu0
  %v1326 = vsel %vm325, %v1309, 0
  %v1329 = vsel %vm325, %v1310, 0
  %v1332 = vsel %vm325, %v1311, 0
  %v1335 = vsel %vm325, %v1312, 0
  %v1338 = vsel %vm325, %v1313, 0
  %v1341 = vsel %vm325, %v1314, 0
  %v1344 = vsel %vm325, %v1315, 0
  %v1347 = vsel %vm325, %v1316, 0
  %v1350 = vsel %vm325, %v1317, 0
  %v1353 = vsel %vm325, %v1318, 0
  %v1356 = vsel %vm325, %v1319, 0
  %v1359 = vsel %vm325, %v1320, 0
  %v1362 = vsel %vm325, %v1321, 0
  %v1365 = vsel %vm325, %v1322, 0
  %v1368 = vsel %vm325, %v1323, 0
  %v1371 = vsel %vm325, %v1324, 0
  %1373 = vmatprep.subr.mxu0 0.0
  %1374 = vmatpush1.msra.mxu0 %v492
  %1375 = vmatprep.subr.mxu0 0.0
  %1376 = vmatpush1.msra.mxu0 %v498
  %1377 = vmatprep.subr.mxu0 0.0
  %1378 = vmatpush1.msra.mxu0 %v504
  %1379 = vmatprep.subr.mxu0 0.0
  %1380 = vmatpush1.msra.mxu0 %v510
  %1381 = vmatprep.subr.mxu0 0.0
  %1382 = vmatpush1.msra.mxu0 0.0
  %1383 = vmatprep.subr.mxu0 0.0
  %1384 = vmatpush1.msra.mxu0 0.0
  %1385 = vmatprep.subr.mxu0 0.0
  %1386 = vmatpush1.msra.mxu0 0.0
  %1387 = vmatprep.subr.mxu0 0.0
  %1388 = vmatpush1.msra.mxu0 0.0
  %1389 = vmatprep.subr.mxu0 0.0
  %1390 = vmatpush1.msra.mxu0 0.0
  %1391 = vmatprep.subr.mxu0 0.0
  %1392 = vmatpush1.msra.mxu0 0.0
  %1393 = vmatprep.subr.mxu0 0.0
  %1394 = vmatpush1.msra.mxu0 0.0
  %1395 = vmatprep.subr.mxu0 0.0
  %1396 = vmatpush1.msra.mxu0 0.0
  %1397 = vmatprep.subr.mxu0 0.0
  %1398 = vmatpush1.msra.mxu0 0.0
  %1399 = vmatprep.subr.mxu0 0.0
  %1400 = vmatpush1.msra.mxu0 0.0
  %1401 = vmatprep.subr.mxu0 0.0
  %1402 = vmatpush1.msra.mxu0 0.0
  %1403 = vmatprep.subr.mxu0 0.0
  %1404 = vmatpush1.msra.mxu0 0.0
  %1405 = vmatprep.subr.mxu0 0.0
  %1406 = vmatpush1.msra.mxu0 0.0
  %1407 = vmatprep.subr.mxu0 0.0
  %1408 = vmatpush1.msra.mxu0 0.0
  %1409 = vmatprep.subr.mxu0 0.0
  %1410 = vmatpush1.msra.mxu0 0.0
  %1411 = vmatprep.subr.mxu0 0.0
  %1412 = vmatpush1.msra.mxu0 0.0
  %1413 = vmatprep.subr.mxu0 0.0
  %1414 = vmatpush1.msra.mxu0 0.0
  %1415 = vmatprep.subr.mxu0 0.0
  %1416 = vmatpush1.msra.mxu0 0.0
  %1417 = vmatprep.subr.mxu0 0.0
  %1418 = vmatpush1.msra.mxu0 0.0
  %1419 = vmatprep.subr.mxu0 0.0
  %1420 = vmatpush1.msra.mxu0 0.0
  %1421 = vmatprep.subr.mxu0 0.0
  %1422 = vmatpush1.msra.mxu0 0.0
  %1423 = vmatprep.subr.mxu0 0.0
  %1424 = vmatpush1.msra.mxu0 0.0
  %1425 = vmatprep.subr.mxu0 0.0
  %1426 = vmatpush1.msra.mxu0 0.0
  %1427 = vmatprep.subr.mxu0 0.0
  %1428 = vmatpush1.msra.mxu0 0.0
  %1429 = vmatprep.subr.mxu0 0.0
  %1430 = vmatpush1.msra.mxu0 0.0
  %1431 = vmatprep.subr.mxu0 0.0
  %1432 = vmatpush1.msra.mxu0 0.0
  %1433 = vmatprep.subr.mxu0 0.0
  %1434 = vmatpush1.msra.mxu0 0.0
  %1435 = vmatprep.subr.mxu0 0.0
  %1436 = vmatpush1.msra.mxu0 0.0
  %1437 = vmatprep.mubr.f32.mxu0 0.0
  %1438 = vmatmul.mubr.f32.gmra.mrb[0].mxu0 %v1326
  %v1439 = vpop.f32.mrb[0].mxu0
  %v1440 = vadd.f32 0.0, %v1439
  %v1441 = vpop.f32.mrb[0].mxu0
  %1442 = vmatprep.mubr.f32.mxu0 0.0
  %1443 = vmatmul.mubr.f32.gmra.mrb[0].mxu0 %v1329
  %v1444 = vpop.f32.mrb[0].mxu0
  %v1445 = vadd.f32 0.0, %v1444
  %v1446 = vpop.f32.mrb[0].mxu0
  %1447 = vmatprep.mubr.f32.mxu0 0.0
  %1448 = vmatmul.mubr.f32.gmra.mrb[0].mxu0 %v1332
  %v1449 = vpop.f32.mrb[0].mxu0
  %v1450 = vadd.f32 0.0, %v1449
  %v1451 = vpop.f32.mrb[0].mxu0
  %1452 = vmatprep.mubr.f32.mxu0 0.0
  %1453 = vmatmul.mubr.f32.gmra.mrb[0].mxu0 %v1335
  %v1454 = vpop.f32.mrb[0].mxu0
  %v1455 = vadd.f32 0.0, %v1454
  %v1456 = vpop.f32.mrb[0].mxu0
  %1457 = vmatprep.mubr.f32.mxu0 0.0
  %1458 = vmatmul.mubr.f32.gmra.mrb[0].mxu0 %v1338
  %v1459 = vpop.f32.mrb[0].mxu0
  %v1460 = vadd.f32 0.0, %v1459
  %v1461 = vpop.f32.mrb[0].mxu0
  %1462 = vmatprep.mubr.f32.mxu0 0.0
  %1463 = vmatmul.mubr.f32.gmra.mrb[0].mxu0 %v1341
  %v1464 = vpop.f32.mrb[0].mxu0
  %v1465 = vadd.f32 0.0, %v1464
  %v1466 = vpop.f32.mrb[0].mxu0
  %1467 = vmatprep.mubr.f32.mxu0 0.0
  %1468 = vmatmul.mubr.f32.gmra.mrb[0].mxu0 %v1344
  %v1469 = vpop.f32.mrb[0].mxu0
  %v1470 = vadd.f32 0.0, %v1469
  %v1471 = vpop.f32.mrb[0].mxu0
  %1472 = vmatprep.mubr.f32.mxu0 0.0
  %1473 = vmatmul.mubr.f32.gmra.mrb[0].mxu0 %v1347
  %v1474 = vpop.f32.mrb[0].mxu0
  %v1475 = vadd.f32 0.0, %v1474
  %v1476 = vpop.f32.mrb[0].mxu0
  %1477 = vmatprep.mubr.f32.mxu0 0.0
  %1478 = vmatmul.mubr.f32.gmra.mrb[0].mxu0 %v1350
  %v1479 = vpop.f32.mrb[0].mxu0
  %v1480 = vadd.f32 0.0, %v1479
  %v1481 = vpop.f32.mrb[0].mxu0
  %1482 = vmatprep.mubr.f32.mxu0 0.0
  %1483 = vmatmul.mubr.f32.gmra.mrb[0].mxu0 %v1353
  %v1484 = vpop.f32.mrb[0].mxu0
  %v1485 = vadd.f32 0.0, %v1484
  %v1486 = vpop.f32.mrb[0].mxu0
  %1487 = vmatprep.mubr.f32.mxu0 0.0
  %1488 = vmatmul.mubr.f32.gmra.mrb[0].mxu0 %v1356
  %v1489 = vpop.f32.mrb[0].mxu0
  %v1490 = vadd.f32 0.0, %v1489
  %v1491 = vpop.f32.mrb[0].mxu0
  %1492 = vmatprep.mubr.f32.mxu0 0.0
  %1493 = vmatmul.mubr.f32.gmra.mrb[0].mxu0 %v1359
  %v1494 = vpop.f32.mrb[0].mxu0
  %v1495 = vadd.f32 0.0, %v1494
  %v1496 = vpop.f32.mrb[0].mxu0
  %1497 = vmatprep.mubr.f32.mxu0 0.0
  %1498 = vmatmul.mubr.f32.gmra.mrb[0].mxu0 %v1362
  %v1499 = vpop.f32.mrb[0].mxu0
  %v1500 = vadd.f32 0.0, %v1499
  %v1501 = vpop.f32.mrb[0].mxu0
  %1502 = vmatprep.mubr.f32.mxu0 0.0
  %1503 = vmatmul.mubr.f32.gmra.mrb[0].mxu0 %v1365
  %v1504 = vpop.f32.mrb[0].mxu0
  %v1505 = vadd.f32 0.0, %v1504
  %v1506 = vpop.f32.mrb[0].mxu0
  %1507 = vmatprep.mubr.f32.mxu0 0.0
  %1508 = vmatmul.mubr.f32.gmra.mrb[0].mxu0 %v1368
  %v1509 = vpop.f32.mrb[0].mxu0
  %v1510 = vadd.f32 0.0, %v1509
  %v1511 = vpop.f32.mrb[0].mxu0
  %1512 = vmatprep.mubr.f32.mxu0 0.0
  %1513 = vmatmul.mubr.f32.gmra.mrb[0].mxu0 %v1371
  %v1514 = vpop.f32.mrb[0].mxu0
  %v1515 = vadd.f32 0.0, %v1514
  %v1516 = vpop.f32.mrb[0].mxu0
  %1517 = vdwg.mxu0
  %v1518 = vmul.f32 %v492, %v492
  %v1519 = vmul.f32 %v498, %v498
  %v1520 = vmul.f32 %v504, %v504
  %v1521 = vmul.f32 %v510, %v510
  %v1522 = vadd.f32 %v1518, %v1519
  %v1523 = vadd.f32 %v1522, %v1520
  %v1524 = vadd.f32 %v1523, %v1521
  %v1525 = vrot.slane %v1524, 4
  %v1526 = vadd.f32 %v1524, %v1525
  %v1527 = vrot.slane %v1526, 2
  %v1528 = vadd.f32 %v1526, %v1527
  %v1529 = vrot.slane %v1528, 1
  %v1530 = vadd.f32 %v1528, %v1529
  %v1531 = vsub.f32 %v1440, %v1530
  %v1532 = vsub.f32 %v1445, %v1530
  %v1533 = vsub.f32 %v1450, %v1530
  %v1534 = vsub.f32 %v1455, %v1530
  %v1535 = vsub.f32 %v1460, %v1530
  %v1536 = vsub.f32 %v1465, %v1530
  %v1537 = vsub.f32 %v1470, %v1530
  %v1538 = vsub.f32 %v1475, %v1530
  %v1539 = vsub.f32 %v1480, %v1530
  %v1540 = vsub.f32 %v1485, %v1530
  %v1541 = vsub.f32 %v1490, %v1530
  %v1542 = vsub.f32 %v1495, %v1530
  %v1543 = vsub.f32 %v1500, %v1530
  %v1544 = vsub.f32 %v1505, %v1530
  %v1545 = vsub.f32 %v1510, %v1530
  %v1546 = vsub.f32 %v1515, %v1530
  %1547 = vmax.xlane.f32.xlu0 %v1531
  %v1548 = vpop.xlane.xlu0 %1547
  %1549 = vmax.xlane.f32.xlu0 %v1532
  %v1550 = vpop.xlane.xlu0 %1549
  %1551 = vmax.xlane.f32.xlu0 %v1533
  %v1552 = vpop.xlane.xlu0 %1551
  %1553 = vmax.xlane.f32.xlu0 %v1534
  %v1554 = vpop.xlane.xlu0 %1553
  %1555 = vmax.xlane.f32.xlu0 %v1535
  %v1556 = vpop.xlane.xlu0 %1555
  %1557 = vmax.xlane.f32.xlu0 %v1536
  %v1558 = vpop.xlane.xlu0 %1557
  %1559 = vmax.xlane.f32.xlu0 %v1537
  %v1560 = vpop.xlane.xlu0 %1559
  %1561 = vmax.xlane.f32.xlu0 %v1538
  %v1562 = vpop.xlane.xlu0 %1561
  %1563 = vmax.xlane.f32.xlu0 %v1539
  %v1564 = vpop.xlane.xlu0 %1563
  %1565 = vmax.xlane.f32.xlu0 %v1540
  %v1566 = vpop.xlane.xlu0 %1565
  %1567 = vmax.xlane.f32.xlu0 %v1541
  %v1568 = vpop.xlane.xlu0 %1567
  %1569 = vmax.xlane.f32.xlu0 %v1542
  %v1570 = vpop.xlane.xlu0 %1569
  %1571 = vmax.xlane.f32.xlu0 %v1543
  %v1572 = vpop.xlane.xlu0 %1571
  %1573 = vmax.xlane.f32.xlu0 %v1544
  %v1574 = vpop.xlane.xlu0 %1573
  %1575 = vmax.xlane.f32.xlu0 %v1545
  %v1576 = vpop.xlane.xlu0 %1575
  %1577 = vmax.xlane.f32.xlu0 %v1546
  %v1578 = vpop.xlane.xlu0 %1577
  %v1579 = vsub.f32 %v1531, %v1548
  %v1580 = vsub.f32 %v1532, %v1550
  %v1581 = vsub.f32 %v1533, %v1552
  %v1582 = vsub.f32 %v1534, %v1554
  %v1583 = vsub.f32 %v1535, %v1556
  %v1584 = vsub.f32 %v1536, %v1558
  %v1585 = vsub.f32 %v1537, %v1560
  %v1586 = vsub.f32 %v1538, %v1562
  %v1587 = vsub.f32 %v1539, %v1564
  %v1588 = vsub.f32 %v1540, %v1566
  %v1589 = vsub.f32 %v1541, %v1568
  %v1590 = vsub.f32 %v1542, %v1570
  %v1591 = vsub.f32 %v1543, %v1572
  %v1592 = vsub.f32 %v1544, %v1574
  %v1593 = vsub.f32 %v1545, %v1576
  %v1594 = vsub.f32 %v1546, %v1578
  %v1595 = vmul.f32 %v1579, 1.442695
  %v1596 = vpow.pop %v1595
  %v1597 = vmul.f32 %v1580, 1.442695
  %v1598 = vpow.pop %v1597
  %v1599 = vmul.f32 %v1581, 1.442695
  %v1600 = vpow.pop %v1599
  %v1601 = vmul.f32 %v1582, 1.442695
  %v1602 = vpow.pop %v1601
  %v1603 = vmul.f32 %v1583, 1.442695
  %v1604 = vpow.pop %v1603
  %v1605 = vmul.f32 %v1584, 1.442695
  %v1606 = vpow.pop %v1605
  %v1607 = vmul.f32 %v1585, 1.442695
  %v1608 = vpow.pop %v1607
  %v1609 = vmul.f32 %v1586, 1.442695
  %v1610 = vpow.pop %v1609
  %v1611 = vmul.f32 %v1587, 1.442695
  %v1612 = vpow.pop %v1611
  %v1613 = vmul.f32 %v1588, 1.442695
  %v1614 = vpow.pop %v1613
  %v1615 = vmul.f32 %v1589, 1.442695
  %v1616 = vpow.pop %v1615
  %v1617 = vmul.f32 %v1590, 1.442695
  %v1618 = vpow.pop %v1617
  %v1619 = vmul.f32 %v1591, 1.442695
  %v1620 = vpow.pop %v1619
  %v1621 = vmul.f32 %v1592, 1.442695
  %v1622 = vpow.pop %v1621
  %v1623 = vmul.f32 %v1593, 1.442695
  %v1624 = vpow.pop %v1623
  %v1625 = vmul.f32 %v1594, 1.442695
  %v1626 = vpow.pop %v1625
  %1627 = vadd.xlane.f32.xlu0 %v1596
  %v1628 = vpop.xlane.xlu0 %1627
  %1629 = vadd.xlane.f32.xlu0 %v1598
  %v1630 = vpop.xlane.xlu0 %1629
  %1631 = vadd.xlane.f32.xlu0 %v1600
  %v1632 = vpop.xlane.xlu0 %1631
  %1633 = vadd.xlane.f32.xlu0 %v1602
  %v1634 = vpop.xlane.xlu0 %1633
  %1635 = vadd.xlane.f32.xlu0 %v1604
  %v1636 = vpop.xlane.xlu0 %1635
  %1637 = vadd.xlane.f32.xlu0 %v1606
  %v1638 = vpop.xlane.xlu0 %1637
  %1639 = vadd.xlane.f32.xlu0 %v1608
  %v1640 = vpop.xlane.xlu0 %1639
  %1641 = vadd.xlane.f32.xlu0 %v1610
  %v1642 = vpop.xlane.xlu0 %1641
  %1643 = vadd.xlane.f32.xlu0 %v1612
  %v1644 = vpop.xlane.xlu0 %1643
  %1645 = vadd.xlane.f32.xlu0 %v1614
  %v1646 = vpop.xlane.xlu0 %1645
  %1647 = vadd.xlane.f32.xlu0 %v1616
  %v1648 = vpop.xlane.xlu0 %1647
  %1649 = vadd.xlane.f32.xlu0 %v1618
  %v1650 = vpop.xlane.xlu0 %1649
  %1651 = vadd.xlane.f32.xlu0 %v1620
  %v1652 = vpop.xlane.xlu0 %1651
  %1653 = vadd.xlane.f32.xlu0 %v1622
  %v1654 = vpop.xlane.xlu0 %1653
  %1655 = vadd.xlane.f32.xlu0 %v1624
  %v1656 = vpop.xlane.xlu0 %1655
  %1657 = vadd.xlane.f32.xlu0 %v1626
  %v1658 = vpop.xlane.xlu0 %1657
  %v1659 = vrcp.pop %v1628
  %v1660 = vrcp.pop %v1630
  %v1661 = vrcp.pop %v1632
  %v1662 = vrcp.pop %v1634
  %v1663 = vrcp.pop %v1636
  %v1664 = vrcp.pop %v1638
  %v1665 = vrcp.pop %v1640
  %v1666 = vrcp.pop %v1642
  %v1667 = vrcp.pop %v1644
  %v1668 = vrcp.pop %v1646
  %v1669 = vrcp.pop %v1648
  %v1670 = vrcp.pop %v1650
  %v1671 = vrcp.pop %v1652
  %v1672 = vrcp.pop %v1654
  %v1673 = vrcp.pop %v1656
  %v1674 = vrcp.pop %v1658
  %v1675 = vcombine.high %v14, %v14
  %1677 = vmatprep.subr.mxu0 0.0
  %1678 = vmatpush1.xpose.msra.mxu0 %v1675
  %1679 = vmatprep.subr.mxu0 0.0
  %1680 = vmatpush1.xpose.msra.mxu0 0.0
  %1681 = vmatprep.subr.mxu0 0.0
  %1682 = vmatpush1.xpose.msra.mxu0 0.0
  %1683 = vmatprep.subr.mxu0 0.0
  %1684 = vmatpush1.xpose.msra.mxu0 0.0
  %1685 = vmatprep.subr.mxu0 0.0
  %1686 = vmatpush1.xpose.msra.mxu0 0.0
  %1687 = vmatprep.subr.mxu0 0.0
  %1688 = vmatpush1.xpose.msra.mxu0 0.0
  %1689 = vmatprep.subr.mxu0 0.0
  %1690 = vmatpush1.xpose.msra.mxu0 0.0
  %1691 = vmatprep.subr.mxu0 0.0
  %1692 = vmatpush1.xpose.msra.mxu0 0.0
  %1693 = vmatprep.subr.mxu0 0.0
  %1694 = vmatpush1.xpose.msra.mxu0 0.0
  %1695 = vmatprep.subr.mxu0 0.0
  %1696 = vmatpush1.xpose.msra.mxu0 0.0
  %1697 = vmatprep.subr.mxu0 0.0
  %1698 = vmatpush1.xpose.msra.mxu0 0.0
  %1699 = vmatprep.subr.mxu0 0.0
  %1700 = vmatpush1.xpose.msra.mxu0 0.0
  %1701 = vmatprep.subr.mxu0 0.0
  %1702 = vmatpush1.xpose.msra.mxu0 0.0
  %1703 = vmatprep.subr.mxu0 0.0
  %1704 = vmatpush1.xpose.msra.mxu0 0.0
  %1705 = vmatprep.subr.mxu0 0.0
  %1706 = vmatpush1.xpose.msra.mxu0 0.0
  %1707 = vmatprep.subr.mxu0 0.0
  %1708 = vmatpush1.xpose.msra.mxu0 0.0
  %1709 = vmatprep.subr.mxu0 0.0
  %1710 = vmatpush1.xpose.msra.mxu0 0.0
  %1711 = vmatprep.subr.mxu0 0.0
  %1712 = vmatpush1.xpose.msra.mxu0 0.0
  %1713 = vmatprep.subr.mxu0 0.0
  %1714 = vmatpush1.xpose.msra.mxu0 0.0
  %1715 = vmatprep.subr.mxu0 0.0
  %1716 = vmatpush1.xpose.msra.mxu0 0.0
  %1717 = vmatprep.subr.mxu0 0.0
  %1718 = vmatpush1.xpose.msra.mxu0 0.0
  %1719 = vmatprep.subr.mxu0 0.0
  %1720 = vmatpush1.xpose.msra.mxu0 0.0
  %1721 = vmatprep.subr.mxu0 0.0
  %1722 = vmatpush1.xpose.msra.mxu0 0.0
  %1723 = vmatprep.subr.mxu0 0.0
  %1724 = vmatpush1.xpose.msra.mxu0 0.0
  %1725 = vmatprep.subr.mxu0 0.0
  %1726 = vmatpush1.xpose.msra.mxu0 0.0
  %1727 = vmatprep.subr.mxu0 0.0
  %1728 = vmatpush1.xpose.msra.mxu0 0.0
  %1729 = vmatprep.subr.mxu0 0.0
  %1730 = vmatpush1.xpose.msra.mxu0 0.0
  %1731 = vmatprep.subr.mxu0 0.0
  %1732 = vmatpush1.xpose.msra.mxu0 0.0
  %1733 = vmatprep.subr.mxu0 0.0
  %1734 = vmatpush1.xpose.msra.mxu0 0.0
  %1735 = vmatprep.subr.mxu0 0.0
  %1736 = vmatpush1.xpose.msra.mxu0 0.0
  %1737 = vmatprep.subr.mxu0 0.0
  %1738 = vmatpush1.xpose.msra.mxu0 0.0
  %1739 = vmatprep.subr.mxu0 0.0
  %1740 = vmatpush1.xpose.msra.mxu0 0.0
  %1741 = vmatprep.mubr.f32.mxu0 0.0
  %1742 = vmatmul.mubr.f32.gmra.mrb[0].mxu0 %v1596
  %v1743 = vpop.f32.mrb[0].mxu0
  %v1744 = vadd.f32 0.0, %v1743
  %v1745 = vpop.f32.mrb[0].mxu0
  %1746 = vmatprep.mubr.f32.mxu0 0.0
  %1747 = vmatmul.mubr.f32.gmra.mrb[0].mxu0 %v1598
  %v1748 = vpop.f32.mrb[0].mxu0
  %v1749 = vadd.f32 0.0, %v1748
  %v1750 = vpop.f32.mrb[0].mxu0
  %1751 = vmatprep.mubr.f32.mxu0 0.0
  %1752 = vmatmul.mubr.f32.gmra.mrb[0].mxu0 %v1600
  %v1753 = vpop.f32.mrb[0].mxu0
  %v1754 = vadd.f32 0.0, %v1753
  %v1755 = vpop.f32.mrb[0].mxu0
  %1756 = vmatprep.mubr.f32.mxu0 0.0
  %1757 = vmatmul.mubr.f32.gmra.mrb[0].mxu0 %v1602
  %v1758 = vpop.f32.mrb[0].mxu0
  %v1759 = vadd.f32 0.0, %v1758
  %v1760 = vpop.f32.mrb[0].mxu0
  %1761 = vmatprep.mubr.f32.mxu0 0.0
  %1762 = vmatmul.mubr.f32.gmra.mrb[0].mxu0 %v1604
  %v1763 = vpop.f32.mrb[0].mxu0
  %v1764 = vadd.f32 0.0, %v1763
  %v1765 = vpop.f32.mrb[0].mxu0
  %1766 = vmatprep.mubr.f32.mxu0 0.0
  %1767 = vmatmul.mubr.f32.gmra.mrb[0].mxu0 %v1606
  %v1768 = vpop.f32.mrb[0].mxu0
  %v1769 = vadd.f32 0.0, %v1768
  %v1770 = vpop.f32.mrb[0].mxu0
  %1771 = vmatprep.mubr.f32.mxu0 0.0
  %1772 = vmatmul.mubr.f32.gmra.mrb[0].mxu0 %v1608
  %v1773 = vpop.f32.mrb[0].mxu0
  %v1774 = vadd.f32 0.0, %v1773
  %v1775 = vpop.f32.mrb[0].mxu0
  %1776 = vmatprep.mubr.f32.mxu0 0.0
  %1777 = vmatmul.mubr.f32.gmra.mrb[0].mxu0 %v1610
  %v1778 = vpop.f32.mrb[0].mxu0
  %v1779 = vadd.f32 0.0, %v1778
  %v1780 = vpop.f32.mrb[0].mxu0
  %1781 = vmatprep.mubr.f32.mxu0 0.0
  %1782 = vmatmul.mubr.f32.gmra.mrb[0].mxu0 %v1612
  %v1783 = vpop.f32.mrb[0].mxu0
  %v1784 = vadd.f32 0.0, %v1783
  %v1785 = vpop.f32.mrb[0].mxu0
  %1786 = vmatprep.mubr.f32.mxu0 0.0
  %1787 = vmatmul.mubr.f32.gmra.mrb[0].mxu0 %v1614
  %v1788 = vpop.f32.mrb[0].mxu0
  %v1789 = vadd.f32 0.0, %v1788
  %v1790 = vpop.f32.mrb[0].mxu0
  %1791 = vmatprep.mubr.f32.mxu0 0.0
  %1792 = vmatmul.mubr.f32.gmra.mrb[0].mxu0 %v1616
  %v1793 = vpop.f32.mrb[0].mxu0
  %v1794 = vadd.f32 0.0, %v1793
  %v1795 = vpop.f32.mrb[0].mxu0
  %1796 = vmatprep.mubr.f32.mxu0 0.0
  %1797 = vmatmul.mubr.f32.gmra.mrb[0].mxu0 %v1618
  %v1798 = vpop.f32.mrb[0].mxu0
  %v1799 = vadd.f32 0.0, %v1798
  %v1800 = vpop.f32.mrb[0].mxu0
  %1801 = vmatprep.mubr.f32.mxu0 0.0
  %1802 = vmatmul.mubr.f32.gmra.mrb[0].mxu0 %v1620
  %v1803 = vpop.f32.mrb[0].mxu0
  %v1804 = vadd.f32 0.0, %v1803
  %v1805 = vpop.f32.mrb[0].mxu0
  %1806 = vmatprep.mubr.f32.mxu0 0.0
  %1807 = vmatmul.mubr.f32.gmra.mrb[0].mxu0 %v1622
  %v1808 = vpop.f32.mrb[0].mxu0
  %v1809 = vadd.f32 0.0, %v1808
  %v1810 = vpop.f32.mrb[0].mxu0
  %1811 = vmatprep.mubr.f32.mxu0 0.0
  %1812 = vmatmul.mubr.f32.gmra.mrb[0].mxu0 %v1624
  %v1813 = vpop.f32.mrb[0].mxu0
  %v1814 = vadd.f32 0.0, %v1813
  %v1815 = vpop.f32.mrb[0].mxu0
  %1816 = vmatprep.mubr.f32.mxu0 0.0
  %1817 = vmatmul.mubr.f32.gmra.mrb[0].mxu0 %v1626
  %v1818 = vpop.f32.mrb[0].mxu0
  %v1819 = vadd.f32 0.0, %v1818
  %v1820 = vpop.f32.mrb[0].mxu0
  %1821 = vdwg.mxu0
  %v1822 = vmul.f32 %v1744, %v1659
  %v1823 = vmul.f32 %v1749, %v1660
  %v1824 = vmul.f32 %v1754, %v1661
  %v1825 = vmul.f32 %v1759, %v1662
  %v1826 = vmul.f32 %v1764, %v1663
  %v1827 = vmul.f32 %v1769, %v1664
  %v1828 = vmul.f32 %v1774, %v1665
  %v1829 = vmul.f32 %v1779, %v1666
  %v1830 = vmul.f32 %v1784, %v1667
  %v1831 = vmul.f32 %v1789, %v1668
  %v1832 = vmul.f32 %v1794, %v1669
  %v1833 = vmul.f32 %v1799, %v1670
  %v1834 = vmul.f32 %v1804, %v1671
  %v1835 = vmul.f32 %v1809, %v1672
  %v1836 = vmul.f32 %v1814, %v1673
  %v1837 = vmul.f32 %v1819, %v1674
  %v1838 = vsel %vm1061, %v14, 0.0
  %1839 = vadd.xlane.f32.xlu0 %v1838
  %v1840 = vpop.xlane.xlu0 %1839
  %v1841 = vmul.f32 %v1840, 0.007812422
  %v1842 = vsel %vm1066, %v1822, 0.0
  %v1843 = vsel %vm1066, %v1823, 0.0
  %v1844 = vadd.f32 %v1842, %v1843
  %v1845 = vsel %vm1066, %v1824, 0.0
  %v1846 = vadd.f32 %v1844, %v1845
  %v1847 = vsel %vm1066, %v1825, 0.0
  %v1848 = vadd.f32 %v1846, %v1847
  %v1849 = vsel %vm1066, %v1826, 0.0
  %v1850 = vadd.f32 %v1848, %v1849
  %v1851 = vsel %vm1066, %v1827, 0.0
  %v1852 = vadd.f32 %v1850, %v1851
  %v1853 = vsel %vm1066, %v1828, 0.0
  %v1854 = vadd.f32 %v1852, %v1853
  %v1855 = vsel %vm1066, %v1829, 0.0
  %v1856 = vadd.f32 %v1854, %v1855
  %v1857 = vsel %vm1066, %v1830, 0.0
  %v1858 = vadd.f32 %v1856, %v1857
  %v1859 = vsel %vm1066, %v1831, 0.0
  %v1860 = vadd.f32 %v1858, %v1859
  %v1861 = vsel %vm1066, %v1832, 0.0
  %v1862 = vadd.f32 %v1860, %v1861
  %v1863 = vsel %vm1066, %v1833, 0.0
  %v1864 = vadd.f32 %v1862, %v1863
  %v1865 = vsel %vm1066, %v1834, 0.0
  %v1866 = vadd.f32 %v1864, %v1865
  %v1867 = vsel %vm1066, %v1835, 0.0
  %v1868 = vadd.f32 %v1866, %v1867
  %v1869 = vsel %vm1066, %v1836, 0.0
  %v1870 = vadd.f32 %v1868, %v1869
  %v1871 = vsel %vm1066, %v1837, 0.0
  %v1872 = vadd.f32 %v1870, %v1871
  %v1873 = vrot.slane %v1872, 4
  %v1874 = vadd.f32 %v1872, %v1873
  %v1875 = vrot.slane %v1874, 2
  %v1876 = vadd.f32 %v1874, %v1875
  %v1877 = vrot.slane %v1876, 1
  %v1878 = vadd.f32 %v1876, %v1877
  %v1879 = vmul.f32 %v1878, 0.007812422
  %v1880 = vsub.f32 %v14, %v1841
  %v1881 = vsub.f32 %v1822, %v1879
  %v1882 = vsub.f32 %v1823, %v1879
  %v1883 = vsub.f32 %v1824, %v1879
  %v1884 = vsub.f32 %v1825, %v1879
  %v1885 = vsub.f32 %v1826, %v1879
  %v1886 = vsub.f32 %v1827, %v1879
  %v1887 = vsub.f32 %v1828, %v1879
  %v1888 = vsub.f32 %v1829, %v1879
  %v1889 = vsub.f32 %v1830, %v1879
  %v1890 = vsub.f32 %v1831, %v1879
  %v1891 = vsub.f32 %v1832, %v1879
  %v1892 = vsub.f32 %v1833, %v1879
  %v1893 = vsub.f32 %v1834, %v1879
  %v1894 = vsub.f32 %v1835, %v1879
  %v1895 = vsub.f32 %v1836, %v1879
  %v1896 = vsub.f32 %v1837, %v1879
  %v1897 = vmul.f32 %v1881, 0.007812422
  %v1898 = vmul.f32 %v1882, 0.007812422
  %v1899 = vmul.f32 %v1883, 0.007812422
  %v1900 = vmul.f32 %v1884, 0.007812422
  %v1901 = vmul.f32 %v1885, 0.007812422
  %v1902 = vmul.f32 %v1886, 0.007812422
  %v1903 = vmul.f32 %v1887, 0.007812422
  %v1904 = vmul.f32 %v1888, 0.007812422
  %v1905 = vmul.f32 %v1889, 0.007812422
  %v1906 = vmul.f32 %v1890, 0.007812422
  %v1907 = vmul.f32 %v1891, 0.007812422
  %v1908 = vmul.f32 %v1892, 0.007812422
  %v1909 = vmul.f32 %v1893, 0.007812422
  %v1910 = vmul.f32 %v1894, 0.007812422
  %v1911 = vmul.f32 %v1895, 0.007812422
  %v1912 = vmul.f32 %v1896, 0.007812422
  %1913 = vmatprep.subr.mxu0 0.0
  %1914 = vmatpush1.msra.mxu0 %v1897
  %1915 = vmatprep.subr.mxu0 0.0
  %1916 = vmatpush1.msra.mxu0 %v1898
  %1917 = vmatprep.subr.mxu0 0.0
  %1918 = vmatpush1.msra.mxu0 %v1899
  %1919 = vmatprep.subr.mxu0 0.0
  %1920 = vmatpush1.msra.mxu0 %v1900
  %1921 = vmatprep.subr.mxu0 0.0
  %1922 = vmatpush1.msra.mxu0 %v1901
  %1923 = vmatprep.subr.mxu0 0.0
  %1924 = vmatpush1.msra.mxu0 %v1902
  %1925 = vmatprep.subr.mxu0 0.0
  %1926 = vmatpush1.msra.mxu0 %v1903
  %1927 = vmatprep.subr.mxu0 0.0
  %1928 = vmatpush1.msra.mxu0 %v1904
  %1929 = vmatprep.subr.mxu0 0.0
  %1930 = vmatpush1.msra.mxu0 %v1905
  %1931 = vmatprep.subr.mxu0 0.0
  %1932 = vmatpush1.msra.mxu0 %v1906
  %1933 = vmatprep.subr.mxu0 0.0
  %1934 = vmatpush1.msra.mxu0 %v1907
  %1935 = vmatprep.subr.mxu0 0.0
  %1936 = vmatpush1.msra.mxu0 %v1908
  %1937 = vmatprep.subr.mxu0 0.0
  %1938 = vmatpush1.msra.mxu0 %v1909
  %1939 = vmatprep.subr.mxu0 0.0
  %1940 = vmatpush1.msra.mxu0 %v1910
  %1941 = vmatprep.subr.mxu0 0.0
  %1942 = vmatpush1.msra.mxu0 %v1911
  %1943 = vmatprep.subr.mxu0 0.0
  %1944 = vmatpush1.msra.mxu0 %v1912
  %1945 = vmatprep.subr.mxu0 0.0
  %1946 = vmatpush1.msra.mxu0 0.0
  %1947 = vmatprep.subr.mxu0 0.0
  %1948 = vmatpush1.msra.mxu0 0.0
  %1949 = vmatprep.subr.mxu0 0.0
  %1950 = vmatpush1.msra.mxu0 0.0
  %1951 = vmatprep.subr.mxu0 0.0
  %1952 = vmatpush1.msra.mxu0 0.0
  %1953 = vmatprep.subr.mxu0 0.0
  %1954 = vmatpush1.msra.mxu0 0.0
  %1955 = vmatprep.subr.mxu0 0.0
  %1956 = vmatpush1.msra.mxu0 0.0
  %1957 = vmatprep.subr.mxu0 0.0
  %1958 = vmatpush1.msra.mxu0 0.0
  %1959 = vmatprep.subr.mxu0 0.0
  %1960 = vmatpush1.msra.mxu0 0.0
  %1961 = vmatprep.subr.mxu0 0.0
  %1962 = vmatpush1.msra.mxu0 0.0
  %1963 = vmatprep.subr.mxu0 0.0
  %1964 = vmatpush1.msra.mxu0 0.0
  %1965 = vmatprep.subr.mxu0 0.0
  %1966 = vmatpush1.msra.mxu0 0.0
  %1967 = vmatprep.subr.mxu0 0.0
  %1968 = vmatpush1.msra.mxu0 0.0
  %1969 = vmatprep.subr.mxu0 0.0
  %1970 = vmatpush1.msra.mxu0 0.0
  %1971 = vmatprep.subr.mxu0 0.0
  %1972 = vmatpush1.msra.mxu0 0.0
  %1973 = vmatprep.subr.mxu0 0.0
  %1974 = vmatpush1.msra.mxu0 0.0
  %1975 = vmatprep.subr.mxu0 0.0
  %1976 = vmatpush1.msra.mxu0 0.0
  %1977 = vmatprep.mubr.f32.mxu0 0.0
  %1978 = vmatmul.mubr.f32.gmra.mrb[0].mxu0 %v1880
  %v1979 = vpop.f32.mrb[0].mxu0
  %v1980 = vadd.f32 0.0, %v1979
  %v1981 = vpop.f32.mrb[0].mxu0
  %1982 = vdwg.mxu0
  %1983 = vxpose.xlu0.b32.start [1/16] %v1822, 128
  %1984 = vxpose.xlu0.b32.cont [2/16] %v1823, 128
  %1985 = vxpose.xlu0.b32.cont [3/16] %v1824, 128
  %1986 = vxpose.xlu0.b32.cont [4/16] %v1825, 128
  %1987 = vxpose.xlu0.b32.cont [5/16] %v1826, 128
  %1988 = vxpose.xlu0.b32.cont [6/16] %v1827, 128
  %1989 = vxpose.xlu0.b32.cont [7/16] %v1828, 128
  %1990 = vxpose.xlu0.b32.cont [8/16] %v1829, 128
  %1991 = vxpose.xlu0.b32.cont [9/16] %v1830, 128
  %1992 = vxpose.xlu0.b32.cont [10/16] %v1831, 128
  %1993 = vxpose.xlu0.b32.cont [11/16] %v1832, 128
  %1994 = vxpose.xlu0.b32.cont [12/16] %v1833, 128
  %1995 = vxpose.xlu0.b32.cont [13/16] %v1834, 128
  %1996 = vxpose.xlu0.b32.cont [14/16] %v1835, 128
  %1997 = vxpose.xlu0.b32.cont [15/16] %v1836, 128
  %1998 = vxpose.xlu0.b32.end [16/16] %v1837, 128
  %v1999 = vpop.trf.xlu0
  %v2000 = vpop.trf.xlu0
  %v2001 = vpop.trf.xlu0
  %v2002 = vpop.trf.xlu0
  %v2003 = vpop.trf.xlu0
  %v2004 = vpop.trf.xlu0
  %v2005 = vpop.trf.xlu0
  %v2006 = vpop.trf.xlu0
  %v2007 = vpop.trf.xlu0
  %v2008 = vpop.trf.xlu0
  %v2009 = vpop.trf.xlu0
  %v2010 = vpop.trf.xlu0
  %v2011 = vpop.trf.xlu0
  %v2012 = vpop.trf.xlu0
  %v2013 = vpop.trf.xlu0
  %v2014 = vpop.trf.xlu0
  %s2015 = scalar_lea.vmem %s2, 4
  %2016 = vst [vmem:[%s2015] sm:$0x7] %v1999
  %2017 = vxpose.xlu0.b32.start [1/16] %v1879, 128
  %2018 = vxpose.xlu0.b32.cont [2/16] 0.0, 128
  %2019 = vxpose.xlu0.b32.cont [3/16] 0.0, 128
  %2020 = vxpose.xlu0.b32.cont [4/16] 0.0, 128
  %2021 = vxpose.xlu0.b32.cont [5/16] 0.0, 128
  %2022 = vxpose.xlu0.b32.cont [6/16] 0.0, 128
  %2023 = vxpose.xlu0.b32.cont [7/16] 0.0, 128
  %2024 = vxpose.xlu0.b32.cont [8/16] 0.0, 128
  %2025 = vxpose.xlu0.b32.cont [9/16] 0.0, 128
  %2026 = vxpose.xlu0.b32.cont [10/16] 0.0, 128
  %2027 = vxpose.xlu0.b32.cont [11/16] 0.0, 128
  %2028 = vxpose.xlu0.b32.cont [12/16] 0.0, 128
  %2029 = vxpose.xlu0.b32.cont [13/16] 0.0, 128
  %2030 = vxpose.xlu0.b32.cont [14/16] 0.0, 128
  %2031 = vxpose.xlu0.b32.cont [15/16] 0.0, 128
  %2032 = vxpose.xlu0.b32.end [16/16] 0.0, 128
  %v2033 = vpop.trf.xlu0
  %v2034 = vpop.trf.xlu0
  %v2035 = vpop.trf.xlu0
  %v2036 = vpop.trf.xlu0
  %v2037 = vpop.trf.xlu0
  %v2038 = vpop.trf.xlu0
  %v2039 = vpop.trf.xlu0
  %v2040 = vpop.trf.xlu0
  %v2041 = vpop.trf.xlu0
  %v2042 = vpop.trf.xlu0
  %v2043 = vpop.trf.xlu0
  %v2044 = vpop.trf.xlu0
  %v2045 = vpop.trf.xlu0
  %v2046 = vpop.trf.xlu0
  %v2047 = vpop.trf.xlu0
  %v2048 = vpop.trf.xlu0
  %2050 = vrot.lane.b32.xlu0 %v2033, 1
  %v2051 = vpop.permute.xlu0 %2050
  %2054 = vrot.lane.b32.xlu0 %v1980, 2
  %v2055 = vpop.permute.xlu0 %2054
  %v2057 = vsel %vm1281, %v1841, %v2051
  %v2058 = vsel %vm1283, %v2057, %v2055
  %v2059 = vsel %vm1285, %v2058, 0.0
  %s2060 = scalar_lea.vmem %s3, 4
  %2061 = vst.msk [vmem:[%s2060] sm:$0x7] %vm1287, %v2059
  // Predicated region
  $region10: #{vcrnet_forward.1} parent=0 // pred_check
    _
  $region11: #{vcrnet_forward.1} parent=0 // pred_check_branch
    %2063 = sbr.rel (0) target = $region13
  $region12: #{vcrnet_forward.1} parent=0 // pred_region
    _
  $region13: #{vcrnet_forward.1} parent=0 // pred_fallthru
    _
  // Predicated region
  $region14: #{vcrnet_forward.1} parent=0 // pred_check
    _
  $region15: #{vcrnet_forward.1} parent=0 // pred_check_branch
    %2065 = sbr.rel (0) target = $region17
  $region16: #{vcrnet_forward.1} parent=0 // pred_region
    _
  $region17: #{vcrnet_forward.1} parent=0 // pred_fallthru
    _
  // Predicated region
  $region18: #{vcrnet_forward.1} parent=0 // pred_check
    _
  $region19: #{vcrnet_forward.1} parent=0 // pred_check_branch
    %2067 = sbr.rel (0) target = $region21
  $region20: #{vcrnet_forward.1} parent=0 // pred_region
    _
  $region21: #{vcrnet_forward.1} parent=0 // pred_fallthru
    _
  // Predicated region
  $region22: #{vcrnet_forward.1} parent=0 // pred_check
    _
  $region23: #{vcrnet_forward.1} parent=0 // pred_check_branch
    %2069 = sbr.rel (0) target = $region25
  $region24: #{vcrnet_forward.1} parent=0 // pred_region
    _
  $region25: #{vcrnet_forward.1} parent=0 // pred_fallthru
    _

// kernel: custom-call.16
$region0: #{custom-call.16}
  %s0 = inlined_call_operand.vmem [shape: f32[2,3,3], index: 0, kind: input, shape index: {}]
  %s1 = inlined_call_operand.vmem [shape: f32[2,3,3], index: 1, kind: output, shape index: {0}]
  %s2 = inlined_call_operand.vmem [shape: f32[2,3], index: 2, kind: output, shape index: {1}]
  %3 = xla_tuple %s1, %s2
  $region1: #{custom-call.16} parent=0
    #allocation0 [shape = 'u8[4096]{0}', space=vmem, size = 0x1000, scoped, tag = 'operand span for operand 0']
    #allocation1 [shape = 'u8[4096]{0}', space=vmem, size = 0x1000, scoped, tag = 'packed  for operand 0']
    #allocation2 [shape = 'u8[4096]{0}', space=vmem, size = 0x1000, scoped, tag = 'operand span for operand 1']
    #allocation3 [shape = 'u8[4096]{0}', space=vmem, size = 0x1000, scoped, tag = 'packed  for operand 1']
    #allocation4 [shape = 'u8[4096]{0}', space=vmem, size = 0x1000, scoped, tag = 'operand span for operand 2']
    #allocation5 [shape = 'u8[2048]{0}', space=vmem, size = 0x800, scoped, tag = 'packed  for operand 2']
    loop: start=0, step=1, limit=4
    $region2: #{custom-call.16} parent=1 // loop_pre_header
      _
    $region3: #{custom-call.16} parent=1 // loop_header
      %s5 = sphi 0, %s9
      %p6 = scmp.ge.s32.totalorder %s5, 4
      %s12 = sphi 0, %s31
      %s13 = sphi 0, %s27
      %s14 = sphi 0, %s23
      %s15 = sphi 0, %s12
      %s16 = sphi 0, %s13
      %s17 = sphi 0, %s14
      %s18 = sphi 0, %s15
      %s19 = sphi 0, %s16
      %s20 = sphi 0, %s17
      %s46 = sphi 0, %s48
      %s49 = sphi 0, %s46
      %s50 = sphi 0, %s49
      %s66 = sphi 0, %s50
    $region4: #{custom-call.16} parent=1 // loop_header_branch
      %8 = sbr.rel (%p6) target = $region8
    $region5: #{custom-call.16} parent=1 // loop_body
      %s10 = ssub.s32 %s5, 1
      %s11 = ssub.s32 %s5, 2
      %s21 = sadd.s32 1, %s14
      %p22 = scmp.ge.s32.totalorder %s21, 1
      %s23 = scalar_select %p22, 0, %s21
      %s24 = sadd.s32 1, %s13
      %s25 = scalar_select %p22, %s24, %s13
      %p26 = scmp.ge.s32.totalorder %s25, 1
      %s27 = scalar_select %p26, 0, %s25
      %s28 = sadd.s32 1, %s12
      %s29 = scalar_select %p26, %s28, %s12
      %p30 = scmp.ge.s32.totalorder %s29, 2
      %s31 = scalar_select %p30, 0, %s29
      %p32 = scmp.lt.s32.totalorder %s12, 0
      %s33 = ssub.s32 0, %s12
      %s34 = scalar_select %p32, %s33, %s12
      %s35 = sshrl.u32 %s34, 3
      %s36 = ssub.s32 0, %s35
      %s37 = scalar_select %p32, %s36, %s35
      %p38 = scmp.lt.s32.totalorder %s31, 0
      %s39 = ssub.s32 0, %s31
      %s40 = scalar_select %p38, %s39, %s31
      %s41 = sshrl.u32 %s40, 3
      %s42 = ssub.s32 0, %s41
      %s43 = scalar_select %p38, %s42, %s41
      %s44 = ssub.s32 %s37, %s43
      %p45 = scmp.eq.s32.totalorder %s44, 0
      %s47 = sadd.s32 %s46, 1
      %s48 = scalar_select %p45, %s46, %s47
      %p51 = pneg %p45
      %p52 = scmp.eq.s32.totalorder %s5, 1
      %p53 = por %p51, %p52
      %p54 = scmp.ne.s32.totalorder %s46, %s49
      %p55 = scmp.eq.s32.totalorder %s5, 0
      %p56 = por %p54, %p55
      %p57 = scmp.ne.s32.totalorder %s46, %s49
      %p58 = scmp.eq.s32.totalorder %s10, 1
      %p59 = por %p57, %p58
      %p60 = scmp.ne.s32.totalorder %s49, %s50
      %p61 = scmp.eq.s32.totalorder %s10, 0
      %p62 = por %p60, %p61
      %p63 = scmp.ne.s32.totalorder %s49, %s50
      %p64 = scmp.eq.s32.totalorder %s11, 1
      %p65 = por %p63, %p64
      %p67 = scmp.ne.s32.totalorder %s50, %s66
      %p68 = scmp.eq.s32.totalorder %s11, 0
      %p69 = por %p67, %p68
      %p70 = scmp.le.s32.totalorder 1, %s5
      %p71 = scmp.lt.s32.totalorder %s5, 3
      %p72 = pnand %p70, %p71
      %p73 = pneg %p72
      // Predicated region
      $region9: #{custom-call.16} parent=5 // pred_check
        _
      $region10: #{custom-call.16} parent=5 // pred_check_branch
        %75 = sbr.rel (%p72) target = $region12
      $region11: #{custom-call.16} parent=5 // pred_region
        %s76 = ssub.s32 %s5, 1
      $region12: #{custom-call.16} parent=5 // pred_fallthru
        _
      %p77 = scmp.lt.s32.totalorder %s5, 2
      // Predicated region
      $region13: #{custom-call.16} parent=5 // pred_check
        %p78 = pneg %p77
      $region14: #{custom-call.16} parent=5 // pred_check_branch
        %80 = sbr.rel (%p78) target = $region16
      $region15: #{custom-call.16} parent=5 // pred_region
        %s81 = sand.u32 %s5, 1
        %s82 = sand.u32 %s5, 1
        %s83 = smul.addr %s82, 4
        %s84 = scalar_lea.vmem [#allocation1], %s83
        %s85 = sadd.s32 %s14, %s13
        %s86 = sadd.s32 %s85, %s12
        %s87 = smul.addr %s86, 4
        %s88 = scalar_lea.vmem %s0, %s87
        // Predicated region
        $region17: #{custom-call.16} parent=15 // pred_check
          _
        $region18: #{custom-call.16} parent=15 // pred_check_branch
          %90 = sbr.rel (0) target = $region20
        $region19: #{custom-call.16} parent=15 // pred_region
          // Predicated region
          $region21: #{custom-call.16} parent=19 // pred_check
            _
          $region22: #{custom-call.16} parent=19 // pred_check_branch
            %92 = sbr.rel target = $region24
          $region23: #{custom-call.16} parent=19 // pred_region
            // Predicated region
            $region36: #{custom-call.16} parent=23 // pred_check
              _
            $region37: #{custom-call.16} parent=23 // pred_check_branch
              %107 = sbr.rel (0) target = $region39
            $region38: #{custom-call.16} parent=23 // pred_region
              loop: start=0, step=1, limit=1
              $region40: #{custom-call.16} parent=38 // loop_pre_header
                _
              $region41: #{custom-call.16} parent=38 // loop_header
                %s110 = sphi 0, %s114
                %p111 = scmp.ge.s32.totalorder %s110, 1
                %s115 = sphi %s88, %s88
                %s116 = sphi %s84, %s84
              $region42: #{custom-call.16} parent=38 // loop_header_branch
                %113 = sbr.rel (%p111) target = $region46
              $region43: #{custom-call.16} parent=38 // loop_body
                %v117 = vld [vmem:[%s115] sm:$0xf]
                %118 = vst [vmem:[%s116] sm:$0xf] %v117
              $region44: #{custom-call.16} parent=38 // loop_footer
                %s114 = sadd.s32 1, %s110
              $region45: #{custom-call.16} parent=38 // loop_footer_branch
                %109 = sbr.rel target = $region41
              $region46: #{custom-call.16} parent=38 // loop_exit
                _
            $region39: #{custom-call.16} parent=23 // pred_fallthru
              _
          $region24: #{custom-call.16} parent=19 // pred_fallthru
            _
          // Predicated region
          $region25: #{custom-call.16} parent=19 // pred_check
            _
          $region26: #{custom-call.16} parent=19 // pred_check_branch
            %94 = sbr.rel (0) target = $region28
          $region27: #{custom-call.16} parent=19 // pred_region
            loop: start=0, step=1, limit=1
            $region29: #{custom-call.16} parent=27 // loop_pre_header
              _
            $region30: #{custom-call.16} parent=27 // loop_header
              %s97 = sphi 0, %s101
              %p98 = scmp.ge.s32.totalorder %s97, 1
              %s102 = sphi %s88, %s88
              %s103 = sphi %s84, %s84
            $region31: #{custom-call.16} parent=27 // loop_header_branch
              %100 = sbr.rel (%p98) target = $region35
            $region32: #{custom-call.16} parent=27 // loop_body
              %v104 = vld [vmem:[%s102] sm:$0xf]
              %105 = vst [vmem:[%s103] sm:$0xf] %v104
            $region33: #{custom-call.16} parent=27 // loop_footer
              %s101 = sadd.s32 1, %s97
            $region34: #{custom-call.16} parent=27 // loop_footer_branch
              %96 = sbr.rel target = $region30
            $region35: #{custom-call.16} parent=27 // loop_exit
              _
          $region28: #{custom-call.16} parent=19 // pred_fallthru
            _
        $region20: #{custom-call.16} parent=15 // pred_fallthru
          _
        %119 = vnop
      $region16: #{custom-call.16} parent=5 // pred_fallthru
        _
      %p120 = scmp.le.s32.totalorder 1, %s5
      %p121 = scmp.lt.s32.totalorder %s5, 3
      %p122 = pnand %p120, %p121
      %p123 = pneg %p122
      // Predicated region
      $region47: #{custom-call.16} parent=5 // pred_check
        _
      $region48: #{custom-call.16} parent=5 // pred_check_branch
        %125 = sbr.rel (%p122) target = $region50
      $region49: #{custom-call.16} parent=5 // pred_region
        #allocation6 [shape = 'f32[3,128]{1,0}', space=vmem, size = 0x1000, scoped, tag = 'scratch for Householder reflectors']
        %s126 = ssub.s32 %s5, 1
        %s127 = sand.u32 %s10, 1
        %s128 = sand.u32 %s10, 1
        %s129 = smul.addr %s128, 4
        %s130 = scalar_lea.vmem [#allocation1], %s129
        %s131 = sand.u32 %s10, 1
        %s132 = sand.u32 %s10, 1
        %s133 = smul.addr %s132, 4
        %s134 = scalar_lea.vmem [#allocation1], %s133
        %s135 = sand.u32 %s10, 1
        %s136 = sand.u32 %s10, 1
        %s137 = smul.addr %s136, 4
        %s138 = scalar_lea.vmem [#allocation3], %s137
        %p139 = pneg %p62
        %p140 = pneg %p59
        %s141 = sand.u32 %s49, 1
        %s142 = sand.u32 %s49, 1
        %s143 = smul.addr %s142, 2
        %s144 = scalar_lea.vmem [#allocation5], %s143
        %s146 = sshllo.u32 0, 4
        %v147 = vld [vmem:[%s134] sm:%s146]
        %148 = vst [vmem:[#allocation0] sm:%s146] %v147
        %p149 = scmp.lt.s32.totalorder %s15, 0
        %s150 = ssub.s32 0, %s15
        %s151 = scalar_select %p149, %s150, %s15
        %s152 = sshrl.u32 %s151, 3
        %s153 = ssub.s32 0, %s152
        %s154 = scalar_select %p149, %s153, %s152
        %s155 = sand.u32 %s15, 7
        %s156 = scalar_lea.vmem [#allocation4], %s155
        %v157 = vld [vmem:[#allocation0] sm:$0xff]
        %158 = vst [vmem:[#allocation2] sm:$0xff] %v157
        %159 = vst [vmem:[%s156] sm:$0x1] 0.0
        loop: start=0, step=1, limit=3
        $region51: #{custom-call.16} parent=49 // loop_pre_header
          _
        $region52: #{custom-call.16} parent=49 // loop_header
          %s161 = sphi 0, %s165
          %p162 = scmp.ge.s32.totalorder %s161, 3
        $region53: #{custom-call.16} parent=49 // loop_header_branch
          %164 = sbr.rel (%p162) target = $region57
        $region54: #{custom-call.16} parent=49 // loop_body
          %v166 = vld [vmem:[#allocation2] sm:$0xff]
          %v167 = vlaneseq
          %v168 = vshrl.u32 %v167, 7
          %v170 = vstv %s161
          %vm171 = vcmp.gt.s32.totalorder %v168, %v170
          %vm172 = vcmp.lt.s32.totalorder %v168, 3
          %vm173 = vmand %vm171, %vm172
          %v174 = vsel %vm173, %v166, 0.0
          %v175 = vmul.f32 %v174, %v174
          %v176 = vrot.slane %v175, 4
          %v177 = vadd.f32 %v175, %v176
          %v178 = vrot.slane %v177, 2
          %v179 = vadd.f32 %v177, %v178
          %v180 = vrot.slane %v179, 1
          %v181 = vadd.f32 %v179, %v180
          %v182 = vrsqrt.pop %v181
          %v183 = vmul.f32 %v181, %v182
          %vm184 = vcmp.eq.f32.partialorder %v181, inf
          %v185 = vsel %vm184, %v181, %v183
          %vm186 = vcmp.eq.f32.partialorder %v181, 0.0
          %v187 = vand.u32 %v181, 2147483648
          %v188 = vsel %vm186, %v187, %v185
          %vm189 = vcmp.eq.f32.partialorder %v181, 0.0
          %s190 = sshrl.u32 %s161, 3
          %s191 = sand.u32 %s161, 7
          %s192 = smul.addr %s190, 8
          %s193 = sadd.s32 %s191, %s192
          %s194 = scalar_lea.vmem [#allocation2], %s193
          %v195 = vld [vmem:[%s194] ss:$0 sm:$0xff]
          %v196 = vand.u32 2147483647, %v195
          %v197 = vmax.f32 %v196, 0.0
          %v198 = vand.u32 2147483647, %v188
          %v199 = vmax.f32 %v197, %v198
          %v200 = vrcp.pop %v199
          %v201 = vmul.f32 %v196, %v200
          %v202 = vmul.f32 %v201, %v201
          %v203 = vrcp.pop %v199
          %v204 = vmul.f32 0.0, %v203
          %v205 = vmul.f32 %v204, %v204
          %v206 = vadd.f32 %v202, %v205
          %v207 = vrcp.pop %v199
          %v208 = vmul.f32 %v198, %v207
          %v209 = vmul.f32 %v208, %v208
          %v210 = vadd.f32 %v206, %v209
          %vm211 = vcmp.eq.f32.partialorder %v199, 0.0
          %v212 = vrsqrt.pop %v210
          %v213 = vmul.f32 %v210, %v212
          %vm214 = vcmp.eq.f32.partialorder %v210, inf
          %v215 = vsel %vm214, %v210, %v213
          %vm216 = vcmp.eq.f32.partialorder %v210, 0.0
          %v217 = vand.u32 %v210, 2147483648
          %v218 = vsel %vm216, %v217, %v215
          %v219 = vmul.f32 %v199, %v218
          %v220 = vsel %vm211, 0.0, %v219
          %vm221 = vcmp.lt.f32.partialorder %v195, 0.0
          %v222 = vxor.u32 %v220, 2147483648
          %v223 = vsel %vm221, %v220, %v222
          %v224 = vsub.f32 %v223, %v195
          %v225 = vrcp.pop %v223
          %v226 = vmul.f32 %v224, %v225
          %v227 = vsel %vm189, %v195, %v223
          %v228 = vsel %vm189, 0.0, %v226
          %v229 = vsub.f32 %v195, %v227
          %s230 = smov [#allocation2]
          %v231 = vlaneseq
          %v232 = vshrl.u32 %v231, 7
          %v233 = vmov %v232
          %v234 = vld [vmem:[%s230] sm:$0xff]
          %v236 = vstv %s161
          %vm237 = vcmp.gt.s32.totalorder %v233, %v236
          %vm238 = vcmp.lt.s32.totalorder %v233, 3
          %vm239 = vmand %vm237, %vm238
          %v240 = vsel %vm239, %v234, 0.0
          %v241 = vrcp.pop %v229
          %v242 = vmul.f32 %v240, %v241
          %v243 = vsel %vm189, 0.0, %v242
          %v244 = vstv %s161
          %v245 = vlaneseq
          %v246 = vand.u32 %v245, 127
          %vm247 = vcmp.eq.s32.totalorder %v246, %v244
          %v248 = vsel %vm247, %v243, 0.0
          %249 = vadd.xlane.f32.xlu0 %v248
          %v250 = vpop.xlane.xlu0 %249
          %251 = vst [vmem:[#allocation6] sm:$0xff] %v250
          %s252 = scalar_lea.vmem [#allocation6], %s161
          %253 = vst [vmem:[%s252] sm:$0x1] 1.0
          %v254 = vstv %s161
          %v255 = vlaneseq
          %v256 = vand.u32 %v255, 127
          %vm257 = vcmp.eq.s32.totalorder %v256, %v254
          %v258 = vsel %vm257, %v228, 0.0
          %259 = vadd.xlane.f32.xlu0 %v258
          %v260 = vpop.xlane.xlu0 %259
          %v261 = vstv %s161
          %v262 = vlaneseq
          %v263 = vand.u32 %v262, 127
          %vm264 = vcmp.eq.s32.totalorder %v263, %v261
          %v265 = vld [vmem:[%s156] ss:$0 sm:$0xff]
          %v266 = vsel %vm264, %v260, %v265
          %267 = vst [vmem:[%s156] sm:$0x1] %v266
          %s268 = smov [#allocation2]
          %s269 = smov [#allocation6]
          %v270 = vlaneseq
          %v271 = vshrl.u32 %v270, 7
          %v272 = vmov %v271
          %v274 = vld [vmem:[%s269] sm:$0xff]
          %v275 = vld [vmem:[%s268] sm:$0xff]
          %v276 = vmul.f32 %v274, %v275
          %vm277 = vcmp.lt.s32.totalorder %v272, 3
          %v278 = vsel %vm277, %v276, 0.0
          %v279 = vrot.slane %v278, 4
          %v280 = vadd.f32 %v278, %v279
          %v281 = vrot.slane %v280, 2
          %v282 = vadd.f32 %v280, %v281
          %v283 = vrot.slane %v282, 1
          %v284 = vadd.f32 %v282, %v283
          %s285 = smov %s268
          %s286 = smov %s269
          %v287 = vlaneseq
          %v288 = vshrl.u32 %v287, 7
          %v289 = vmov %v288
          %v290 = vmul.f32 %v284, %v260
          %v292 = vlaneseq
          %v293 = vand.u32 %v292, 127
          %v294 = vld [vmem:[%s286] sm:$0xff]
          %v295 = vmul.f32 %v294, %v290
          %v296 = vld [vmem:[%s285] sm:$0xff]
          %v297 = vstv %s161
          %vm298 = vcmp.gt.s32.totalorder %v293, %v297
          %v299 = vsub.f32 %v296, %v295
          %v300 = vsel %vm298, %v299, %v296
          %v301 = vstv %s161
          %v302 = vlaneseq
          %v303 = vand.u32 %v302, 127
          %vm304 = vcmp.eq.s32.totalorder %v303, %v301
          %v305 = vstv %s161
          %vm306 = vcmp.ge.s32.totalorder %v289, %v305
          %vm307 = vmand %vm304, %vm306
          %v308 = vsel %vm307, %v294, %v300
          %309 = vst [vmem:[%s285] sm:$0xff] %v308
          %s310 = scalar_lea.vmem %s285, %s161
          %v311 = vld [vmem:[%s310] ss:$0 sm:$0xff]
          %v312 = vstv %s161
          %v313 = vlaneseq
          %v314 = vand.u32 %v313, 127
          %vm315 = vcmp.eq.s32.totalorder %v314, %v312
          %v316 = vsel %vm315, %v227, %v311
          %317 = vst [vmem:[%s310] sm:$0x1] %v316
        $region55: #{custom-call.16} parent=49 // loop_footer
          %s165 = sadd.s32 1, %s161
        $region56: #{custom-call.16} parent=49 // loop_footer_branch
          %160 = sbr.rel target = $region52
        $region57: #{custom-call.16} parent=49 // loop_exit
          _
        %s319 = sshllo.u32 0, 4
        %v321 = vld [vmem:[#allocation2] sm:%s319]
        %s322 = sshllo.u32 0, 4
        %323 = vst [vmem:[%s138] sm:%s322] %v321
        %s325 = sshllo.u32 0, 2
        %v327 = vld [vmem:[#allocation4] sm:%s325]
        %s328 = sshllo.u32 0, 2
        %329 = vst [vmem:[%s144] sm:%s328] %v327
        %s330 = sand.u32 %s10, 1
        %s331 = sand.u32 %s10, 1
        %s332 = smul.addr %s331, 4
        %s333 = scalar_lea.vmem [#allocation3], %s332
        %s334 = sand.u32 %s49, 1
        %s335 = sand.u32 %s49, 1
        %s336 = smul.addr %s335, 2
        %s337 = scalar_lea.vmem [#allocation5], %s336
        %s338 = sadd.s32 %s17, %s16
        %s339 = sadd.s32 %s338, %s15
        %s340 = smul.addr %s339, 4
        %s341 = scalar_lea.vmem %s1, %s340
        // Predicated region
        $region58: #{custom-call.16} parent=49 // pred_check
          _
        $region59: #{custom-call.16} parent=49 // pred_check_branch
          %343 = sbr.rel (0) target = $region61
        $region60: #{custom-call.16} parent=49 // pred_region
          // Predicated region
          $region62: #{custom-call.16} parent=60 // pred_check
            _
          $region63: #{custom-call.16} parent=60 // pred_check_branch
            %345 = sbr.rel target = $region65
          $region64: #{custom-call.16} parent=60 // pred_region
            // Predicated region
            $region77: #{custom-call.16} parent=64 // pred_check
              _
            $region78: #{custom-call.16} parent=64 // pred_check_branch
              %360 = sbr.rel (0) target = $region80
            $region79: #{custom-call.16} parent=64 // pred_region
              loop: start=0, step=1, limit=1
              $region81: #{custom-call.16} parent=79 // loop_pre_header
                _
              $region82: #{custom-call.16} parent=79 // loop_header
                %s363 = sphi 0, %s367
                %p364 = scmp.ge.s32.totalorder %s363, 1
                %s368 = sphi %s333, %s333
                %s369 = sphi %s341, %s341
              $region83: #{custom-call.16} parent=79 // loop_header_branch
                %366 = sbr.rel (%p364) target = $region87
              $region84: #{custom-call.16} parent=79 // loop_body
                %v370 = vld [vmem:[%s368] sm:$0xf]
                %371 = vst [vmem:[%s369] sm:$0xf] %v370
              $region85: #{custom-call.16} parent=79 // loop_footer
                %s367 = sadd.s32 1, %s363
              $region86: #{custom-call.16} parent=79 // loop_footer_branch
                %362 = sbr.rel target = $region82
              $region87: #{custom-call.16} parent=79 // loop_exit
                _
            $region80: #{custom-call.16} parent=64 // pred_fallthru
              _
          $region65: #{custom-call.16} parent=60 // pred_fallthru
            _
          // Predicated region
          $region66: #{custom-call.16} parent=60 // pred_check
            _
          $region67: #{custom-call.16} parent=60 // pred_check_branch
            %347 = sbr.rel (0) target = $region69
          $region68: #{custom-call.16} parent=60 // pred_region
            loop: start=0, step=1, limit=1
            $region70: #{custom-call.16} parent=68 // loop_pre_header
              _
            $region71: #{custom-call.16} parent=68 // loop_header
              %s350 = sphi 0, %s354
              %p351 = scmp.ge.s32.totalorder %s350, 1
              %s355 = sphi %s333, %s333
              %s356 = sphi %s341, %s341
            $region72: #{custom-call.16} parent=68 // loop_header_branch
              %353 = sbr.rel (%p351) target = $region76
            $region73: #{custom-call.16} parent=68 // loop_body
              %v357 = vld [vmem:[%s355] sm:$0xf]
              %358 = vst [vmem:[%s356] sm:$0xf] %v357
            $region74: #{custom-call.16} parent=68 // loop_footer
              %s354 = sadd.s32 1, %s350
            $region75: #{custom-call.16} parent=68 // loop_footer_branch
              %349 = sbr.rel target = $region71
            $region76: #{custom-call.16} parent=68 // loop_exit
              _
          $region69: #{custom-call.16} parent=60 // pred_fallthru
            _
        $region61: #{custom-call.16} parent=49 // pred_fallthru
          _
        %372 = vnop
        // Predicated region
        $region88: #{custom-call.16} parent=49 // pred_check
          %p373 = pneg %p59
        $region89: #{custom-call.16} parent=49 // pred_check_branch
          %375 = sbr.rel (%p373) target = $region91
        $region90: #{custom-call.16} parent=49 // pred_region
          %p376 = scmp.lt.s32.totalorder %s15, 0
          %s377 = ssub.s32 0, %s15
          %s378 = scalar_select %p376, %s377, %s15
          %s379 = sshrl.u32 %s378, 3
          %s380 = ssub.s32 0, %s379
          %s381 = scalar_select %p376, %s380, %s379
          %s382 = smul.addr %s381, 2
          %s383 = scalar_lea.vmem %s2, %s382
          // Predicated region
          $region92: #{custom-call.16} parent=90 // pred_check
            _
          $region93: #{custom-call.16} parent=90 // pred_check_branch
            %385 = sbr.rel (0) target = $region95
          $region94: #{custom-call.16} parent=90 // pred_region
            // Predicated region
            $region96: #{custom-call.16} parent=94 // pred_check
              _
            $region97: #{custom-call.16} parent=94 // pred_check_branch
              %387 = sbr.rel target = $region99
            $region98: #{custom-call.16} parent=94 // pred_region
              // Predicated region
              $region111: #{custom-call.16} parent=98 // pred_check
                _
              $region112: #{custom-call.16} parent=98 // pred_check_branch
                %402 = sbr.rel (0) target = $region114
              $region113: #{custom-call.16} parent=98 // pred_region
                loop: start=0, step=1, limit=1
                $region115: #{custom-call.16} parent=113 // loop_pre_header
                  _
                $region116: #{custom-call.16} parent=113 // loop_header
                  %s405 = sphi 0, %s409
                  %p406 = scmp.ge.s32.totalorder %s405, 1
                  %s410 = sphi %s337, %s337
                  %s411 = sphi %s383, %s383
                $region117: #{custom-call.16} parent=113 // loop_header_branch
                  %408 = sbr.rel (%p406) target = $region121
                $region118: #{custom-call.16} parent=113 // loop_body
                  %v412 = vld [vmem:[%s410] sm:$0x3]
                  %413 = vst [vmem:[%s411] sm:$0x3] %v412
                $region119: #{custom-call.16} parent=113 // loop_footer
                  %s409 = sadd.s32 1, %s405
                $region120: #{custom-call.16} parent=113 // loop_footer_branch
                  %404 = sbr.rel target = $region116
                $region121: #{custom-call.16} parent=113 // loop_exit
                  _
              $region114: #{custom-call.16} parent=98 // pred_fallthru
                _
            $region99: #{custom-call.16} parent=94 // pred_fallthru
              _
            // Predicated region
            $region100: #{custom-call.16} parent=94 // pred_check
              _
            $region101: #{custom-call.16} parent=94 // pred_check_branch
              %389 = sbr.rel (0) target = $region103
            $region102: #{custom-call.16} parent=94 // pred_region
              loop: start=0, step=1, limit=1
              $region104: #{custom-call.16} parent=102 // loop_pre_header
                _
              $region105: #{custom-call.16} parent=102 // loop_header
                %s392 = sphi 0, %s396
                %p393 = scmp.ge.s32.totalorder %s392, 1
                %s397 = sphi %s337, %s337
                %s398 = sphi %s383, %s383
              $region106: #{custom-call.16} parent=102 // loop_header_branch
                %395 = sbr.rel (%p393) target = $region110
              $region107: #{custom-call.16} parent=102 // loop_body
                %v399 = vld [vmem:[%s397] sm:$0x3]
                %400 = vst [vmem:[%s398] sm:$0x3] %v399
              $region108: #{custom-call.16} parent=102 // loop_footer
                %s396 = sadd.s32 1, %s392
              $region109: #{custom-call.16} parent=102 // loop_footer_branch
                %391 = sbr.rel target = $region105
              $region110: #{custom-call.16} parent=102 // loop_exit
                _
            $region103: #{custom-call.16} parent=94 // pred_fallthru
              _
          $region95: #{custom-call.16} parent=90 // pred_fallthru
            _
          %414 = vnop
        $region91: #{custom-call.16} parent=49 // pred_fallthru
          _
      $region50: #{custom-call.16} parent=5 // pred_fallthru
        _
      %p415 = scmp.le.s32.totalorder 2, %s5
      // Predicated region
      $region122: #{custom-call.16} parent=5 // pred_check
        %p416 = pneg %p415
      $region123: #{custom-call.16} parent=5 // pred_check_branch
        %418 = sbr.rel (%p416) target = $region125
      $region124: #{custom-call.16} parent=5 // pred_region
        %s419 = ssub.s32 %s5, 2
        %s420 = sand.u32 %s11, 1
        %s421 = sand.u32 %s11, 1
        %s422 = smul.addr %s421, 4
        %s423 = scalar_lea.vmem [#allocation3], %s422
        // Predicated region
        $region126: #{custom-call.16} parent=124 // pred_check
          %p424 = pneg %p65
        $region127: #{custom-call.16} parent=124 // pred_check_branch
          %426 = sbr.rel (%p424) target = $region129
        $region128: #{custom-call.16} parent=124 // pred_region
          %s427 = sand.u32 %s50, 1
          %s428 = sand.u32 %s50, 1
          %s429 = smul.addr %s428, 2
          %s430 = scalar_lea.vmem [#allocation5], %s429
        $region129: #{custom-call.16} parent=124 // pred_fallthru
          _
      $region125: #{custom-call.16} parent=5 // pred_fallthru
        _
    $region6: #{custom-call.16} parent=1 // loop_footer
      %s9 = sadd.s32 1, %s5
    $region7: #{custom-call.16} parent=1 // loop_footer_branch
      %4 = sbr.rel target = $region3
    $region8: #{custom-call.16} parent=1 // loop_exit
      _

// kernel: neg.3
$region0: #{neg.3}
  #allocation2 [shape = 's32[1]{0}', space=sflag, size = 0x4, scoped, tag = 'scoped memory for neg.3']
  %s0 = inlined_call_operand.vmem [shape: f32[2,3], index: 0, kind: input, shape index: {}]
  %s1 = inlined_call_operand.hbm [shape: f32[2,3], index: 1, kind: output, shape index: {}]
  $region1: #{neg.3} parent=0
    #allocation0 [shape = 'u8[1024]{0}', space=vmem, size = 0x400, scoped, tag = 'operand span for operand 1']
    #allocation1 [shape = 's32[1]{0}', space=sflag, size = 0x4, scoped, tag = 'scoped memory for neg.3']
    %2 = vsyncpa [#allocation1], 0
    %v3 = vld [vmem:[%s0] sm:$0x3]
    %4 = xla_tuple %v3
    %5 = xla_tuple %4
    %v6 = vxor.u32 %v3, 2147483648
    %7 = xla_tuple %v6
    %8 = vst [vmem:[#allocation0] sm:$0x3] %v6
    %s10 = ssub.s32 32, 32
    %11 = vsyncadd [#allocation1], %s10
    %s13 = sshll.u32 [#allocation0], 4
    %s14 = int_to_ptr.vmem [resolvable:$true] %s13
    %16 = dma.vmem_to_hbm [thread:$0]  %s14, 32, %s1, [#allocation1]
    %17 = dma.done [#allocation1], 32
    %18 = vsyncpa [#allocation1], 1

</llo_original>
